<compile_context>
chip_gen: v7x
topology: tpu7x:2x2x1
jax: 0.10.0
libtpu: 0.0.40
codegen_flags: <defaults>
</compile_context>

<pallas_src>
import functools
import math

import jax
import jax.numpy as jnp
from jax.experimental import pallas as pl
from jax.experimental.pallas import tpu as pltpu


# Above the 32 MiB default scoped limit (helps v5e/v6e keep 512-row tiles with
# resident weights), below v7x's 64 MiB physical VMEM.  Tune per generation.
VMEM_LIMIT_BYTES = 48 * 1024 * 1024


# ------------------------------ helpers --------------------------------------

def _round_up(x, m):
    return ((x + m - 1) // m) * m


def _row_tile_and_pad(m, cap):
    """Row tile (multiple of 8, <= cap) and padded row count (multiple of tile)."""
    tm = min(cap, _round_up(m, 8))
    return tm, _round_up(m, tm)


def _pick_seq_tile(n, cap=256):
    """Query-row tile for attention: full N if small, else a divisor mult of 8."""
    if n <= cap:
        return n
    for t in range(cap - cap % 8, 7, -8):
        if n % t == 0:
            return t
    return n


def _layernorm(z, gamma, beta, eps):
    mu = jnp.mean(z, axis=-1, keepdims=True)
    var = jnp.mean((z - mu) ** 2, axis=-1, keepdims=True)   # biased, like torch LN
    return (z - mu) * jax.lax.rsqrt(var + eps) * gamma + beta


# --------------------------- fused QKV projection -----------------------------

def _qkv_proj_kernel(x_ref, w_ref, b_ref, q_ref, k_ref, v_ref):
    d = q_ref.shape[-1]
    xb = x_ref[...].astype(jnp.bfloat16)
    wb = w_ref[...].astype(jnp.bfloat16)
    y = jnp.dot(xb, wb, preferred_element_type=jnp.float32) + b_ref[...]
    q_ref[...] = y[:, :d].astype(q_ref.dtype)
    k_ref[...] = y[:, d:2 * d].astype(k_ref.dtype)
    v_ref[...] = y[:, 2 * d:].astype(v_ref.dtype)


def qkv_projection(x2d, w, b, *, row_tile=512):
    m, din = x2d.shape
    d3 = w.shape[1]
    d = d3 // 3
    tm, m_pad = _row_tile_and_pad(m, row_tile)
    xp = jnp.pad(x2d, ((0, m_pad - m), (0, 0))) if m_pad != m else x2d

    row = lambda i: (i, 0)
    const = lambda i: (0, 0)
    q, k, v = pl.pallas_call(
        _qkv_proj_kernel,
        grid=(m_pad // tm,),
        in_specs=[pl.BlockSpec((tm, din), row),
                  pl.BlockSpec((din, d3), const),
                  pl.BlockSpec((1, d3), const)],
        out_specs=[pl.BlockSpec((tm, d), row),
                   pl.BlockSpec((tm, d), row),
                   pl.BlockSpec((tm, d), row)],
        out_shape=(jax.ShapeDtypeStruct((m_pad, d), x2d.dtype),
                   jax.ShapeDtypeStruct((m_pad, d), x2d.dtype),
                   jax.ShapeDtypeStruct((m_pad, d), x2d.dtype)),
        compiler_params=pltpu.CompilerParams(
            dimension_semantics=("parallel",),
            vmem_limit_bytes=VMEM_LIMIT_BYTES),
    )(xp, w, b.reshape(1, d3))
    if m_pad != m:
        q, k, v = q[:m], k[:m], v[:m]
    return q, k, v


# ------------------------ relation-aware attention -----------------------------

def _rel_attn_kernel(q_ref, k_ref, v_ref, rel_ref, rk_ref, rv_ref, *rest,
                     n_heads, head_dim, num_relations, scale, has_mask):
    if has_mask:
        mask_ref, o_ref = rest
    else:
        (o_ref,) = rest

    # Pre-scale q once for the whole tile (both content and relation-key score
    # terms pick up the scale), then cast matmul operands to bf16 (f32 accum).
    qb_all = (q_ref[0].astype(jnp.float32) * scale).astype(jnp.bfloat16)  # [tq, D]
    kb_all = k_ref[0].astype(jnp.bfloat16)                                # [N, D]
    vb_all = v_ref[0].astype(jnp.bfloat16)                                # [N, D]
    rkb = rk_ref[...].astype(jnp.bfloat16)                                # [R, hd]
    rvb = rv_ref[...].astype(jnp.bfloat16)                                # [R, hd]

    # Hoisted one-hot relation masks: computed once, reused by every head for
    # both the score FMA and the per-relation probability aggregation.
    rel = rel_ref[0].astype(jnp.int32)                                    # [tq, N]
    rel_masks = [(rel == r).astype(jnp.float32) for r in range(num_relations)]

    if has_mask:
        # additive bias built in-kernel from the int8 mask (1 = attend).
        bias = jnp.where(mask_ref[0].astype(jnp.int32) != 0, 0.0, -1e9)
        bias = bias.astype(jnp.float32)                                   # [tq, N]

    # TODO(synk): heads could be folded into one batched dot_general to fatten
    # the K=head_dim MXU contraction (v5e); kept as a static per-head loop for
    # lowering robustness.
    for h in range(n_heads):
        lo = h * head_dim
        qh = qb_all[:, lo:lo + head_dim]          # [tq, hd]
        kh = kb_all[:, lo:lo + head_dim]          # [N,  hd]
        vh = vb_all[:, lo:lo + head_dim]          # [N,  hd]

        # content scores (MXU) + relation-key scores via small table matmul.
        s = jnp.dot(qh, kh.T, preferred_element_type=jnp.float32)        # [tq, N]
        qrk = jnp.dot(qh, rkb.T, preferred_element_type=jnp.float32)     # [tq, R]
        for r in range(num_relations):
            s = s + rel_masks[r] * qrk[:, r:r + 1]                       # FMA
        if has_mask:
            s = s + bias

        # softmax over keys (EUP reciprocal).
        s = s - jnp.max(s, axis=-1, keepdims=True)
        p = jnp.exp(s)
        p = p * pl.reciprocal(jnp.sum(p, axis=-1, keepdims=True), approx=True)

        # content values (MXU) + relation values via one small MXU matmul.
        o = jnp.dot(p.astype(jnp.bfloat16), vh,
                    preferred_element_type=jnp.float32)                  # [tq, hd]
        p_rel = jnp.concatenate(
            [jnp.sum(p * rel_masks[r], axis=-1, keepdims=True)
             for r in range(num_relations)], axis=-1)                    # [tq, R]
        o = o + jnp.dot(p_rel.astype(jnp.bfloat16), rvb,
                        preferred_element_type=jnp.float32)              # [tq, hd]

        # direct per-head store into the output slab (no trailing concatenate).
        o_ref[0, :, lo:lo + head_dim] = o.astype(o_ref.dtype)


def relation_attention(q, k, v, graph_relations, rel_k, rel_v, attn_mask, *,
                       n_heads, head_dim, q_tile=256):
    B, N, D = q.shape
    R = rel_k.shape[0]
    scale = 1.0 / math.sqrt(head_dim)
    tq = _pick_seq_tile(N, q_tile)
    nq = N // tq

    q_spec = pl.BlockSpec((1, tq, D), lambda b, i: (b, i, 0))
    kv_spec = pl.BlockSpec((1, N, D), lambda b, i: (b, 0, 0))
    nn_spec = pl.BlockSpec((1, tq, N), lambda b, i: (b, i, 0))
    tbl_spec = pl.BlockSpec((R, head_dim), lambda b, i: (0, 0))

    in_specs = [q_spec, kv_spec, kv_spec, nn_spec, tbl_spec, tbl_spec]
    args = [q, k, v, graph_relations, rel_k, rel_v]
    if attn_mask is not None:
        in_specs.append(nn_spec)
        args.append(attn_mask)

    kernel = functools.partial(
        _rel_attn_kernel, n_heads=n_heads, head_dim=head_dim,
        num_relations=R, scale=scale, has_mask=attn_mask is not None)

    return pl.pallas_call(
        kernel,
        grid=(B, nq),
        in_specs=in_specs,
        out_specs=pl.BlockSpec((1, tq, D), lambda b, i: (b, i, 0)),
        out_shape=jax.ShapeDtypeStruct((B, N, D), q.dtype),
        compiler_params=pltpu.CompilerParams(
            dimension_semantics=("parallel", "parallel"),
            vmem_limit_bytes=VMEM_LIMIT_BYTES),
    )(*args)


# --------------- fused out-proj + residual + LN1 + FFN + LN2 -------------------

def _post_attn_kernel(x_ref, a_ref, wo_ref, bo_ref, g1_ref, be1_ref,
                      w1_ref, b1_ref, w2_ref, b2_ref, g2_ref, be2_ref,
                      o_ref, *, eps):
    x = x_ref[...].astype(jnp.float32)            # [TM, D]

    # attention output projection + residual + LayerNorm1 (bf16 operands, f32 acc)
    z = x + jnp.dot(a_ref[...].astype(jnp.bfloat16),
                    wo_ref[...].astype(jnp.bfloat16),
                    preferred_element_type=jnp.float32) + bo_ref[...]
    z = _layernorm(z, g1_ref[...], be1_ref[...], eps)

    # FFN: Linear(D, 2D) -> exact-erf GELU (torch nn.GELU() default) -> Linear(2D, D)
    # Dropout(p=0) is the identity.  (tanh-approx GELU is an EUP-friendly option
    # if this kernel turns out VALU-bound at small D.)
    h = jnp.dot(z.astype(jnp.bfloat16), w1_ref[...].astype(jnp.bfloat16),
                preferred_element_type=jnp.float32) + b1_ref[...]
    h = 0.5 * h * (1.0 + jax.lax.erf(h * (1.0 / math.sqrt(2.0))))
    f = jnp.dot(h.astype(jnp.bfloat16), w2_ref[...].astype(jnp.bfloat16),
                preferred_element_type=jnp.float32) + b2_ref[...]

    # residual + LayerNorm2
    z = _layernorm(z + f, g2_ref[...], be2_ref[...], eps)
    o_ref[...] = z.astype(o_ref.dtype)


def post_attention(x2d, attn2d, p, *, eps=1e-5, row_tile=512):
    # NOTE: on v7x (64 MiB VMEM) prefer row_tile=256 when D >= 1024.
    m, d = x2d.shape
    dh = p["w1"].shape[1]
    tm, m_pad = _row_tile_and_pad(m, row_tile)
    if m_pad != m:
        x2d = jnp.pad(x2d, ((0, m_pad - m), (0, 0)))
        attn2d = jnp.pad(attn2d, ((0, m_pad - m), (0, 0)))

    row = lambda i: (i, 0)
    full = lambda i: (0, 0)
    out = pl.pallas_call(
        functools.partial(_post_attn_kernel, eps=eps),
        grid=(m_pad // tm,),
        in_specs=[
            pl.BlockSpec((tm, d), row),          # x residual input
            pl.BlockSpec((tm, d), row),          # attention heads (concat)
            pl.BlockSpec((d, d), full),          # wo
            pl.BlockSpec((1, d), full),          # bo
            pl.BlockSpec((1, d), full),          # ln1 gamma
            pl.BlockSpec((1, d), full),          # ln1 beta
            pl.BlockSpec((d, dh), full),         # w1
            pl.BlockSpec((1, dh), full),         # b1
            pl.BlockSpec((dh, d), full),         # w2
            pl.BlockSpec((1, d), full),          # b2
            pl.BlockSpec((1, d), full),          # ln2 gamma
            pl.BlockSpec((1, d), full),          # ln2 beta
        ],
        out_specs=pl.BlockSpec((tm, d), row),
        out_shape=jax.ShapeDtypeStruct((m_pad, d), x2d.dtype),
        compiler_params=pltpu.CompilerParams(
            dimension_semantics=("parallel",),
            vmem_limit_bytes=VMEM_LIMIT_BYTES),
    )(x2d, attn2d,
      p["wo"], p["bo"].reshape(1, d),
      p["ln1_g"].reshape(1, d), p["ln1_b"].reshape(1, d),
      p["w1"], p["b1"].reshape(1, dh),
      p["w2"], p["b2"].reshape(1, d),
      p["ln2_g"].reshape(1, d), p["ln2_b"].reshape(1, d))
    return out[:m] if m_pad != m else out


# ----------------------- parameter init & forward pass -------------------------

def init_params(key, n_layers, embed_dim, n_heads, num_relations):
    head_dim = embed_dim // n_heads
    params = []
    for _ in range(n_layers):
        keys = jax.random.split(key, 11)
        key = keys[-1]
        s = 0.05
        layer = dict(
            # fused Q/K/V projection weights: [D, 3D]
            wqkv=jax.random.normal(keys[0], (embed_dim, 3 * embed_dim), jnp.float32) * s,
            bqkv=jax.random.normal(keys[1], (3 * embed_dim,), jnp.float32) * s,
            wo=jax.random.normal(keys[2], (embed_dim, embed_dim), jnp.float32) * s,
            bo=jax.random.normal(keys[3], (embed_dim,), jnp.float32) * s,
            rel_k=jax.random.normal(keys[4], (num_relations, head_dim), jnp.float32) * s,
            rel_v=jax.random.normal(keys[5], (num_relations, head_dim), jnp.float32) * s,
            ln1_g=jnp.ones((embed_dim,), jnp.float32),
            ln1_b=jnp.zeros((embed_dim,), jnp.float32),
            w1=jax.random.normal(keys[6], (embed_dim, 2 * embed_dim), jnp.float32) * s,
            b1=jax.random.normal(keys[7], (2 * embed_dim,), jnp.float32) * s,
            w2=jax.random.normal(keys[8], (2 * embed_dim, embed_dim), jnp.float32) * s,
            b2=jax.random.normal(keys[9], (embed_dim,), jnp.float32) * s,
            ln2_g=jnp.ones((embed_dim,), jnp.float32),
            ln2_b=jnp.zeros((embed_dim,), jnp.float32),
        )
        params.append(layer)
    return params


def encoder_layer_forward(p, x, graph_relations, attn_mask, *, n_heads):
    B, N, D = x.shape
    hd = D // n_heads
    x2d = x.reshape(B * N, D)

    # fused Q/K/V projection -> three lane-dense [B*N, D] slabs
    q2d, k2d, v2d = qkv_projection(x2d, p["wqkv"], p["bqkv"])
    q = q2d.reshape(B, N, D)
    k = k2d.reshape(B, N, D)
    v = v2d.reshape(B, N, D)

    # relation-aware multi-head attention (q-row tiled, all heads per grid step)
    attn = relation_attention(q, k, v, graph_relations, p["rel_k"], p["rel_v"],
                              attn_mask, n_heads=n_heads, head_dim=hd)

    # out-proj + residual + LN1 + FFN + residual + LN2, fused
    out2d = post_attention(x2d, attn.reshape(B * N, D), p)
    return out2d.reshape(B, N, D)


def transformer_encoder(params, x, graph_relations, attn_mask=None, *, n_heads):
    # int8 relation matrix / mask: 4x less HBM DMA and VMEM than int32.
    rel = graph_relations.astype(jnp.int8)
    mask = None if attn_mask is None else (attn_mask != 0).astype(jnp.int8)
    for p in params:
        x = encoder_layer_forward(p, x, rel, mask, n_heads=n_heads)
    return x


# ---------------------------------- main --------------------------------------

if __name__ == "__main__":
    B, N, D = 2, 8, 32
    n_heads = 4
    n_layers = 2
    num_relations = 3

    key = jax.random.PRNGKey(0)
    kx, kr, kp = jax.random.split(key, 3)

    x = jax.random.normal(kx, (B, N, D), jnp.float32)
    graph_relations = jax.random.randint(kr, (B, N, N), 0, num_relations, jnp.int32)
    # boolean-style mask (1 = attend, 0 = masked); mask out the last key so the
    # masked-attention path is actually exercised.
    attn_mask = jnp.ones((B, N, N), jnp.int32).at[:, :, -1].set(0)

    params = init_params(kp, n_layers, D, n_heads, num_relations)

    fwd = jax.jit(functools.partial(transformer_encoder, n_heads=n_heads))
    out = fwd(params, x, graph_relations, attn_mask)
    out = jax.block_until_ready(out)

    assert out.shape == (B, N, D) and out.dtype == jnp.float32
    assert bool(jnp.all(jnp.isfinite(out)))
    print("KERNEL_OK")
</pallas_src>

<mosaic_0001>
module attributes {stable_mosaic.version = 11 : i64} {
  func.func @_qkv_proj_kernel(%arg0: i32, %arg1: memref<16x32xf32, #tpu.memory_space<vmem>>, %arg2: memref<32x96xf32, #tpu.memory_space<vmem>>, %arg3: memref<1x96xf32, #tpu.memory_space<vmem>>, %arg4: memref<16x32xf32, #tpu.memory_space<vmem>>, %arg5: memref<16x32xf32, #tpu.memory_space<vmem>>, %arg6: memref<16x32xf32, #tpu.memory_space<vmem>>) attributes {dimension_semantics = [#tpu.dimension_semantics<parallel>], iteration_bounds = array<i64: 1>, scalar_prefetch = 0 : i64, scratch_operands = 0 : i64, tpu.core_type = #tpu.core_type<tc>, window_params = [{transform_indices = @transform_0, window_bounds = array<i64: 16, 32>}, {pipeline_mode = #tpu.pipeline_mode<synchronous>, transform_indices = @transform_1, window_bounds = array<i64: 32, 96>}, {pipeline_mode = #tpu.pipeline_mode<synchronous>, transform_indices = @transform_2, window_bounds = array<i64: 1, 96>}, {transform_indices = @transform_3, window_bounds = array<i64: 16, 32>}, {transform_indices = @transform_4, window_bounds = array<i64: 16, 32>}, {transform_indices = @transform_5, window_bounds = array<i64: 16, 32>}]} {
    %c0 = arith.constant 0 : index
    %c0_0 = arith.constant 0 : index
    %0 = vector.load %arg1[%c0, %c0_0] : memref<16x32xf32, #tpu.memory_space<vmem>>, vector<16x32xf32>
    %1 = arith.truncf %0 : vector<16x32xf32> to vector<16x32xbf16>
    %c0_1 = arith.constant 0 : index
    %c0_2 = arith.constant 0 : index
    %2 = vector.load %arg2[%c0_1, %c0_2] : memref<32x96xf32, #tpu.memory_space<vmem>>, vector<32x96xf32>
    %3 = arith.truncf %2 : vector<32x96xf32> to vector<32x96xbf16>
    %cst = arith.constant dense<0.000000e+00> : vector<16x96xf32>
    %4 = tpu.matmul %1, %3, %cst {dimension_numbers = #tpu.dot_dimension_numbers<[1], [0], [0], [1], [0, 0, 1, 1], [], []>} : vector<16x32xbf16>, vector<32x96xbf16>, vector<16x96xf32> -> vector<16x96xf32>
    %c0_3 = arith.constant 0 : index
    %c0_4 = arith.constant 0 : index
    %5 = vector.load %arg3[%c0_3, %c0_4] : memref<1x96xf32, #tpu.memory_space<vmem>>, vector<1x96xf32>
    %6 = vector.broadcast %5 : vector<1x96xf32> to vector<16x96xf32>
    %7 = arith.addf %4, %6 : vector<16x96xf32>
    %8 = vector.extract_strided_slice %7 {offsets = [0, 0], sizes = [16, 32], strides = [1, 1]} : vector<16x96xf32> to vector<16x32xf32>
    %c0_5 = arith.constant 0 : index
    %c0_6 = arith.constant 0 : index
    %9 = vector.load %arg4[%c0_5, %c0_6] : memref<16x32xf32, #tpu.memory_space<vmem>>, vector<16x32xf32>
    tpu.vector_store %arg4[%c0_5, %c0_6], %8 {strides = array<i32>} : memref<16x32xf32, #tpu.memory_space<vmem>>, vector<16x32xf32>,
    %10 = vector.extract_strided_slice %7 {offsets = [0, 32], sizes = [16, 32], strides = [1, 1]} : vector<16x96xf32> to vector<16x32xf32>
    %c0_7 = arith.constant 0 : index
    %c0_8 = arith.constant 0 : index
    %11 = vector.load %arg5[%c0_7, %c0_8] : memref<16x32xf32, #tpu.memory_space<vmem>>, vector<16x32xf32>
    tpu.vector_store %arg5[%c0_7, %c0_8], %10 {strides = array<i32>} : memref<16x32xf32, #tpu.memory_space<vmem>>, vector<16x32xf32>,
    %12 = vector.extract_strided_slice %7 {offsets = [0, 64], sizes = [16, 32], strides = [1, 1]} : vector<16x96xf32> to vector<16x32xf32>
    %c0_9 = arith.constant 0 : index
    %c0_10 = arith.constant 0 : index
    %13 = vector.load %arg6[%c0_9, %c0_10] : memref<16x32xf32, #tpu.memory_space<vmem>>, vector<16x32xf32>
    tpu.vector_store %arg6[%c0_9, %c0_10], %12 {strides = array<i32>} : memref<16x32xf32, #tpu.memory_space<vmem>>, vector<16x32xf32>,
    return
  }
  func.func @transform_0(%arg0: i32) -> (i32, i32) {
    %c0_i32 = arith.constant 0 : i32
    %c0_i32_0 = arith.constant 0 : i32
    return %arg0, %c0_i32 : i32, i32
  }
  func.func @transform_1(%arg0: i32) -> (i32, i32) {
    %c0_i32 = arith.constant 0 : i32
    %c0_i32_0 = arith.constant 0 : i32
    %c0_i32_1 = arith.constant 0 : i32
    return %c0_i32, %c0_i32_0 : i32, i32
  }
  func.func @transform_2(%arg0: i32) -> (i32, i32) {
    %c0_i32 = arith.constant 0 : i32
    %c0_i32_0 = arith.constant 0 : i32
    %c0_i32_1 = arith.constant 0 : i32
    return %c0_i32, %c0_i32_0 : i32, i32
  }
  func.func @transform_3(%arg0: i32) -> (i32, i32) {
    %c0_i32 = arith.constant 0 : i32
    %c0_i32_0 = arith.constant 0 : i32
    return %arg0, %c0_i32 : i32, i32
  }
  func.func @transform_4(%arg0: i32) -> (i32, i32) {
    %c0_i32 = arith.constant 0 : i32
    %c0_i32_0 = arith.constant 0 : i32
    return %arg0, %c0_i32 : i32, i32
  }
  func.func @transform_5(%arg0: i32) -> (i32, i32) {
    %c0_i32 = arith.constant 0 : i32
    %c0_i32_0 = arith.constant 0 : i32
    return %arg0, %c0_i32 : i32, i32
  }
}

module attributes {stable_mosaic.version = 11 : i64} {
  func.func @_rel_attn_kernel(%arg0: i32, %arg1: i32, %arg2: memref<1x8x32xf32, #tpu.memory_space<vmem>>, %arg3: memref<1x8x32xf32, #tpu.memory_space<vmem>>, %arg4: memref<1x8x32xf32, #tpu.memory_space<vmem>>, %arg5: memref<1x8x8xi8, #tpu.memory_space<vmem>>, %arg6: memref<3x8xf32, #tpu.memory_space<vmem>>, %arg7: memref<3x8xf32, #tpu.memory_space<vmem>>, %arg8: memref<1x8x8xi8, #tpu.memory_space<vmem>>, %arg9: memref<1x8x32xf32, #tpu.memory_space<vmem>>) attributes {dimension_semantics = [#tpu.dimension_semantics<parallel>, #tpu.dimension_semantics<parallel>], iteration_bounds = array<i64: 2, 1>, scalar_prefetch = 0 : i64, scratch_operands = 0 : i64, tpu.core_type = #tpu.core_type<tc>, window_params = [{transform_indices = @transform_0, window_bounds = array<i64: 1, 8, 32>}, {transform_indices = @transform_1, window_bounds = array<i64: 1, 8, 32>}, {transform_indices = @transform_2, window_bounds = array<i64: 1, 8, 32>}, {transform_indices = @transform_3, window_bounds = array<i64: 1, 8, 8>}, {pipeline_mode = #tpu.pipeline_mode<synchronous>, transform_indices = @transform_4, window_bounds = array<i64: 3, 8>}, {pipeline_mode = #tpu.pipeline_mode<synchronous>, transform_indices = @transform_5, window_bounds = array<i64: 3, 8>}, {transform_indices = @transform_6, window_bounds = array<i64: 1, 8, 8>}, {transform_indices = @transform_7, window_bounds = array<i64: 1, 8, 32>}]} {
    %c0 = arith.constant 0 : index
    %c0_0 = arith.constant 0 : index
    %c0_1 = arith.constant 0 : index
    %0 = vector.load %arg2[%c0, %c0_0, %c0_1] : memref<1x8x32xf32, #tpu.memory_space<vmem>>, vector<1x8x32xf32>
    %1 = vector.shape_cast %0 : vector<1x8x32xf32> to vector<8x32xf32>
    %cst = arith.constant 0.353553385 : f32
    %2 = vector.broadcast %cst : f32 to vector<8x32xf32>
    %3 = arith.mulf %1, %2 : vector<8x32xf32>
    %4 = arith.truncf %3 : vector<8x32xf32> to vector<8x32xbf16>
    %c0_2 = arith.constant 0 : index
    %c0_3 = arith.constant 0 : index
    %c0_4 = arith.constant 0 : index
    %5 = vector.load %arg3[%c0_2, %c0_3, %c0_4] : memref<1x8x32xf32, #tpu.memory_space<vmem>>, vector<1x8x32xf32>
    %6 = vector.shape_cast %5 : vector<1x8x32xf32> to vector<8x32xf32>
    %7 = arith.truncf %6 : vector<8x32xf32> to vector<8x32xbf16>
    %c0_5 = arith.constant 0 : index
    %c0_6 = arith.constant 0 : index
    %c0_7 = arith.constant 0 : index
    %8 = vector.load %arg4[%c0_5, %c0_6, %c0_7] : memref<1x8x32xf32, #tpu.memory_space<vmem>>, vector<1x8x32xf32>
    %9 = vector.shape_cast %8 : vector<1x8x32xf32> to vector<8x32xf32>
    %10 = arith.truncf %9 : vector<8x32xf32> to vector<8x32xbf16>
    %c0_8 = arith.constant 0 : index
    %c0_9 = arith.constant 0 : index
    %11 = vector.load %arg6[%c0_8, %c0_9] : memref<3x8xf32, #tpu.memory_space<vmem>>, vector<3x8xf32>
    %12 = arith.truncf %11 : vector<3x8xf32> to vector<3x8xbf16>
    %c0_10 = arith.constant 0 : index
    %c0_11 = arith.constant 0 : index
    %13 = vector.load %arg7[%c0_10, %c0_11] : memref<3x8xf32, #tpu.memory_space<vmem>>, vector<3x8xf32>
    %14 = arith.truncf %13 : vector<3x8xf32> to vector<3x8xbf16>
    %c0_12 = arith.constant 0 : index
    %c0_13 = arith.constant 0 : index
    %c0_14 = arith.constant 0 : index
    %15 = vector.load %arg5[%c0_12, %c0_13, %c0_14] : memref<1x8x8xi8, #tpu.memory_space<vmem>>, vector<1x8x8xi8>
    %16 = vector.shape_cast %15 : vector<1x8x8xi8> to vector<8x8xi8>
    %17 = arith.extsi %16 : vector<8x8xi8> to vector<8x8xi32>
    %c0_i32 = arith.constant 0 : i32
    %18 = vector.broadcast %c0_i32 : i32 to vector<8x8xi32>
    %19 = arith.cmpi eq, %17, %18 : vector<8x8xi32>
    %20 = arith.extui %19 : vector<8x8xi1> to vector<8x8xi32>
    %21 = arith.sitofp %20 : vector<8x8xi32> to vector<8x8xf32>
    %c1_i32 = arith.constant 1 : i32
    %22 = vector.broadcast %c1_i32 : i32 to vector<8x8xi32>
    %23 = arith.cmpi eq, %17, %22 : vector<8x8xi32>
    %24 = arith.extui %23 : vector<8x8xi1> to vector<8x8xi32>
    %25 = arith.sitofp %24 : vector<8x8xi32> to vector<8x8xf32>
    %c2_i32 = arith.constant 2 : i32
    %26 = vector.broadcast %c2_i32 : i32 to vector<8x8xi32>
    %27 = arith.cmpi eq, %17, %26 : vector<8x8xi32>
    %28 = arith.extui %27 : vector<8x8xi1> to vector<8x8xi32>
    %29 = arith.sitofp %28 : vector<8x8xi32> to vector<8x8xf32>
    %c0_15 = arith.constant 0 : index
    %c0_16 = arith.constant 0 : index
    %c0_17 = arith.constant 0 : index
    %30 = vector.load %arg8[%c0_15, %c0_16, %c0_17] : memref<1x8x8xi8, #tpu.memory_space<vmem>>, vector<1x8x8xi8>
    %31 = vector.shape_cast %30 : vector<1x8x8xi8> to vector<8x8xi8>
    %32 = arith.extsi %31 : vector<8x8xi8> to vector<8x8xi32>
    %c0_i32_18 = arith.constant 0 : i32
    %33 = vector.broadcast %c0_i32_18 : i32 to vector<8x8xi32>
    %34 = arith.cmpi ne, %32, %33 : vector<8x8xi32>
    %cst_19 = arith.constant 0.000000e+00 : f32
    %cst_20 = arith.constant -1.000000e+09 : f32
    %35 = vector.broadcast %cst_19 : f32 to vector<8x8xf32>
    %36 = vector.broadcast %cst_20 : f32 to vector<8x8xf32>
    %37 = arith.select %34, %35, %36 : vector<8x8xi1>, vector<8x8xf32>
    %38 = vector.extract_strided_slice %4 {offsets = [0, 0], sizes = [8, 8], strides = [1, 1]} : vector<8x32xbf16> to vector<8x8xbf16>
    %39 = vector.extract_strided_slice %7 {offsets = [0, 0], sizes = [8, 8], strides = [1, 1]} : vector<8x32xbf16> to vector<8x8xbf16>
    %40 = vector.extract_strided_slice %10 {offsets = [0, 0], sizes = [8, 8], strides = [1, 1]} : vector<8x32xbf16> to vector<8x8xbf16>
    %41 = tpu.transpose %39, [1, 0] : vector<8x8xbf16> -> vector<8x8xbf16>
    %cst_21 = arith.constant dense<0.000000e+00> : vector<8x8xf32>
    %42 = tpu.matmul %38, %41, %cst_21 {dimension_numbers = #tpu.dot_dimension_numbers<[1], [0], [0], [1], [0, 0, 1, 1], [], []>} : vector<8x8xbf16>, vector<8x8xbf16>, vector<8x8xf32> -> vector<8x8xf32>
    %43 = tpu.transpose %12, [1, 0] : vector<3x8xbf16> -> vector<8x3xbf16>
    %cst_22 = arith.constant dense<0.000000e+00> : vector<8x3xf32>
    %44 = tpu.matmul %38, %43, %cst_22 {dimension_numbers = #tpu.dot_dimension_numbers<[1], [0], [0], [1], [0, 0, 1, 1], [], []>} : vector<8x8xbf16>, vector<8x3xbf16>, vector<8x3xf32> -> vector<8x3xf32>
    %45 = vector.extract_strided_slice %44 {offsets = [0, 0], sizes = [8, 1], strides = [1, 1]} : vector<8x3xf32> to vector<8x1xf32>
    %46 = vector.broadcast %45 : vector<8x1xf32> to vector<8x8xf32>
    %47 = arith.mulf %21, %46 : vector<8x8xf32>
    %48 = arith.addf %42, %47 : vector<8x8xf32>
    %49 = vector.extract_strided_slice %44 {offsets = [0, 1], sizes = [8, 1], strides = [1, 1]} : vector<8x3xf32> to vector<8x1xf32>
    %50 = vector.broadcast %49 : vector<8x1xf32> to vector<8x8xf32>
    %51 = arith.mulf %25, %50 : vector<8x8xf32>
    %52 = arith.addf %48, %51 : vector<8x8xf32>
    %53 = vector.extract_strided_slice %44 {offsets = [0, 2], sizes = [8, 1], strides = [1, 1]} : vector<8x3xf32> to vector<8x1xf32>
    %54 = vector.broadcast %53 : vector<8x1xf32> to vector<8x8xf32>
    %55 = arith.mulf %29, %54 : vector<8x8xf32>
    %56 = arith.addf %52, %55 : vector<8x8xf32>
    %57 = arith.addf %56, %37 : vector<8x8xf32>
    %cst_23 = arith.constant dense<0xFF800000> : vector<8xf32>
    %58 = vector.multi_reduction <maximumf>, %57, %cst_23 [1] : vector<8x8xf32> to vector<8xf32>
    %59 = vector.shape_cast %58 : vector<8xf32> to vector<8x1xf32>
    %60 = vector.broadcast %59 : vector<8x1xf32> to vector<8x8xf32>
    %61 = arith.subf %57, %60 : vector<8x8xf32>
    %62 = math.exp %61 : vector<8x8xf32>
    %cst_24 = arith.constant dense<0.000000e+00> : vector<8xf32>
    %63 = vector.multi_reduction <add>, %62, %cst_24 [1] : vector<8x8xf32> to vector<8xf32>
    %64 = vector.shape_cast %63 : vector<8xf32> to vector<8x1xf32>
    %65 = tpu.reciprocal %64 {approx = true} : vector<8x1xf32> -> vector<8x1xf32>
    %66 = vector.broadcast %65 : vector<8x1xf32> to vector<8x8xf32>
    %67 = arith.mulf %62, %66 : vector<8x8xf32>
    %68 = arith.truncf %67 : vector<8x8xf32> to vector<8x8xbf16>
    %cst_25 = arith.constant dense<0.000000e+00> : vector<8x8xf32>
    %69 = tpu.matmul %68, %40, %cst_25 {dimension_numbers = #tpu.dot_dimension_numbers<[1], [0], [0], [1], [0, 0, 1, 1], [], []>} : vector<8x8xbf16>, vector<8x8xbf16>, vector<8x8xf32> -> vector<8x8xf32>
    %70 = arith.mulf %67, %21 : vector<8x8xf32>
    %cst_26 = arith.constant dense<0.000000e+00> : vector<8xf32>
    %71 = vector.multi_reduction <add>, %70, %cst_26 [1] : vector<8x8xf32> to vector<8xf32>
    %72 = vector.shape_cast %71 : vector<8xf32> to vector<8x1xf32>
    %73 = arith.mulf %67, %25 : vector<8x8xf32>
    %cst_27 = arith.constant dense<0.000000e+00> : vector<8xf32>
    %74 = vector.multi_reduction <add>, %73, %cst_27 [1] : vector<8x8xf32> to vector<8xf32>
    %75 = vector.shape_cast %74 : vector<8xf32> to vector<8x1xf32>
    %76 = arith.mulf %67, %29 : vector<8x8xf32>
    %cst_28 = arith.constant dense<0.000000e+00> : vector<8xf32>
    %77 = vector.multi_reduction <add>, %76, %cst_28 [1] : vector<8x8xf32> to vector<8xf32>
    %78 = vector.shape_cast %77 : vector<8xf32> to vector<8x1xf32>
    %79 = tpu.concatenate %72, %75, %78 in 1 : vector<8x1xf32>, vector<8x1xf32>, vector<8x1xf32> -> vector<8x3xf32>
    %80 = arith.truncf %79 : vector<8x3xf32> to vector<8x3xbf16>
    %cst_29 = arith.constant dense<0.000000e+00> : vector<8x8xf32>
    %81 = tpu.matmul %80, %14, %cst_29 {dimension_numbers = #tpu.dot_dimension_numbers<[1], [0], [0], [1], [0, 0, 1, 1], [], []>} : vector<8x3xbf16>, vector<3x8xbf16>, vector<8x8xf32> -> vector<8x8xf32>
    %82 = arith.addf %69, %81 : vector<8x8xf32>
    %c0_30 = arith.constant 0 : index
    %c0_31 = arith.constant 0 : index
    %c0_32 = arith.constant 0 : index
    %83 = vector.load %arg9[%c0_30, %c0_31, %c0_32] : memref<1x8x32xf32, #tpu.memory_space<vmem>>, vector<1x8x8xf32>
    %84 = vector.shape_cast %83 : vector<1x8x8xf32> to vector<8x8xf32>
    %85 = vector.shape_cast %82 : vector<8x8xf32> to vector<1x8x8xf32>
    tpu.vector_store %arg9[%c0_30, %c0_31, %c0_32], %85 {strides = array<i32>} : memref<1x8x32xf32, #tpu.memory_space<vmem>>, vector<1x8x8xf32>,
    %86 = vector.extract_strided_slice %4 {offsets = [0, 8], sizes = [8, 8], strides = [1, 1]} : vector<8x32xbf16> to vector<8x8xbf16>
    %87 = vector.extract_strided_slice %7 {offsets = [0, 8], sizes = [8, 8], strides = [1, 1]} : vector<8x32xbf16> to vector<8x8xbf16>
    %88 = vector.extract_strided_slice %10 {offsets = [0, 8], sizes = [8, 8], strides = [1, 1]} : vector<8x32xbf16> to vector<8x8xbf16>
    %89 = tpu.transpose %87, [1, 0] : vector<8x8xbf16> -> vector<8x8xbf16>
    %cst_33 = arith.constant dense<0.000000e+00> : vector<8x8xf32>
    %90 = tpu.matmul %86, %89, %cst_33 {dimension_numbers = #tpu.dot_dimension_numbers<[1], [0], [0], [1], [0, 0, 1, 1], [], []>} : vector<8x8xbf16>, vector<8x8xbf16>, vector<8x8xf32> -> vector<8x8xf32>
    %91 = tpu.transpose %12, [1, 0] : vector<3x8xbf16> -> vector<8x3xbf16>
    %cst_34 = arith.constant dense<0.000000e+00> : vector<8x3xf32>
    %92 = tpu.matmul %86, %91, %cst_34 {dimension_numbers = #tpu.dot_dimension_numbers<[1], [0], [0], [1], [0, 0, 1, 1], [], []>} : vector<8x8xbf16>, vector<8x3xbf16>, vector<8x3xf32> -> vector<8x3xf32>
    %93 = vector.extract_strided_slice %92 {offsets = [0, 0], sizes = [8, 1], strides = [1, 1]} : vector<8x3xf32> to vector<8x1xf32>
    %94 = vector.broadcast %93 : vector<8x1xf32> to vector<8x8xf32>
    %95 = arith.mulf %21, %94 : vector<8x8xf32>
    %96 = arith.addf %90, %95 : vector<8x8xf32>
    %97 = vector.extract_strided_slice %92 {offsets = [0, 1], sizes = [8, 1], strides = [1, 1]} : vector<8x3xf32> to vector<8x1xf32>
    %98 = vector.broadcast %97 : vector<8x1xf32> to vector<8x8xf32>
    %99 = arith.mulf %25, %98 : vector<8x8xf32>
    %100 = arith.addf %96, %99 : vector<8x8xf32>
    %101 = vector.extract_strided_slice %92 {offsets = [0, 2], sizes = [8, 1], strides = [1, 1]} : vector<8x3xf32> to vector<8x1xf32>
    %102 = vector.broadcast %101 : vector<8x1xf32> to vector<8x8xf32>
    %103 = arith.mulf %29, %102 : vector<8x8xf32>
    %104 = arith.addf %100, %103 : vector<8x8xf32>
    %105 = arith.addf %104, %37 : vector<8x8xf32>
    %cst_35 = arith.constant dense<0xFF800000> : vector<8xf32>
    %106 = vector.multi_reduction <maximumf>, %105, %cst_35 [1] : vector<8x8xf32> to vector<8xf32>
    %107 = vector.shape_cast %106 : vector<8xf32> to vector<8x1xf32>
    %108 = vector.broadcast %107 : vector<8x1xf32> to vector<8x8xf32>
    %109 = arith.subf %105, %108 : vector<8x8xf32>
    %110 = math.exp %109 : vector<8x8xf32>
    %cst_36 = arith.constant dense<0.000000e+00> : vector<8xf32>
    %111 = vector.multi_reduction <add>, %110, %cst_36 [1] : vector<8x8xf32> to vector<8xf32>
    %112 = vector.shape_cast %111 : vector<8xf32> to vector<8x1xf32>
    %113 = tpu.reciprocal %112 {approx = true} : vector<8x1xf32> -> vector<8x1xf32>
    %114 = vector.broadcast %113 : vector<8x1xf32> to vector<8x8xf32>
    %115 = arith.mulf %110, %114 : vector<8x8xf32>
    %116 = arith.truncf %115 : vector<8x8xf32> to vector<8x8xbf16>
    %cst_37 = arith.constant dense<0.000000e+00> : vector<8x8xf32>
    %117 = tpu.matmul %116, %88, %cst_37 {dimension_numbers = #tpu.dot_dimension_numbers<[1], [0], [0], [1], [0, 0, 1, 1], [], []>} : vector<8x8xbf16>, vector<8x8xbf16>, vector<8x8xf32> -> vector<8x8xf32>
    %118 = arith.mulf %115, %21 : vector<8x8xf32>
    %cst_38 = arith.constant dense<0.000000e+00> : vector<8xf32>
    %119 = vector.multi_reduction <add>, %118, %cst_38 [1] : vector<8x8xf32> to vector<8xf32>
    %120 = vector.shape_cast %119 : vector<8xf32> to vector<8x1xf32>
    %121 = arith.mulf %115, %25 : vector<8x8xf32>
    %cst_39 = arith.constant dense<0.000000e+00> : vector<8xf32>
    %122 = vector.multi_reduction <add>, %121, %cst_39 [1] : vector<8x8xf32> to vector<8xf32>
    %123 = vector.shape_cast %122 : vector<8xf32> to vector<8x1xf32>
    %124 = arith.mulf %115, %29 : vector<8x8xf32>
    %cst_40 = arith.constant dense<0.000000e+00> : vector<8xf32>
    %125 = vector.multi_reduction <add>, %124, %cst_40 [1] : vector<8x8xf32> to vector<8xf32>
    %126 = vector.shape_cast %125 : vector<8xf32> to vector<8x1xf32>
    %127 = tpu.concatenate %120, %123, %126 in 1 : vector<8x1xf32>, vector<8x1xf32>, vector<8x1xf32> -> vector<8x3xf32>
    %128 = arith.truncf %127 : vector<8x3xf32> to vector<8x3xbf16>
    %cst_41 = arith.constant dense<0.000000e+00> : vector<8x8xf32>
    %129 = tpu.matmul %128, %14, %cst_41 {dimension_numbers = #tpu.dot_dimension_numbers<[1], [0], [0], [1], [0, 0, 1, 1], [], []>} : vector<8x3xbf16>, vector<3x8xbf16>, vector<8x8xf32> -> vector<8x8xf32>
    %130 = arith.addf %117, %129 : vector<8x8xf32>
    %c0_42 = arith.constant 0 : index
    %c0_43 = arith.constant 0 : index
    %c8 = arith.constant 8 : index
    %131 = vector.load %arg9[%c0_42, %c0_43, %c8] : memref<1x8x32xf32, #tpu.memory_space<vmem>>, vector<1x8x8xf32>
    %132 = vector.shape_cast %131 : vector<1x8x8xf32> to vector<8x8xf32>
    %133 = vector.shape_cast %130 : vector<8x8xf32> to vector<1x8x8xf32>
    tpu.vector_store %arg9[%c0_42, %c0_43, %c8], %133 {strides = array<i32>} : memref<1x8x32xf32, #tpu.memory_space<vmem>>, vector<1x8x8xf32>,
    %134 = vector.extract_strided_slice %4 {offsets = [0, 16], sizes = [8, 8], strides = [1, 1]} : vector<8x32xbf16> to vector<8x8xbf16>
    %135 = vector.extract_strided_slice %7 {offsets = [0, 16], sizes = [8, 8], strides = [1, 1]} : vector<8x32xbf16> to vector<8x8xbf16>
    %136 = vector.extract_strided_slice %10 {offsets = [0, 16], sizes = [8, 8], strides = [1, 1]} : vector<8x32xbf16> to vector<8x8xbf16>
    %137 = tpu.transpose %135, [1, 0] : vector<8x8xbf16> -> vector<8x8xbf16>
    %cst_44 = arith.constant dense<0.000000e+00> : vector<8x8xf32>
    %138 = tpu.matmul %134, %137, %cst_44 {dimension_numbers = #tpu.dot_dimension_numbers<[1], [0], [0], [1], [0, 0, 1, 1], [], []>} : vector<8x8xbf16>, vector<8x8xbf16>, vector<8x8xf32> -> vector<8x8xf32>
    %139 = tpu.transpose %12, [1, 0] : vector<3x8xbf16> -> vector<8x3xbf16>
    %cst_45 = arith.constant dense<0.000000e+00> : vector<8x3xf32>
    %140 = tpu.matmul %134, %139, %cst_45 {dimension_numbers = #tpu.dot_dimension_numbers<[1], [0], [0], [1], [0, 0, 1, 1], [], []>} : vector<8x8xbf16>, vector<8x3xbf16>, vector<8x3xf32> -> vector<8x3xf32>
    %141 = vector.extract_strided_slice %140 {offsets = [0, 0], sizes = [8, 1], strides = [1, 1]} : vector<8x3xf32> to vector<8x1xf32>
    %142 = vector.broadcast %141 : vector<8x1xf32> to vector<8x8xf32>
    %143 = arith.mulf %21, %142 : vector<8x8xf32>
    %144 = arith.addf %138, %143 : vector<8x8xf32>
    %145 = vector.extract_strided_slice %140 {offsets = [0, 1], sizes = [8, 1], strides = [1, 1]} : vector<8x3xf32> to vector<8x1xf32>
    %146 = vector.broadcast %145 : vector<8x1xf32> to vector<8x8xf32>
    %147 = arith.mulf %25, %146 : vector<8x8xf32>
    %148 = arith.addf %144, %147 : vector<8x8xf32>
    %149 = vector.extract_strided_slice %140 {offsets = [0, 2], sizes = [8, 1], strides = [1, 1]} : vector<8x3xf32> to vector<8x1xf32>
    %150 = vector.broadcast %149 : vector<8x1xf32> to vector<8x8xf32>
    %151 = arith.mulf %29, %150 : vector<8x8xf32>
    %152 = arith.addf %148, %151 : vector<8x8xf32>
    %153 = arith.addf %152, %37 : vector<8x8xf32>
    %cst_46 = arith.constant dense<0xFF800000> : vector<8xf32>
    %154 = vector.multi_reduction <maximumf>, %153, %cst_46 [1] : vector<8x8xf32> to vector<8xf32>
    %155 = vector.shape_cast %154 : vector<8xf32> to vector<8x1xf32>
    %156 = vector.broadcast %155 : vector<8x1xf32> to vector<8x8xf32>
    %157 = arith.subf %153, %156 : vector<8x8xf32>
    %158 = math.exp %157 : vector<8x8xf32>
    %cst_47 = arith.constant dense<0.000000e+00> : vector<8xf32>
    %159 = vector.multi_reduction <add>, %158, %cst_47 [1] : vector<8x8xf32> to vector<8xf32>
    %160 = vector.shape_cast %159 : vector<8xf32> to vector<8x1xf32>
    %161 = tpu.reciprocal %160 {approx = true} : vector<8x1xf32> -> vector<8x1xf32>
    %162 = vector.broadcast %161 : vector<8x1xf32> to vector<8x8xf32>
    %163 = arith.mulf %158, %162 : vector<8x8xf32>
    %164 = arith.truncf %163 : vector<8x8xf32> to vector<8x8xbf16>
    %cst_48 = arith.constant dense<0.000000e+00> : vector<8x8xf32>
    %165 = tpu.matmul %164, %136, %cst_48 {dimension_numbers = #tpu.dot_dimension_numbers<[1], [0], [0], [1], [0, 0, 1, 1], [], []>} : vector<8x8xbf16>, vector<8x8xbf16>, vector<8x8xf32> -> vector<8x8xf32>
    %166 = arith.mulf %163, %21 : vector<8x8xf32>
    %cst_49 = arith.constant dense<0.000000e+00> : vector<8xf32>
    %167 = vector.multi_reduction <add>, %166, %cst_49 [1] : vector<8x8xf32> to vector<8xf32>
    %168 = vector.shape_cast %167 : vector<8xf32> to vector<8x1xf32>
    %169 = arith.mulf %163, %25 : vector<8x8xf32>
    %cst_50 = arith.constant dense<0.000000e+00> : vector<8xf32>
    %170 = vector.multi_reduction <add>, %169, %cst_50 [1] : vector<8x8xf32> to vector<8xf32>
    %171 = vector.shape_cast %170 : vector<8xf32> to vector<8x1xf32>
    %172 = arith.mulf %163, %29 : vector<8x8xf32>
    %cst_51 = arith.constant dense<0.000000e+00> : vector<8xf32>
    %173 = vector.multi_reduction <add>, %172, %cst_51 [1] : vector<8x8xf32> to vector<8xf32>
    %174 = vector.shape_cast %173 : vector<8xf32> to vector<8x1xf32>
    %175 = tpu.concatenate %168, %171, %174 in 1 : vector<8x1xf32>, vector<8x1xf32>, vector<8x1xf32> -> vector<8x3xf32>
    %176 = arith.truncf %175 : vector<8x3xf32> to vector<8x3xbf16>
    %cst_52 = arith.constant dense<0.000000e+00> : vector<8x8xf32>
    %177 = tpu.matmul %176, %14, %cst_52 {dimension_numbers = #tpu.dot_dimension_numbers<[1], [0], [0], [1], [0, 0, 1, 1], [], []>} : vector<8x3xbf16>, vector<3x8xbf16>, vector<8x8xf32> -> vector<8x8xf32>
    %178 = arith.addf %165, %177 : vector<8x8xf32>
    %c0_53 = arith.constant 0 : index
    %c0_54 = arith.constant 0 : index
    %c16 = arith.constant 16 : index
    %179 = vector.load %arg9[%c0_53, %c0_54, %c16] : memref<1x8x32xf32, #tpu.memory_space<vmem>>, vector<1x8x8xf32>
    %180 = vector.shape_cast %179 : vector<1x8x8xf32> to vector<8x8xf32>
    %181 = vector.shape_cast %178 : vector<8x8xf32> to vector<1x8x8xf32>
    tpu.vector_store %arg9[%c0_53, %c0_54, %c16], %181 {strides = array<i32>} : memref<1x8x32xf32, #tpu.memory_space<vmem>>, vector<1x8x8xf32>,
    %182 = vector.extract_strided_slice %4 {offsets = [0, 24], sizes = [8, 8], strides = [1, 1]} : vector<8x32xbf16> to vector<8x8xbf16>
    %183 = vector.extract_strided_slice %7 {offsets = [0, 24], sizes = [8, 8], strides = [1, 1]} : vector<8x32xbf16> to vector<8x8xbf16>
    %184 = vector.extract_strided_slice %10 {offsets = [0, 24], sizes = [8, 8], strides = [1, 1]} : vector<8x32xbf16> to vector<8x8xbf16>
    %185 = tpu.transpose %183, [1, 0] : vector<8x8xbf16> -> vector<8x8xbf16>
    %cst_55 = arith.constant dense<0.000000e+00> : vector<8x8xf32>
    %186 = tpu.matmul %182, %185, %cst_55 {dimension_numbers = #tpu.dot_dimension_numbers<[1], [0], [0], [1], [0, 0, 1, 1], [], []>} : vector<8x8xbf16>, vector<8x8xbf16>, vector<8x8xf32> -> vector<8x8xf32>
    %187 = tpu.transpose %12, [1, 0] : vector<3x8xbf16> -> vector<8x3xbf16>
    %cst_56 = arith.constant dense<0.000000e+00> : vector<8x3xf32>
    %188 = tpu.matmul %182, %187, %cst_56 {dimension_numbers = #tpu.dot_dimension_numbers<[1], [0], [0], [1], [0, 0, 1, 1], [], []>} : vector<8x8xbf16>, vector<8x3xbf16>, vector<8x3xf32> -> vector<8x3xf32>
    %189 = vector.extract_strided_slice %188 {offsets = [0, 0], sizes = [8, 1], strides = [1, 1]} : vector<8x3xf32> to vector<8x1xf32>
    %190 = vector.broadcast %189 : vector<8x1xf32> to vector<8x8xf32>
    %191 = arith.mulf %21, %190 : vector<8x8xf32>
    %192 = arith.addf %186, %191 : vector<8x8xf32>
    %193 = vector.extract_strided_slice %188 {offsets = [0, 1], sizes = [8, 1], strides = [1, 1]} : vector<8x3xf32> to vector<8x1xf32>
    %194 = vector.broadcast %193 : vector<8x1xf32> to vector<8x8xf32>
    %195 = arith.mulf %25, %194 : vector<8x8xf32>
    %196 = arith.addf %192, %195 : vector<8x8xf32>
    %197 = vector.extract_strided_slice %188 {offsets = [0, 2], sizes = [8, 1], strides = [1, 1]} : vector<8x3xf32> to vector<8x1xf32>
    %198 = vector.broadcast %197 : vector<8x1xf32> to vector<8x8xf32>
    %199 = arith.mulf %29, %198 : vector<8x8xf32>
    %200 = arith.addf %196, %199 : vector<8x8xf32>
    %201 = arith.addf %200, %37 : vector<8x8xf32>
    %cst_57 = arith.constant dense<0xFF800000> : vector<8xf32>
    %202 = vector.multi_reduction <maximumf>, %201, %cst_57 [1] : vector<8x8xf32> to vector<8xf32>
    %203 = vector.shape_cast %202 : vector<8xf32> to vector<8x1xf32>
    %204 = vector.broadcast %203 : vector<8x1xf32> to vector<8x8xf32>
    %205 = arith.subf %201, %204 : vector<8x8xf32>
    %206 = math.exp %205 : vector<8x8xf32>
    %cst_58 = arith.constant dense<0.000000e+00> : vector<8xf32>
    %207 = vector.multi_reduction <add>, %206, %cst_58 [1] : vector<8x8xf32> to vector<8xf32>
    %208 = vector.shape_cast %207 : vector<8xf32> to vector<8x1xf32>
    %209 = tpu.reciprocal %208 {approx = true} : vector<8x1xf32> -> vector<8x1xf32>
    %210 = vector.broadcast %209 : vector<8x1xf32> to vector<8x8xf32>
    %211 = arith.mulf %206, %210 : vector<8x8xf32>
    %212 = arith.truncf %211 : vector<8x8xf32> to vector<8x8xbf16>
    %cst_59 = arith.constant dense<0.000000e+00> : vector<8x8xf32>
    %213 = tpu.matmul %212, %184, %cst_59 {dimension_numbers = #tpu.dot_dimension_numbers<[1], [0], [0], [1], [0, 0, 1, 1], [], []>} : vector<8x8xbf16>, vector<8x8xbf16>, vector<8x8xf32> -> vector<8x8xf32>
    %214 = arith.mulf %211, %21 : vector<8x8xf32>
    %cst_60 = arith.constant dense<0.000000e+00> : vector<8xf32>
    %215 = vector.multi_reduction <add>, %214, %cst_60 [1] : vector<8x8xf32> to vector<8xf32>
    %216 = vector.shape_cast %215 : vector<8xf32> to vector<8x1xf32>
    %217 = arith.mulf %211, %25 : vector<8x8xf32>
    %cst_61 = arith.constant dense<0.000000e+00> : vector<8xf32>
    %218 = vector.multi_reduction <add>, %217, %cst_61 [1] : vector<8x8xf32> to vector<8xf32>
    %219 = vector.shape_cast %218 : vector<8xf32> to vector<8x1xf32>
    %220 = arith.mulf %211, %29 : vector<8x8xf32>
    %cst_62 = arith.constant dense<0.000000e+00> : vector<8xf32>
    %221 = vector.multi_reduction <add>, %220, %cst_62 [1] : vector<8x8xf32> to vector<8xf32>
    %222 = vector.shape_cast %221 : vector<8xf32> to vector<8x1xf32>
    %223 = tpu.concatenate %216, %219, %222 in 1 : vector<8x1xf32>, vector<8x1xf32>, vector<8x1xf32> -> vector<8x3xf32>
    %224 = arith.truncf %223 : vector<8x3xf32> to vector<8x3xbf16>
    %cst_63 = arith.constant dense<0.000000e+00> : vector<8x8xf32>
    %225 = tpu.matmul %224, %14, %cst_63 {dimension_numbers = #tpu.dot_dimension_numbers<[1], [0], [0], [1], [0, 0, 1, 1], [], []>} : vector<8x3xbf16>, vector<3x8xbf16>, vector<8x8xf32> -> vector<8x8xf32>
    %226 = arith.addf %213, %225 : vector<8x8xf32>
    %c0_64 = arith.constant 0 : index
    %c0_65 = arith.constant 0 : index
    %c24 = arith.constant 24 : index
    %227 = vector.load %arg9[%c0_64, %c0_65, %c24] : memref<1x8x32xf32, #tpu.memory_space<vmem>>, vector<1x8x8xf32>
    %228 = vector.shape_cast %227 : vector<1x8x8xf32> to vector<8x8xf32>
    %229 = vector.shape_cast %226 : vector<8x8xf32> to vector<1x8x8xf32>
    tpu.vector_store %arg9[%c0_64, %c0_65, %c24], %229 {strides = array<i32>} : memref<1x8x32xf32, #tpu.memory_space<vmem>>, vector<1x8x8xf32>,
    return
  }
  func.func @transform_0(%arg0: i32, %arg1: i32) -> (i32, i32, i32) {
    %c0_i32 = arith.constant 0 : i32
    %c0_i32_0 = arith.constant 0 : i32
    return %arg0, %arg1, %c0_i32 : i32, i32, i32
  }
  func.func @transform_1(%arg0: i32, %arg1: i32) -> (i32, i32, i32) {
    %c0_i32 = arith.constant 0 : i32
    %c0_i32_0 = arith.constant 0 : i32
    %c0_i32_1 = arith.constant 0 : i32
    return %arg0, %c0_i32, %c0_i32_0 : i32, i32, i32
  }
  func.func @transform_2(%arg0: i32, %arg1: i32) -> (i32, i32, i32) {
    %c0_i32 = arith.constant 0 : i32
    %c0_i32_0 = arith.constant 0 : i32
    %c0_i32_1 = arith.constant 0 : i32
    return %arg0, %c0_i32, %c0_i32_0 : i32, i32, i32
  }
  func.func @transform_3(%arg0: i32, %arg1: i32) -> (i32, i32, i32) {
    %c0_i32 = arith.constant 0 : i32
    %c0_i32_0 = arith.constant 0 : i32
    return %arg0, %arg1, %c0_i32 : i32, i32, i32
  }
  func.func @transform_4(%arg0: i32, %arg1: i32) -> (i32, i32) {
    %c0_i32 = arith.constant 0 : i32
    %c0_i32_0 = arith.constant 0 : i32
    %c0_i32_1 = arith.constant 0 : i32
    return %c0_i32, %c0_i32_0 : i32, i32
  }
  func.func @transform_5(%arg0: i32, %arg1: i32) -> (i32, i32) {
    %c0_i32 = arith.constant 0 : i32
    %c0_i32_0 = arith.constant 0 : i32
    %c0_i32_1 = arith.constant 0 : i32
    return %c0_i32, %c0_i32_0 : i32, i32
  }
  func.func @transform_6(%arg0: i32, %arg1: i32) -> (i32, i32, i32) {
    %c0_i32 = arith.constant 0 : i32
    %c0_i32_0 = arith.constant 0 : i32
    return %arg0, %arg1, %c0_i32 : i32, i32, i32
  }
  func.func @transform_7(%arg0: i32, %arg1: i32) -> (i32, i32, i32) {
    %c0_i32 = arith.constant 0 : i32
    %c0_i32_0 = arith.constant 0 : i32
    return %arg0, %arg1, %c0_i32 : i32, i32, i32
  }
}

module attributes {stable_mosaic.version = 11 : i64} {
  func.func @_post_attn_kernel(%arg0: i32, %arg1: memref<16x32xf32, #tpu.memory_space<vmem>>, %arg2: memref<16x32xf32, #tpu.memory_space<vmem>>, %arg3: memref<32x32xf32, #tpu.memory_space<vmem>>, %arg4: memref<1x32xf32, #tpu.memory_space<vmem>>, %arg5: memref<1x32xf32, #tpu.memory_space<vmem>>, %arg6: memref<1x32xf32, #tpu.memory_space<vmem>>, %arg7: memref<32x64xf32, #tpu.memory_space<vmem>>, %arg8: memref<1x64xf32, #tpu.memory_space<vmem>>, %arg9: memref<64x32xf32, #tpu.memory_space<vmem>>, %arg10: memref<1x32xf32, #tpu.memory_space<vmem>>, %arg11: memref<1x32xf32, #tpu.memory_space<vmem>>, %arg12: memref<1x32xf32, #tpu.memory_space<vmem>>, %arg13: memref<16x32xf32, #tpu.memory_space<vmem>>) attributes {dimension_semantics = [#tpu.dimension_semantics<parallel>], iteration_bounds = array<i64: 1>, scalar_prefetch = 0 : i64, scratch_operands = 0 : i64, tpu.core_type = #tpu.core_type<tc>, window_params = [{transform_indices = @transform_0, window_bounds = array<i64: 16, 32>}, {transform_indices = @transform_1, window_bounds = array<i64: 16, 32>}, {pipeline_mode = #tpu.pipeline_mode<synchronous>, transform_indices = @transform_2, window_bounds = array<i64: 32, 32>}, {pipeline_mode = #tpu.pipeline_mode<synchronous>, transform_indices = @transform_3, window_bounds = array<i64: 1, 32>}, {pipeline_mode = #tpu.pipeline_mode<synchronous>, transform_indices = @transform_4, window_bounds = array<i64: 1, 32>}, {pipeline_mode = #tpu.pipeline_mode<synchronous>, transform_indices = @transform_5, window_bounds = array<i64: 1, 32>}, {pipeline_mode = #tpu.pipeline_mode<synchronous>, transform_indices = @transform_6, window_bounds = array<i64: 32, 64>}, {pipeline_mode = #tpu.pipeline_mode<synchronous>, transform_indices = @transform_7, window_bounds = array<i64: 1, 64>}, {pipeline_mode = #tpu.pipeline_mode<synchronous>, transform_indices = @transform_8, window_bounds = array<i64: 64, 32>}, {pipeline_mode = #tpu.pipeline_mode<synchronous>, transform_indices = @transform_9, window_bounds = array<i64: 1, 32>}, {pipeline_mode = #tpu.pipeline_mode<synchronous>, transform_indices = @transform_10, window_bounds = array<i64: 1, 32>}, {pipeline_mode = #tpu.pipeline_mode<synchronous>, transform_indices = @transform_11, window_bounds = array<i64: 1, 32>}, {transform_indices = @transform_12, window_bounds = array<i64: 16, 32>}]} {
    %c0 = arith.constant 0 : index
    %c0_0 = arith.constant 0 : index
    %0 = vector.load %arg1[%c0, %c0_0] : memref<16x32xf32, #tpu.memory_space<vmem>>, vector<16x32xf32>
    %c0_1 = arith.constant 0 : index
    %c0_2 = arith.constant 0 : index
    %1 = vector.load %arg2[%c0_1, %c0_2] : memref<16x32xf32, #tpu.memory_space<vmem>>, vector<16x32xf32>
    %2 = arith.truncf %1 : vector<16x32xf32> to vector<16x32xbf16>
    %c0_3 = arith.constant 0 : index
    %c0_4 = arith.constant 0 : index
    %3 = vector.load %arg3[%c0_3, %c0_4] : memref<32x32xf32, #tpu.memory_space<vmem>>, vector<32x32xf32>
    %4 = arith.truncf %3 : vector<32x32xf32> to vector<32x32xbf16>
    %cst = arith.constant dense<0.000000e+00> : vector<16x32xf32>
    %5 = tpu.matmul %2, %4, %cst {dimension_numbers = #tpu.dot_dimension_numbers<[1], [0], [0], [1], [0, 0, 1, 1], [], []>} : vector<16x32xbf16>, vector<32x32xbf16>, vector<16x32xf32> -> vector<16x32xf32>
    %6 = arith.addf %0, %5 : vector<16x32xf32>
    %c0_5 = arith.constant 0 : index
    %c0_6 = arith.constant 0 : index
    %7 = vector.load %arg4[%c0_5, %c0_6] : memref<1x32xf32, #tpu.memory_space<vmem>>, vector<1x32xf32>
    %8 = vector.broadcast %7 : vector<1x32xf32> to vector<16x32xf32>
    %9 = arith.addf %6, %8 : vector<16x32xf32>
    %c0_7 = arith.constant 0 : index
    %c0_8 = arith.constant 0 : index
    %10 = vector.load %arg5[%c0_7, %c0_8] : memref<1x32xf32, #tpu.memory_space<vmem>>, vector<1x32xf32>
    %c0_9 = arith.constant 0 : index
    %c0_10 = arith.constant 0 : index
    %11 = vector.load %arg6[%c0_9, %c0_10] : memref<1x32xf32, #tpu.memory_space<vmem>>, vector<1x32xf32>
    %cst_11 = arith.constant dense<0.000000e+00> : vector<16xf32>
    %12 = vector.multi_reduction <add>, %9, %cst_11 [1] : vector<16x32xf32> to vector<16xf32>
    %13 = vector.shape_cast %12 : vector<16xf32> to vector<16x1xf32>
    %cst_12 = arith.constant 3.200000e+01 : f32
    %14 = vector.broadcast %cst_12 : f32 to vector<16x1xf32>
    %15 = arith.divf %13, %14 : vector<16x1xf32>
    %16 = vector.broadcast %15 : vector<16x1xf32> to vector<16x32xf32>
    %17 = arith.subf %9, %16 : vector<16x32xf32>
    %18 = arith.mulf %17, %17 : vector<16x32xf32>
    %cst_13 = arith.constant dense<0.000000e+00> : vector<16xf32>
    %19 = vector.multi_reduction <add>, %18, %cst_13 [1] : vector<16x32xf32> to vector<16xf32>
    %20 = vector.shape_cast %19 : vector<16xf32> to vector<16x1xf32>
    %cst_14 = arith.constant 3.200000e+01 : f32
    %21 = vector.broadcast %cst_14 : f32 to vector<16x1xf32>
    %22 = arith.divf %20, %21 : vector<16x1xf32>
    %23 = vector.broadcast %15 : vector<16x1xf32> to vector<16x32xf32>
    %24 = arith.subf %9, %23 : vector<16x32xf32>
    %cst_15 = arith.constant 9.99999974E-6 : f32
    %25 = vector.broadcast %cst_15 : f32 to vector<16x1xf32>
    %26 = arith.addf %22, %25 : vector<16x1xf32>
    %27 = math.rsqrt %26 : vector<16x1xf32>
    %28 = vector.broadcast %27 : vector<16x1xf32> to vector<16x32xf32>
    %29 = arith.mulf %24, %28 : vector<16x32xf32>
    %30 = vector.broadcast %10 : vector<1x32xf32> to vector<16x32xf32>
    %31 = arith.mulf %29, %30 : vector<16x32xf32>
    %32 = vector.broadcast %11 : vector<1x32xf32> to vector<16x32xf32>
    %33 = arith.addf %31, %32 : vector<16x32xf32>
    %34 = arith.truncf %33 : vector<16x32xf32> to vector<16x32xbf16>
    %c0_16 = arith.constant 0 : index
    %c0_17 = arith.constant 0 : index
    %35 = vector.load %arg7[%c0_16, %c0_17] : memref<32x64xf32, #tpu.memory_space<vmem>>, vector<32x64xf32>
    %36 = arith.truncf %35 : vector<32x64xf32> to vector<32x64xbf16>
    %cst_18 = arith.constant dense<0.000000e+00> : vector<16x64xf32>
    %37 = tpu.matmul %34, %36, %cst_18 {dimension_numbers = #tpu.dot_dimension_numbers<[1], [0], [0], [1], [0, 0, 1, 1], [], []>} : vector<16x32xbf16>, vector<32x64xbf16>, vector<16x64xf32> -> vector<16x64xf32>
    %c0_19 = arith.constant 0 : index
    %c0_20 = arith.constant 0 : index
    %38 = vector.load %arg8[%c0_19, %c0_20] : memref<1x64xf32, #tpu.memory_space<vmem>>, vector<1x64xf32>
    %39 = vector.broadcast %38 : vector<1x64xf32> to vector<16x64xf32>
    %40 = arith.addf %37, %39 : vector<16x64xf32>
    %cst_21 = arith.constant 5.000000e-01 : f32
    %41 = vector.broadcast %cst_21 : f32 to vector<16x64xf32>
    %42 = arith.mulf %41, %40 : vector<16x64xf32>
    %cst_22 = arith.constant 0.707106769 : f32
    %43 = vector.broadcast %cst_22 : f32 to vector<16x64xf32>
    %44 = arith.mulf %40, %43 : vector<16x64xf32>
    %45 = math.erf %44 : vector<16x64xf32>
    %cst_23 = arith.constant 1.000000e+00 : f32
    %46 = vector.broadcast %cst_23 : f32 to vector<16x64xf32>
    %47 = arith.addf %46, %45 : vector<16x64xf32>
    %48 = arith.mulf %42, %47 : vector<16x64xf32>
    %49 = arith.truncf %48 : vector<16x64xf32> to vector<16x64xbf16>
    %c0_24 = arith.constant 0 : index
    %c0_25 = arith.constant 0 : index
    %50 = vector.load %arg9[%c0_24, %c0_25] : memref<64x32xf32, #tpu.memory_space<vmem>>, vector<64x32xf32>
    %51 = arith.truncf %50 : vector<64x32xf32> to vector<64x32xbf16>
    %cst_26 = arith.constant dense<0.000000e+00> : vector<16x32xf32>
    %52 = tpu.matmul %49, %51, %cst_26 {dimension_numbers = #tpu.dot_dimension_numbers<[1], [0], [0], [1], [0, 0, 1, 1], [], []>} : vector<16x64xbf16>, vector<64x32xbf16>, vector<16x32xf32> -> vector<16x32xf32>
    %c0_27 = arith.constant 0 : index
    %c0_28 = arith.constant 0 : index
    %53 = vector.load %arg10[%c0_27, %c0_28] : memref<1x32xf32, #tpu.memory_space<vmem>>, vector<1x32xf32>
    %54 = vector.broadcast %53 : vector<1x32xf32> to vector<16x32xf32>
    %55 = arith.addf %52, %54 : vector<16x32xf32>
    %56 = arith.addf %33, %55 : vector<16x32xf32>
    %c0_29 = arith.constant 0 : index
    %c0_30 = arith.constant 0 : index
    %57 = vector.load %arg11[%c0_29, %c0_30] : memref<1x32xf32, #tpu.memory_space<vmem>>, vector<1x32xf32>
    %c0_31 = arith.constant 0 : index
    %c0_32 = arith.constant 0 : index
    %58 = vector.load %arg12[%c0_31, %c0_32] : memref<1x32xf32, #tpu.memory_space<vmem>>, vector<1x32xf32>
    %cst_33 = arith.constant dense<0.000000e+00> : vector<16xf32>
    %59 = vector.multi_reduction <add>, %56, %cst_33 [1] : vector<16x32xf32> to vector<16xf32>
    %60 = vector.shape_cast %59 : vector<16xf32> to vector<16x1xf32>
    %cst_34 = arith.constant 3.200000e+01 : f32
    %61 = vector.broadcast %cst_34 : f32 to vector<16x1xf32>
    %62 = arith.divf %60, %61 : vector<16x1xf32>
    %63 = vector.broadcast %62 : vector<16x1xf32> to vector<16x32xf32>
    %64 = arith.subf %56, %63 : vector<16x32xf32>
    %65 = arith.mulf %64, %64 : vector<16x32xf32>
    %cst_35 = arith.constant dense<0.000000e+00> : vector<16xf32>
    %66 = vector.multi_reduction <add>, %65, %cst_35 [1] : vector<16x32xf32> to vector<16xf32>
    %67 = vector.shape_cast %66 : vector<16xf32> to vector<16x1xf32>
    %cst_36 = arith.constant 3.200000e+01 : f32
    %68 = vector.broadcast %cst_36 : f32 to vector<16x1xf32>
    %69 = arith.divf %67, %68 : vector<16x1xf32>
    %70 = vector.broadcast %62 : vector<16x1xf32> to vector<16x32xf32>
    %71 = arith.subf %56, %70 : vector<16x32xf32>
    %cst_37 = arith.constant 9.99999974E-6 : f32
    %72 = vector.broadcast %cst_37 : f32 to vector<16x1xf32>
    %73 = arith.addf %69, %72 : vector<16x1xf32>
    %74 = math.rsqrt %73 : vector<16x1xf32>
    %75 = vector.broadcast %74 : vector<16x1xf32> to vector<16x32xf32>
    %76 = arith.mulf %71, %75 : vector<16x32xf32>
    %77 = vector.broadcast %57 : vector<1x32xf32> to vector<16x32xf32>
    %78 = arith.mulf %76, %77 : vector<16x32xf32>
    %79 = vector.broadcast %58 : vector<1x32xf32> to vector<16x32xf32>
    %80 = arith.addf %78, %79 : vector<16x32xf32>
    %c0_38 = arith.constant 0 : index
    %c0_39 = arith.constant 0 : index
    %81 = vector.load %arg13[%c0_38, %c0_39] : memref<16x32xf32, #tpu.memory_space<vmem>>, vector<16x32xf32>
    tpu.vector_store %arg13[%c0_38, %c0_39], %80 {strides = array<i32>} : memref<16x32xf32, #tpu.memory_space<vmem>>, vector<16x32xf32>,
    return
  }
  func.func @transform_0(%arg0: i32) -> (i32, i32) {
    %c0_i32 = arith.constant 0 : i32
    %c0_i32_0 = arith.constant 0 : i32
    return %arg0, %c0_i32 : i32, i32
  }
  func.func @transform_1(%arg0: i32) -> (i32, i32) {
    %c0_i32 = arith.constant 0 : i32
    %c0_i32_0 = arith.constant 0 : i32
    return %arg0, %c0_i32 : i32, i32
  }
  func.func @transform_2(%arg0: i32) -> (i32, i32) {
    %c0_i32 = arith.constant 0 : i32
    %c0_i32_0 = arith.constant 0 : i32
    %c0_i32_1 = arith.constant 0 : i32
    return %c0_i32, %c0_i32_0 : i32, i32
  }
  func.func @transform_3(%arg0: i32) -> (i32, i32) {
    %c0_i32 = arith.constant 0 : i32
    %c0_i32_0 = arith.constant 0 : i32
    %c0_i32_1 = arith.constant 0 : i32
    return %c0_i32, %c0_i32_0 : i32, i32
  }
  func.func @transform_4(%arg0: i32) -> (i32, i32) {
    %c0_i32 = arith.constant 0 : i32
    %c0_i32_0 = arith.constant 0 : i32
    %c0_i32_1 = arith.constant 0 : i32
    return %c0_i32, %c0_i32_0 : i32, i32
  }
  func.func @transform_5(%arg0: i32) -> (i32, i32) {
    %c0_i32 = arith.constant 0 : i32
    %c0_i32_0 = arith.constant 0 : i32
    %c0_i32_1 = arith.constant 0 : i32
    return %c0_i32, %c0_i32_0 : i32, i32
  }
  func.func @transform_6(%arg0: i32) -> (i32, i32) {
    %c0_i32 = arith.constant 0 : i32
    %c0_i32_0 = arith.constant 0 : i32
    %c0_i32_1 = arith.constant 0 : i32
    return %c0_i32, %c0_i32_0 : i32, i32
  }
  func.func @transform_7(%arg0: i32) -> (i32, i32) {
    %c0_i32 = arith.constant 0 : i32
    %c0_i32_0 = arith.constant 0 : i32
    %c0_i32_1 = arith.constant 0 : i32
    return %c0_i32, %c0_i32_0 : i32, i32
  }
  func.func @transform_8(%arg0: i32) -> (i32, i32) {
    %c0_i32 = arith.constant 0 : i32
    %c0_i32_0 = arith.constant 0 : i32
    %c0_i32_1 = arith.constant 0 : i32
    return %c0_i32, %c0_i32_0 : i32, i32
  }
  func.func @transform_9(%arg0: i32) -> (i32, i32) {
    %c0_i32 = arith.constant 0 : i32
    %c0_i32_0 = arith.constant 0 : i32
    %c0_i32_1 = arith.constant 0 : i32
    return %c0_i32, %c0_i32_0 : i32, i32
  }
  func.func @transform_10(%arg0: i32) -> (i32, i32) {
    %c0_i32 = arith.constant 0 : i32
    %c0_i32_0 = arith.constant 0 : i32
    %c0_i32_1 = arith.constant 0 : i32
    return %c0_i32, %c0_i32_0 : i32, i32
  }
  func.func @transform_11(%arg0: i32) -> (i32, i32) {
    %c0_i32 = arith.constant 0 : i32
    %c0_i32_0 = arith.constant 0 : i32
    %c0_i32_1 = arith.constant 0 : i32
    return %c0_i32, %c0_i32_0 : i32, i32
  }
  func.func @transform_12(%arg0: i32) -> (i32, i32) {
    %c0_i32 = arith.constant 0 : i32
    %c0_i32_0 = arith.constant 0 : i32
    return %arg0, %c0_i32 : i32, i32
  }
}

module attributes {stable_mosaic.version = 11 : i64} {
  func.func @_post_attn_kernel(%arg0: i32, %arg1: memref<16x32xf32, #tpu.memory_space<vmem>>, %arg2: memref<16x32xf32, #tpu.memory_space<vmem>>, %arg3: memref<32x32xf32, #tpu.memory_space<vmem>>, %arg4: memref<1x32xf32, #tpu.memory_space<vmem>>, %arg5: memref<1x32xf32, #tpu.memory_space<vmem>>, %arg6: memref<1x32xf32, #tpu.memory_space<vmem>>, %arg7: memref<32x64xf32, #tpu.memory_space<vmem>>, %arg8: memref<1x64xf32, #tpu.memory_space<vmem>>, %arg9: memref<64x32xf32, #tpu.memory_space<vmem>>, %arg10: memref<1x32xf32, #tpu.memory_space<vmem>>, %arg11: memref<1x32xf32, #tpu.memory_space<vmem>>, %arg12: memref<1x32xf32, #tpu.memory_space<vmem>>, %arg13: memref<16x32xf32, #tpu.memory_space<vmem>>) attributes {dimension_semantics = [#tpu.dimension_semantics<parallel>], iteration_bounds = array<i64: 1>, scalar_prefetch = 0 : i64, scratch_operands = 0 : i64, tpu.core_type = #tpu.core_type<tc>, window_params = [{transform_indices = @transform_0, window_bounds = array<i64: 16, 32>}, {transform_indices = @transform_1, window_bounds = array<i64: 16, 32>}, {pipeline_mode = #tpu.pipeline_mode<synchronous>, transform_indices = @transform_2, window_bounds = array<i64: 32, 32>}, {pipeline_mode = #tpu.pipeline_mode<synchronous>, transform_indices = @transform_3, window_bounds = array<i64: 1, 32>}, {pipeline_mode = #tpu.pipeline_mode<synchronous>, transform_indices = @transform_4, window_bounds = array<i64: 1, 32>}, {pipeline_mode = #tpu.pipeline_mode<synchronous>, transform_indices = @transform_5, window_bounds = array<i64: 1, 32>}, {pipeline_mode = #tpu.pipeline_mode<synchronous>, transform_indices = @transform_6, window_bounds = array<i64: 32, 64>}, {pipeline_mode = #tpu.pipeline_mode<synchronous>, transform_indices = @transform_7, window_bounds = array<i64: 1, 64>}, {pipeline_mode = #tpu.pipeline_mode<synchronous>, transform_indices = @transform_8, window_bounds = array<i64: 64, 32>}, {pipeline_mode = #tpu.pipeline_mode<synchronous>, transform_indices = @transform_9, window_bounds = array<i64: 1, 32>}, {pipeline_mode = #tpu.pipeline_mode<synchronous>, transform_indices = @transform_10, window_bounds = array<i64: 1, 32>}, {pipeline_mode = #tpu.pipeline_mode<synchronous>, transform_indices = @transform_11, window_bounds = array<i64: 1, 32>}, {transform_indices = @transform_12, window_bounds = array<i64: 16, 32>}]} {
    %c0 = arith.constant 0 : index
    %c0_0 = arith.constant 0 : index
    %0 = vector.load %arg1[%c0, %c0_0] : memref<16x32xf32, #tpu.memory_space<vmem>>, vector<16x32xf32>
    %c0_1 = arith.constant 0 : index
    %c0_2 = arith.constant 0 : index
    %1 = vector.load %arg2[%c0_1, %c0_2] : memref<16x32xf32, #tpu.memory_space<vmem>>, vector<16x32xf32>
    %2 = arith.truncf %1 : vector<16x32xf32> to vector<16x32xbf16>
    %c0_3 = arith.constant 0 : index
    %c0_4 = arith.constant 0 : index
    %3 = vector.load %arg3[%c0_3, %c0_4] : memref<32x32xf32, #tpu.memory_space<vmem>>, vector<32x32xf32>
    %4 = arith.truncf %3 : vector<32x32xf32> to vector<32x32xbf16>
    %cst = arith.constant dense<0.000000e+00> : vector<16x32xf32>
    %5 = tpu.matmul %2, %4, %cst {dimension_numbers = #tpu.dot_dimension_numbers<[1], [0], [0], [1], [0, 0, 1, 1], [], []>} : vector<16x32xbf16>, vector<32x32xbf16>, vector<16x32xf32> -> vector<16x32xf32>
    %6 = arith.addf %0, %5 : vector<16x32xf32>
    %c0_5 = arith.constant 0 : index
    %c0_6 = arith.constant 0 : index
    %7 = vector.load %arg4[%c0_5, %c0_6] : memref<1x32xf32, #tpu.memory_space<vmem>>, vector<1x32xf32>
    %8 = vector.broadcast %7 : vector<1x32xf32> to vector<16x32xf32>
    %9 = arith.addf %6, %8 : vector<16x32xf32>
    %c0_7 = arith.constant 0 : index
    %c0_8 = arith.constant 0 : index
    %10 = vector.load %arg5[%c0_7, %c0_8] : memref<1x32xf32, #tpu.memory_space<vmem>>, vector<1x32xf32>
    %c0_9 = arith.constant 0 : index
    %c0_10 = arith.constant 0 : index
    %11 = vector.load %arg6[%c0_9, %c0_10] : memref<1x32xf32, #tpu.memory_space<vmem>>, vector<1x32xf32>
    %cst_11 = arith.constant dense<0.000000e+00> : vector<16xf32>
    %12 = vector.multi_reduction <add>, %9, %cst_11 [1] : vector<16x32xf32> to vector<16xf32>
    %13 = vector.shape_cast %12 : vector<16xf32> to vector<16x1xf32>
    %cst_12 = arith.constant 3.200000e+01 : f32
    %14 = vector.broadcast %cst_12 : f32 to vector<16x1xf32>
    %15 = arith.divf %13, %14 : vector<16x1xf32>
    %16 = vector.broadcast %15 : vector<16x1xf32> to vector<16x32xf32>
    %17 = arith.subf %9, %16 : vector<16x32xf32>
    %18 = arith.mulf %17, %17 : vector<16x32xf32>
    %cst_13 = arith.constant dense<0.000000e+00> : vector<16xf32>
    %19 = vector.multi_reduction <add>, %18, %cst_13 [1] : vector<16x32xf32> to vector<16xf32>
    %20 = vector.shape_cast %19 : vector<16xf32> to vector<16x1xf32>
    %cst_14 = arith.constant 3.200000e+01 : f32
    %21 = vector.broadcast %cst_14 : f32 to vector<16x1xf32>
    %22 = arith.divf %20, %21 : vector<16x1xf32>
    %23 = vector.broadcast %15 : vector<16x1xf32> to vector<16x32xf32>
    %24 = arith.subf %9, %23 : vector<16x32xf32>
    %cst_15 = arith.constant 9.99999974E-6 : f32
    %25 = vector.broadcast %cst_15 : f32 to vector<16x1xf32>
    %26 = arith.addf %22, %25 : vector<16x1xf32>
    %27 = math.rsqrt %26 : vector<16x1xf32>
    %28 = vector.broadcast %27 : vector<16x1xf32> to vector<16x32xf32>
    %29 = arith.mulf %24, %28 : vector<16x32xf32>
    %30 = vector.broadcast %10 : vector<1x32xf32> to vector<16x32xf32>
    %31 = arith.mulf %29, %30 : vector<16x32xf32>
    %32 = vector.broadcast %11 : vector<1x32xf32> to vector<16x32xf32>
    %33 = arith.addf %31, %32 : vector<16x32xf32>
    %34 = arith.truncf %33 : vector<16x32xf32> to vector<16x32xbf16>
    %c0_16 = arith.constant 0 : index
    %c0_17 = arith.constant 0 : index
    %35 = vector.load %arg7[%c0_16, %c0_17] : memref<32x64xf32, #tpu.memory_space<vmem>>, vector<32x64xf32>
    %36 = arith.truncf %35 : vector<32x64xf32> to vector<32x64xbf16>
    %cst_18 = arith.constant dense<0.000000e+00> : vector<16x64xf32>
    %37 = tpu.matmul %34, %36, %cst_18 {dimension_numbers = #tpu.dot_dimension_numbers<[1], [0], [0], [1], [0, 0, 1, 1], [], []>} : vector<16x32xbf16>, vector<32x64xbf16>, vector<16x64xf32> -> vector<16x64xf32>
    %c0_19 = arith.constant 0 : index
    %c0_20 = arith.constant 0 : index
    %38 = vector.load %arg8[%c0_19, %c0_20] : memref<1x64xf32, #tpu.memory_space<vmem>>, vector<1x64xf32>
    %39 = vector.broadcast %38 : vector<1x64xf32> to vector<16x64xf32>
    %40 = arith.addf %37, %39 : vector<16x64xf32>
    %cst_21 = arith.constant 5.000000e-01 : f32
    %41 = vector.broadcast %cst_21 : f32 to vector<16x64xf32>
    %42 = arith.mulf %41, %40 : vector<16x64xf32>
    %cst_22 = arith.constant 0.707106769 : f32
    %43 = vector.broadcast %cst_22 : f32 to vector<16x64xf32>
    %44 = arith.mulf %40, %43 : vector<16x64xf32>
    %45 = math.erf %44 : vector<16x64xf32>
    %cst_23 = arith.constant 1.000000e+00 : f32
    %46 = vector.broadcast %cst_23 : f32 to vector<16x64xf32>
    %47 = arith.addf %46, %45 : vector<16x64xf32>
    %48 = arith.mulf %42, %47 : vector<16x64xf32>
    %49 = arith.truncf %48 : vector<16x64xf32> to vector<16x64xbf16>
    %c0_24 = arith.constant 0 : index
    %c0_25 = arith.constant 0 : index
    %50 = vector.load %arg9[%c0_24, %c0_25] : memref<64x32xf32, #tpu.memory_space<vmem>>, vector<64x32xf32>
    %51 = arith.truncf %50 : vector<64x32xf32> to vector<64x32xbf16>
    %cst_26 = arith.constant dense<0.000000e+00> : vector<16x32xf32>
    %52 = tpu.matmul %49, %51, %cst_26 {dimension_numbers = #tpu.dot_dimension_numbers<[1], [0], [0], [1], [0, 0, 1, 1], [], []>} : vector<16x64xbf16>, vector<64x32xbf16>, vector<16x32xf32> -> vector<16x32xf32>
    %c0_27 = arith.constant 0 : index
    %c0_28 = arith.constant 0 : index
    %53 = vector.load %arg10[%c0_27, %c0_28] : memref<1x32xf32, #tpu.memory_space<vmem>>, vector<1x32xf32>
    %54 = vector.broadcast %53 : vector<1x32xf32> to vector<16x32xf32>
    %55 = arith.addf %52, %54 : vector<16x32xf32>
    %56 = arith.addf %33, %55 : vector<16x32xf32>
    %c0_29 = arith.constant 0 : index
    %c0_30 = arith.constant 0 : index
    %57 = vector.load %arg11[%c0_29, %c0_30] : memref<1x32xf32, #tpu.memory_space<vmem>>, vector<1x32xf32>
    %c0_31 = arith.constant 0 : index
    %c0_32 = arith.constant 0 : index
    %58 = vector.load %arg12[%c0_31, %c0_32] : memref<1x32xf32, #tpu.memory_space<vmem>>, vector<1x32xf32>
    %cst_33 = arith.constant dense<0.000000e+00> : vector<16xf32>
    %59 = vector.multi_reduction <add>, %56, %cst_33 [1] : vector<16x32xf32> to vector<16xf32>
    %60 = vector.shape_cast %59 : vector<16xf32> to vector<16x1xf32>
    %cst_34 = arith.constant 3.200000e+01 : f32
    %61 = vector.broadcast %cst_34 : f32 to vector<16x1xf32>
    %62 = arith.divf %60, %61 : vector<16x1xf32>
    %63 = vector.broadcast %62 : vector<16x1xf32> to vector<16x32xf32>
    %64 = arith.subf %56, %63 : vector<16x32xf32>
    %65 = arith.mulf %64, %64 : vector<16x32xf32>
    %cst_35 = arith.constant dense<0.000000e+00> : vector<16xf32>
    %66 = vector.multi_reduction <add>, %65, %cst_35 [1] : vector<16x32xf32> to vector<16xf32>
    %67 = vector.shape_cast %66 : vector<16xf32> to vector<16x1xf32>
    %cst_36 = arith.constant 3.200000e+01 : f32
    %68 = vector.broadcast %cst_36 : f32 to vector<16x1xf32>
    %69 = arith.divf %67, %68 : vector<16x1xf32>
    %70 = vector.broadcast %62 : vector<16x1xf32> to vector<16x32xf32>
    %71 = arith.subf %56, %70 : vector<16x32xf32>
    %cst_37 = arith.constant 9.99999974E-6 : f32
    %72 = vector.broadcast %cst_37 : f32 to vector<16x1xf32>
    %73 = arith.addf %69, %72 : vector<16x1xf32>
    %74 = math.rsqrt %73 : vector<16x1xf32>
    %75 = vector.broadcast %74 : vector<16x1xf32> to vector<16x32xf32>
    %76 = arith.mulf %71, %75 : vector<16x32xf32>
    %77 = vector.broadcast %57 : vector<1x32xf32> to vector<16x32xf32>
    %78 = arith.mulf %76, %77 : vector<16x32xf32>
    %79 = vector.broadcast %58 : vector<1x32xf32> to vector<16x32xf32>
    %80 = arith.addf %78, %79 : vector<16x32xf32>
    %c0_38 = arith.constant 0 : index
    %c0_39 = arith.constant 0 : index
    %81 = vector.load %arg13[%c0_38, %c0_39] : memref<16x32xf32, #tpu.memory_space<vmem>>, vector<16x32xf32>
    tpu.vector_store %arg13[%c0_38, %c0_39], %80 {strides = array<i32>} : memref<16x32xf32, #tpu.memory_space<vmem>>, vector<16x32xf32>,
    return
  }
  func.func @transform_0(%arg0: i32) -> (i32, i32) {
    %c0_i32 = arith.constant 0 : i32
    %c0_i32_0 = arith.constant 0 : i32
    return %arg0, %c0_i32 : i32, i32
  }
  func.func @transform_1(%arg0: i32) -> (i32, i32) {
    %c0_i32 = arith.constant 0 : i32
    %c0_i32_0 = arith.constant 0 : i32
    return %arg0, %c0_i32 : i32, i32
  }
  func.func @transform_2(%arg0: i32) -> (i32, i32) {
    %c0_i32 = arith.constant 0 : i32
    %c0_i32_0 = arith.constant 0 : i32
    %c0_i32_1 = arith.constant 0 : i32
    return %c0_i32, %c0_i32_0 : i32, i32
  }
  func.func @transform_3(%arg0: i32) -> (i32, i32) {
    %c0_i32 = arith.constant 0 : i32
    %c0_i32_0 = arith.constant 0 : i32
    %c0_i32_1 = arith.constant 0 : i32
    return %c0_i32, %c0_i32_0 : i32, i32
  }
  func.func @transform_4(%arg0: i32) -> (i32, i32) {
    %c0_i32 = arith.constant 0 : i32
    %c0_i32_0 = arith.constant 0 : i32
    %c0_i32_1 = arith.constant 0 : i32
    return %c0_i32, %c0_i32_0 : i32, i32
  }
  func.func @transform_5(%arg0: i32) -> (i32, i32) {
    %c0_i32 = arith.constant 0 : i32
    %c0_i32_0 = arith.constant 0 : i32
    %c0_i32_1 = arith.constant 0 : i32
    return %c0_i32, %c0_i32_0 : i32, i32
  }
  func.func @transform_6(%arg0: i32) -> (i32, i32) {
    %c0_i32 = arith.constant 0 : i32
    %c0_i32_0 = arith.constant 0 : i32
    %c0_i32_1 = arith.constant 0 : i32
    return %c0_i32, %c0_i32_0 : i32, i32
  }
  func.func @transform_7(%arg0: i32) -> (i32, i32) {
    %c0_i32 = arith.constant 0 : i32
    %c0_i32_0 = arith.constant 0 : i32
    %c0_i32_1 = arith.constant 0 : i32
    return %c0_i32, %c0_i32_0 : i32, i32
  }
  func.func @transform_8(%arg0: i32) -> (i32, i32) {
    %c0_i32 = arith.constant 0 : i32
    %c0_i32_0 = arith.constant 0 : i32
    %c0_i32_1 = arith.constant 0 : i32
    return %c0_i32, %c0_i32_0 : i32, i32
  }
  func.func @transform_9(%arg0: i32) -> (i32, i32) {
    %c0_i32 = arith.constant 0 : i32
    %c0_i32_0 = arith.constant 0 : i32
    %c0_i32_1 = arith.constant 0 : i32
    return %c0_i32, %c0_i32_0 : i32, i32
  }
  func.func @transform_10(%arg0: i32) -> (i32, i32) {
    %c0_i32 = arith.constant 0 : i32
    %c0_i32_0 = arith.constant 0 : i32
    %c0_i32_1 = arith.constant 0 : i32
    return %c0_i32, %c0_i32_0 : i32, i32
  }
  func.func @transform_11(%arg0: i32) -> (i32, i32) {
    %c0_i32 = arith.constant 0 : i32
    %c0_i32_0 = arith.constant 0 : i32
    %c0_i32_1 = arith.constant 0 : i32
    return %c0_i32, %c0_i32_0 : i32, i32
  }
  func.func @transform_12(%arg0: i32) -> (i32, i32) {
    %c0_i32 = arith.constant 0 : i32
    %c0_i32_0 = arith.constant 0 : i32
    return %arg0, %c0_i32 : i32, i32
  }
}

</mosaic_0001>

<llo_original>
// kernel: transformer_encoder.6
$region0: #{transformer_encoder.6}
  #allocation0 [shape = 'u32[]', space=smem, size = 0x4, offset = 0x4, fixed_abs, tag = 'smem constant byte address 0x4 - core index']
  #allocation1 [shape = 'u32[144,128]{1,0:T(1,128)}', space=vmem, size = 0x12000, scoped, tag = 'internal scratch']
  %s0 = inlined_call_operand.vmem [shape: f32[16,32], index: 0, kind: input, shape index: {}]
  %s1 = inlined_call_operand.vmem [shape: f32[32,96], index: 1, kind: input, shape index: {}]
  %s2 = inlined_call_operand.vmem [shape: f32[1,96], index: 2, kind: input, shape index: {}]
  %s3 = inlined_call_operand.vmem [shape: f32[16,32], index: 3, kind: output, shape index: {0}]
  %s4 = inlined_call_operand.vmem [shape: f32[16,32], index: 4, kind: output, shape index: {1}]
  %s5 = inlined_call_operand.vmem [shape: f32[16,32], index: 5, kind: output, shape index: {2}]
  %6 = xla_tuple %s3, %s4, %s5
  %s7 = sld [smem:[#allocation0]]
  $region38: #{transformer_encoder.6} parent=0
    _
  %s9 = ssub.s32 1, %s7
  %s10 = scalar_select 0, %s9, %s7
  // Predicated region
  $region2: #{transformer_encoder.6} parent=0 // pred_check
    _
  $region3: #{transformer_encoder.6} parent=0 // pred_check_branch
    %12 = sbr.rel (0) target = $region5
  $region4: #{transformer_encoder.6} parent=0 // pred_region
    _
  $region5: #{transformer_encoder.6} parent=0 // pred_fallthru
    _
  // Predicated region
  $region6: #{transformer_encoder.6} parent=0 // pred_check
    _
  $region7: #{transformer_encoder.6} parent=0 // pred_check_branch
    %14 = sbr.rel (0) target = $region9
  $region8: #{transformer_encoder.6} parent=0 // pred_region
    _
  $region9: #{transformer_encoder.6} parent=0 // pred_fallthru
    _
  // Predicated region
  $region10: #{transformer_encoder.6} parent=0 // pred_check
    _
  $region11: #{transformer_encoder.6} parent=0 // pred_check_branch
    %16 = sbr.rel (0) target = $region13
  $region12: #{transformer_encoder.6} parent=0 // pred_region
    _
  $region13: #{transformer_encoder.6} parent=0 // pred_fallthru
    _
  %v18 = vld [vmem:[%s0] sm:$0xff]
  %v19 = vld [vmem:[%s0 + $0x8] sm:$0xff]
  %v20 = vpack.c.bf16 %v19, %v18
  %v21 = vld [vmem:[%s1] sm:$0xff]
  %v22 = vld [vmem:[%s1 + $0x8] sm:$0xff]
  %v23 = vld [vmem:[%s1 + $0x10] sm:$0xff]
  %v24 = vld [vmem:[%s1 + $0x18] sm:$0xff]
  %v25 = vpack.c.bf16 %v22, %v21
  %v26 = vpack.c.bf16 %v24, %v23
  %v27 = vld [vmem:[%s2] sm:$0x1]
  %v29 = vlaneseq
  %v30 = vshrl.u32 %v29, 7
  %v31 = vsub.s32 0, %v30
  %v32 = vrot.slane %v27, %v31
  %vm34 = vcmask 261120
  %v36 = vsel %vm34, %v20, 0
  %38 = vmatprep.subr.bf16.mxu0 0
  %39 = vmatpush1.bf16.msra.mxu0 %v25
  %40 = vmatprep.subr.bf16.mxu0 0
  %41 = vmatpush1.bf16.msra.mxu0 %v26
  %42 = vmatprep.subr.bf16.mxu0 0
  %43 = vmatpush1.bf16.msra.mxu0 0
  %44 = vmatprep.subr.bf16.mxu0 0
  %45 = vmatpush1.bf16.msra.mxu0 0
  %46 = vmatprep.subr.bf16.mxu0 0
  %47 = vmatpush1.bf16.msra.mxu0 0
  %48 = vmatprep.subr.bf16.mxu0 0
  %49 = vmatpush1.bf16.msra.mxu0 0
  %50 = vmatprep.subr.bf16.mxu0 0
  %51 = vmatpush1.bf16.msra.mxu0 0
  %52 = vmatprep.subr.bf16.mxu0 0
  %53 = vmatpush1.bf16.msra.mxu0 0
  %54 = vmatprep.subr.bf16.mxu0 0
  %55 = vmatpush1.bf16.msra.mxu0 0
  %56 = vmatprep.subr.bf16.mxu0 0
  %57 = vmatpush1.bf16.msra.mxu0 0
  %58 = vmatprep.subr.bf16.mxu0 0
  %59 = vmatpush1.bf16.msra.mxu0 0
  %60 = vmatprep.subr.bf16.mxu0 0
  %61 = vmatpush1.bf16.msra.mxu0 0
  %62 = vmatprep.subr.bf16.mxu0 0
  %63 = vmatpush1.bf16.msra.mxu0 0
  %64 = vmatprep.subr.bf16.mxu0 0
  %65 = vmatpush1.bf16.msra.mxu0 0
  %66 = vmatprep.subr.bf16.mxu0 0
  %67 = vmatpush1.bf16.msra.mxu0 0
  %68 = vmatprep.subr.bf16.mxu0 0
  %69 = vmatpush1.bf16.msra.mxu0 0
  %70 = vmatprep.mubr.bf16.mxu0 0
  %71 = vmatmul.mubr.bf16.gmra.mrb[0].mxu0 %v36
  %v72 = vpop.f32.mrb[0].mxu0
  %v73 = vadd.f32 %v32, %v72
  %v74 = vpop.f32.mrb[0].mxu0
  %v75 = vpop.f32.mrb[0].mxu0
  %v76 = vadd.f32 %v32, %v75
  %v77 = vpop.f32.mrb[0].mxu0
  %78 = vdwg.mxu0
  %79 = vst.msk [vmem:[%s3] sm:$0xff] %vm34, %v73
  %80 = vst.msk [vmem:[%s3 + $0x8] sm:$0xff] %vm34, %v76
  %83 = vrot.lane.b32.xlu0 %v73, 96
  %v84 = vpop.permute.xlu0 %83
  %85 = vrot.lane.b32.xlu0 %v76, 96
  %v86 = vpop.permute.xlu0 %85
  %89 = vst.msk [vmem:[%s4] sm:$0xff] %vm34, %v84
  %90 = vst.msk [vmem:[%s4 + $0x8] sm:$0xff] %vm34, %v86
  %91 = vrot.lane.b32.xlu0 %v73, 64
  %v92 = vpop.permute.xlu0 %91
  %93 = vrot.lane.b32.xlu0 %v76, 64
  %v94 = vpop.permute.xlu0 %93
  %97 = vst.msk [vmem:[%s5] sm:$0xff] %vm34, %v92
  %98 = vst.msk [vmem:[%s5 + $0x8] sm:$0xff] %vm34, %v94
  // Predicated region
  $region14: #{transformer_encoder.6} parent=0 // pred_check
    _
  $region15: #{transformer_encoder.6} parent=0 // pred_check_branch
    %100 = sbr.rel (0) target = $region17
  $region16: #{transformer_encoder.6} parent=0 // pred_region
    _
  $region17: #{transformer_encoder.6} parent=0 // pred_fallthru
    _
  // Predicated region
  $region18: #{transformer_encoder.6} parent=0 // pred_check
    _
  $region19: #{transformer_encoder.6} parent=0 // pred_check_branch
    %102 = sbr.rel (0) target = $region21
  $region20: #{transformer_encoder.6} parent=0 // pred_region
    _
  $region21: #{transformer_encoder.6} parent=0 // pred_fallthru
    _
  // Predicated region
  $region22: #{transformer_encoder.6} parent=0 // pred_check
    _
  $region23: #{transformer_encoder.6} parent=0 // pred_check_branch
    %104 = sbr.rel (0) target = $region25
  $region24: #{transformer_encoder.6} parent=0 // pred_region
    _
  $region25: #{transformer_encoder.6} parent=0 // pred_fallthru
    _
  // Predicated region
  $region26: #{transformer_encoder.6} parent=0 // pred_check
    _
  $region27: #{transformer_encoder.6} parent=0 // pred_check_branch
    %106 = sbr.rel (0) target = $region29
  $region28: #{transformer_encoder.6} parent=0 // pred_region
    _
  $region29: #{transformer_encoder.6} parent=0 // pred_fallthru
    _
  // Predicated region
  $region30: #{transformer_encoder.6} parent=0 // pred_check
    _
  $region31: #{transformer_encoder.6} parent=0 // pred_check_branch
    %108 = sbr.rel (0) target = $region33
  $region32: #{transformer_encoder.6} parent=0 // pred_region
    _
  $region33: #{transformer_encoder.6} parent=0 // pred_fallthru
    _
  // Predicated region
  $region34: #{transformer_encoder.6} parent=0 // pred_check
    _
  $region35: #{transformer_encoder.6} parent=0 // pred_check_branch
    %110 = sbr.rel (0) target = $region37
  $region36: #{transformer_encoder.6} parent=0 // pred_region
    _
  $region37: #{transformer_encoder.6} parent=0 // pred_fallthru
    _

// kernel: transformer_encoder.8
$region0: #{transformer_encoder.8}
  #allocation0 [shape = 'u32[]', space=smem, size = 0x4, offset = 0x4, fixed_abs, tag = 'smem constant byte address 0x4 - core index']
  #allocation1 [shape = 'u32[144,128]{1,0:T(1,128)}', space=vmem, size = 0x12000, scoped, tag = 'internal scratch']
  %s0 = inlined_call_operand.vmem [shape: f32[16,32], index: 0, kind: input, shape index: {}]
  %s1 = inlined_call_operand.vmem [shape: f32[16,32], index: 1, kind: input, shape index: {}]
  %s2 = inlined_call_operand.vmem [shape: f32[32,32], index: 2, kind: input, shape index: {}]
  %s3 = inlined_call_operand.vmem [shape: f32[1,32], index: 3, kind: input, shape index: {}]
  %s4 = inlined_call_operand.vmem [shape: f32[1,32], index: 4, kind: input, shape index: {}]
  %s5 = inlined_call_operand.vmem [shape: f32[1,32], index: 5, kind: input, shape index: {}]
  %s6 = inlined_call_operand.vmem [shape: f32[32,64], index: 6, kind: input, shape index: {}]
  %s7 = inlined_call_operand.vmem [shape: f32[1,64], index: 7, kind: input, shape index: {}]
  %s8 = inlined_call_operand.vmem [shape: f32[64,32], index: 8, kind: input, shape index: {}]
  %s9 = inlined_call_operand.vmem [shape: f32[1,32], index: 9, kind: input, shape index: {}]
  %s10 = inlined_call_operand.vmem [shape: f32[1,32], index: 10, kind: input, shape index: {}]
  %s11 = inlined_call_operand.vmem [shape: f32[1,32], index: 11, kind: input, shape index: {}]
  %s12 = inlined_call_operand.vmem [shape: f32[16,32], index: 12, kind: output, shape index: {}]
  %s13 = sld [smem:[#allocation0]]
  $region58: #{transformer_encoder.8} parent=0
    _
  %s15 = ssub.s32 1, %s13
  %s16 = scalar_select 0, %s15, %s13
  // Predicated region
  $region2: #{transformer_encoder.8} parent=0 // pred_check
    _
  $region3: #{transformer_encoder.8} parent=0 // pred_check_branch
    %18 = sbr.rel (0) target = $region5
  $region4: #{transformer_encoder.8} parent=0 // pred_region
    _
  $region5: #{transformer_encoder.8} parent=0 // pred_fallthru
    _
  // Predicated region
  $region6: #{transformer_encoder.8} parent=0 // pred_check
    _
  $region7: #{transformer_encoder.8} parent=0 // pred_check_branch
    %20 = sbr.rel (0) target = $region9
  $region8: #{transformer_encoder.8} parent=0 // pred_region
    _
  $region9: #{transformer_encoder.8} parent=0 // pred_fallthru
    _
  // Predicated region
  $region10: #{transformer_encoder.8} parent=0 // pred_check
    _
  $region11: #{transformer_encoder.8} parent=0 // pred_check_branch
    %22 = sbr.rel (0) target = $region13
  $region12: #{transformer_encoder.8} parent=0 // pred_region
    _
  $region13: #{transformer_encoder.8} parent=0 // pred_fallthru
    _
  // Predicated region
  $region14: #{transformer_encoder.8} parent=0 // pred_check
    _
  $region15: #{transformer_encoder.8} parent=0 // pred_check_branch
    %24 = sbr.rel (0) target = $region17
  $region16: #{transformer_encoder.8} parent=0 // pred_region
    _
  $region17: #{transformer_encoder.8} parent=0 // pred_fallthru
    _
  // Predicated region
  $region18: #{transformer_encoder.8} parent=0 // pred_check
    _
  $region19: #{transformer_encoder.8} parent=0 // pred_check_branch
    %26 = sbr.rel (0) target = $region21
  $region20: #{transformer_encoder.8} parent=0 // pred_region
    _
  $region21: #{transformer_encoder.8} parent=0 // pred_fallthru
    _
  // Predicated region
  $region22: #{transformer_encoder.8} parent=0 // pred_check
    _
  $region23: #{transformer_encoder.8} parent=0 // pred_check_branch
    %28 = sbr.rel (0) target = $region25
  $region24: #{transformer_encoder.8} parent=0 // pred_region
    _
  $region25: #{transformer_encoder.8} parent=0 // pred_fallthru
    _
  // Predicated region
  $region26: #{transformer_encoder.8} parent=0 // pred_check
    _
  $region27: #{transformer_encoder.8} parent=0 // pred_check_branch
    %30 = sbr.rel (0) target = $region29
  $region28: #{transformer_encoder.8} parent=0 // pred_region
    _
  $region29: #{transformer_encoder.8} parent=0 // pred_fallthru
    _
  // Predicated region
  $region30: #{transformer_encoder.8} parent=0 // pred_check
    _
  $region31: #{transformer_encoder.8} parent=0 // pred_check_branch
    %32 = sbr.rel (0) target = $region33
  $region32: #{transformer_encoder.8} parent=0 // pred_region
    _
  $region33: #{transformer_encoder.8} parent=0 // pred_fallthru
    _
  // Predicated region
  $region34: #{transformer_encoder.8} parent=0 // pred_check
    _
  $region35: #{transformer_encoder.8} parent=0 // pred_check_branch
    %34 = sbr.rel (0) target = $region37
  $region36: #{transformer_encoder.8} parent=0 // pred_region
    _
  $region37: #{transformer_encoder.8} parent=0 // pred_fallthru
    _
  // Predicated region
  $region38: #{transformer_encoder.8} parent=0 // pred_check
    _
  $region39: #{transformer_encoder.8} parent=0 // pred_check_branch
    %36 = sbr.rel (0) target = $region41
  $region40: #{transformer_encoder.8} parent=0 // pred_region
    _
  $region41: #{transformer_encoder.8} parent=0 // pred_fallthru
    _
  // Predicated region
  $region42: #{transformer_encoder.8} parent=0 // pred_check
    _
  $region43: #{transformer_encoder.8} parent=0 // pred_check_branch
    %38 = sbr.rel (0) target = $region45
  $region44: #{transformer_encoder.8} parent=0 // pred_region
    _
  $region45: #{transformer_encoder.8} parent=0 // pred_fallthru
    _
  // Predicated region
  $region46: #{transformer_encoder.8} parent=0 // pred_check
    _
  $region47: #{transformer_encoder.8} parent=0 // pred_check_branch
    %40 = sbr.rel (0) target = $region49
  $region48: #{transformer_encoder.8} parent=0 // pred_region
    _
  $region49: #{transformer_encoder.8} parent=0 // pred_fallthru
    _
  %v42 = vld [vmem:[%s0] sm:$0xff]
  %v43 = vld [vmem:[%s0 + $0x8] sm:$0xff]
  %v44 = vld [vmem:[%s1] sm:$0xff]
  %v45 = vld [vmem:[%s1 + $0x8] sm:$0xff]
  %v46 = vpack.c.bf16 %v45, %v44
  %v47 = vld [vmem:[%s2] sm:$0xff]
  %v48 = vld [vmem:[%s2 + $0x8] sm:$0xff]
  %v49 = vld [vmem:[%s2 + $0x10] sm:$0xff]
  %v50 = vld [vmem:[%s2 + $0x18] sm:$0xff]
  %v51 = vpack.c.bf16 %v48, %v47
  %v52 = vpack.c.bf16 %v50, %v49
  %vm53 = vcmask 261120
  %v55 = vsel %vm53, %v46, 0
  %57 = vmatprep.subr.bf16.mxu0 0
  %58 = vmatpush1.bf16.msra.mxu0 %v51
  %59 = vmatprep.subr.bf16.mxu0 0
  %60 = vmatpush1.bf16.msra.mxu0 %v52
  %61 = vmatprep.subr.bf16.mxu0 0
  %62 = vmatpush1.bf16.msra.mxu0 0
  %63 = vmatprep.subr.bf16.mxu0 0
  %64 = vmatpush1.bf16.msra.mxu0 0
  %65 = vmatprep.subr.bf16.mxu0 0
  %66 = vmatpush1.bf16.msra.mxu0 0
  %67 = vmatprep.subr.bf16.mxu0 0
  %68 = vmatpush1.bf16.msra.mxu0 0
  %69 = vmatprep.subr.bf16.mxu0 0
  %70 = vmatpush1.bf16.msra.mxu0 0
  %71 = vmatprep.subr.bf16.mxu0 0
  %72 = vmatpush1.bf16.msra.mxu0 0
  %73 = vmatprep.subr.bf16.mxu0 0
  %74 = vmatpush1.bf16.msra.mxu0 0
  %75 = vmatprep.subr.bf16.mxu0 0
  %76 = vmatpush1.bf16.msra.mxu0 0
  %77 = vmatprep.subr.bf16.mxu0 0
  %78 = vmatpush1.bf16.msra.mxu0 0
  %79 = vmatprep.subr.bf16.mxu0 0
  %80 = vmatpush1.bf16.msra.mxu0 0
  %81 = vmatprep.subr.bf16.mxu0 0
  %82 = vmatpush1.bf16.msra.mxu0 0
  %83 = vmatprep.subr.bf16.mxu0 0
  %84 = vmatpush1.bf16.msra.mxu0 0
  %85 = vmatprep.subr.bf16.mxu0 0
  %86 = vmatpush1.bf16.msra.mxu0 0
  %87 = vmatprep.subr.bf16.mxu0 0
  %88 = vmatpush1.bf16.msra.mxu0 0
  %89 = vmatprep.mubr.bf16.mxu0 0
  %90 = vmatmul.mubr.bf16.gmra.mrb[0].mxu0 %v55
  %v91 = vpop.f32.mrb[0].mxu0
  %v92 = vadd.f32 0.0, %v91
  %v93 = vpop.f32.mrb[0].mxu0
  %v94 = vpop.f32.mrb[0].mxu0
  %v95 = vadd.f32 0.0, %v94
  %v96 = vpop.f32.mrb[0].mxu0
  %97 = vdwg.mxu0
  %v98 = vadd.f32 %v42, %v92
  %v99 = vadd.f32 %v43, %v95
  %v100 = vld [vmem:[%s3] sm:$0x1]
  %v102 = vlaneseq
  %v103 = vshrl.u32 %v102, 7
  %v104 = vsub.s32 0, %v103
  %v105 = vrot.slane %v100, %v104
  %v107 = vadd.f32 %v98, %v105
  %v108 = vadd.f32 %v99, %v105
  %v109 = vld [vmem:[%s4] sm:$0x1]
  %v110 = vld [vmem:[%s5] sm:$0x1]
  %v111 = vsel %vm53, %v107, 0.0
  %112 = vadd.xlane.f32.xlu0 %v111
  %v113 = vpop.xlane.xlu0 %112
  %v114 = vsel %vm53, %v108, 0.0
  %115 = vadd.xlane.f32.xlu0 %v114
  %v116 = vpop.xlane.xlu0 %115
  %v117 = vrcp.pop 32.0
  %v118 = vmul.f32 %v113, %v117
  %v119 = vmul.f32 %v116, %v117
  %v120 = vsub.f32 %v107, %v118
  %v121 = vsub.f32 %v108, %v119
  %v122 = vmul.f32 %v120, %v120
  %v123 = vmul.f32 %v121, %v121
  %v124 = vsel %vm53, %v122, 0.0
  %125 = vadd.xlane.f32.xlu0 %v124
  %v126 = vpop.xlane.xlu0 %125
  %v127 = vsel %vm53, %v123, 0.0
  %128 = vadd.xlane.f32.xlu0 %v127
  %v129 = vpop.xlane.xlu0 %128
  %v130 = vmul.f32 %v126, %v117
  %v131 = vmul.f32 %v129, %v117
  %v132 = vadd.f32 %v130, 1e-05
  %v133 = vadd.f32 %v131, 1e-05
  %v134 = vrsqrt.pop %v132
  %v135 = vrsqrt.pop %v133
  %v136 = vmul.f32 %v120, %v134
  %v137 = vmul.f32 %v121, %v135
  %v139 = vlaneseq
  %v140 = vshrl.u32 %v139, 7
  %v141 = vsub.s32 0, %v140
  %v142 = vrot.slane %v109, %v141
  %v144 = vmul.f32 %v136, %v142
  %v145 = vmul.f32 %v137, %v142
  %v147 = vlaneseq
  %v148 = vshrl.u32 %v147, 7
  %v149 = vsub.s32 0, %v148
  %v150 = vrot.slane %v110, %v149
  %v152 = vadd.f32 %v144, %v150
  %v153 = vadd.f32 %v145, %v150
  %v154 = vpack.c.bf16 %v153, %v152
  %v155 = vld [vmem:[%s6] sm:$0xff]
  %v156 = vld [vmem:[%s6 + $0x8] sm:$0xff]
  %v157 = vld [vmem:[%s6 + $0x10] sm:$0xff]
  %v158 = vld [vmem:[%s6 + $0x18] sm:$0xff]
  %v159 = vpack.c.bf16 %v156, %v155
  %v160 = vpack.c.bf16 %v158, %v157
  %v161 = vld [vmem:[%s7] sm:$0x1]
  %v163 = vlaneseq
  %v164 = vshrl.u32 %v163, 7
  %v165 = vsub.s32 0, %v164
  %v166 = vrot.slane %v161, %v165
  %v169 = vsel %vm53, %v154, 0
  %171 = vmatprep.subr.bf16.mxu0 0
  %172 = vmatpush1.bf16.msra.mxu0 %v159
  %173 = vmatprep.subr.bf16.mxu0 0
  %174 = vmatpush1.bf16.msra.mxu0 %v160
  %175 = vmatprep.subr.bf16.mxu0 0
  %176 = vmatpush1.bf16.msra.mxu0 0
  %177 = vmatprep.subr.bf16.mxu0 0
  %178 = vmatpush1.bf16.msra.mxu0 0
  %179 = vmatprep.subr.bf16.mxu0 0
  %180 = vmatpush1.bf16.msra.mxu0 0
  %181 = vmatprep.subr.bf16.mxu0 0
  %182 = vmatpush1.bf16.msra.mxu0 0
  %183 = vmatprep.subr.bf16.mxu0 0
  %184 = vmatpush1.bf16.msra.mxu0 0
  %185 = vmatprep.subr.bf16.mxu0 0
  %186 = vmatpush1.bf16.msra.mxu0 0
  %187 = vmatprep.subr.bf16.mxu0 0
  %188 = vmatpush1.bf16.msra.mxu0 0
  %189 = vmatprep.subr.bf16.mxu0 0
  %190 = vmatpush1.bf16.msra.mxu0 0
  %191 = vmatprep.subr.bf16.mxu0 0
  %192 = vmatpush1.bf16.msra.mxu0 0
  %193 = vmatprep.subr.bf16.mxu0 0
  %194 = vmatpush1.bf16.msra.mxu0 0
  %195 = vmatprep.subr.bf16.mxu0 0
  %196 = vmatpush1.bf16.msra.mxu0 0
  %197 = vmatprep.subr.bf16.mxu0 0
  %198 = vmatpush1.bf16.msra.mxu0 0
  %199 = vmatprep.subr.bf16.mxu0 0
  %200 = vmatpush1.bf16.msra.mxu0 0
  %201 = vmatprep.subr.bf16.mxu0 0
  %202 = vmatpush1.bf16.msra.mxu0 0
  %203 = vmatprep.mubr.bf16.mxu0 0
  %204 = vmatmul.mubr.bf16.gmra.mrb[0].mxu0 %v169
  %v205 = vpop.f32.mrb[0].mxu0
  %v206 = vadd.f32 %v166, %v205
  %v207 = vpop.f32.mrb[0].mxu0
  %v208 = vpop.f32.mrb[0].mxu0
  %v209 = vadd.f32 %v166, %v208
  %v210 = vpop.f32.mrb[0].mxu0
  %211 = vdwg.mxu0
  %v212 = vmul.f32 %v206, 0.5
  %v213 = vmul.f32 %v209, 0.5
  %v214 = vmul.f32 %v206, 0.70710677
  %v215 = vmul.f32 %v209, 0.70710677
  %v216 = verf.f32.pop %v214
  %v217 = verf.f32.pop %v215
  %v218 = vadd.f32 %v216, 1.0
  %v219 = vadd.f32 %v217, 1.0
  %v220 = vmul.f32 %v212, %v218
  %v221 = vmul.f32 %v213, %v219
  %v222 = vpack.c.bf16 %v221, %v220
  %v223 = vld [vmem:[%s8] sm:$0xff]
  %v224 = vld [vmem:[%s8 + $0x8] sm:$0xff]
  %v225 = vld [vmem:[%s8 + $0x10] sm:$0xff]
  %v226 = vld [vmem:[%s8 + $0x18] sm:$0xff]
  %v227 = vld [vmem:[%s8 + $0x20] sm:$0xff]
  %v228 = vld [vmem:[%s8 + $0x28] sm:$0xff]
  %v229 = vld [vmem:[%s8 + $0x30] sm:$0xff]
  %v230 = vld [vmem:[%s8 + $0x38] sm:$0xff]
  %v231 = vpack.c.bf16 %v224, %v223
  %v232 = vpack.c.bf16 %v226, %v225
  %v233 = vpack.c.bf16 %v228, %v227
  %v234 = vpack.c.bf16 %v230, %v229
  %v235 = vld [vmem:[%s9] sm:$0x1]
  %v237 = vlaneseq
  %v238 = vshrl.u32 %v237, 7
  %v239 = vsub.s32 0, %v238
  %v240 = vrot.slane %v235, %v239
  %vm242 = vcmask 523264
  %v244 = vsel %vm242, %v222, 0
  %246 = vmatprep.subr.bf16.mxu0 0
  %247 = vmatpush1.bf16.msra.mxu0 %v231
  %248 = vmatprep.subr.bf16.mxu0 0
  %249 = vmatpush1.bf16.msra.mxu0 %v232
  %250 = vmatprep.subr.bf16.mxu0 0
  %251 = vmatpush1.bf16.msra.mxu0 %v233
  %252 = vmatprep.subr.bf16.mxu0 0
  %253 = vmatpush1.bf16.msra.mxu0 %v234
  %254 = vmatprep.subr.bf16.mxu0 0
  %255 = vmatpush1.bf16.msra.mxu0 0
  %256 = vmatprep.subr.bf16.mxu0 0
  %257 = vmatpush1.bf16.msra.mxu0 0
  %258 = vmatprep.subr.bf16.mxu0 0
  %259 = vmatpush1.bf16.msra.mxu0 0
  %260 = vmatprep.subr.bf16.mxu0 0
  %261 = vmatpush1.bf16.msra.mxu0 0
  %262 = vmatprep.subr.bf16.mxu0 0
  %263 = vmatpush1.bf16.msra.mxu0 0
  %264 = vmatprep.subr.bf16.mxu0 0
  %265 = vmatpush1.bf16.msra.mxu0 0
  %266 = vmatprep.subr.bf16.mxu0 0
  %267 = vmatpush1.bf16.msra.mxu0 0
  %268 = vmatprep.subr.bf16.mxu0 0
  %269 = vmatpush1.bf16.msra.mxu0 0
  %270 = vmatprep.subr.bf16.mxu0 0
  %271 = vmatpush1.bf16.msra.mxu0 0
  %272 = vmatprep.subr.bf16.mxu0 0
  %273 = vmatpush1.bf16.msra.mxu0 0
  %274 = vmatprep.subr.bf16.mxu0 0
  %275 = vmatpush1.bf16.msra.mxu0 0
  %276 = vmatprep.subr.bf16.mxu0 0
  %277 = vmatpush1.bf16.msra.mxu0 0
  %278 = vmatprep.mubr.bf16.mxu0 0
  %279 = vmatmul.mubr.bf16.gmra.mrb[0].mxu0 %v244
  %v280 = vpop.f32.mrb[0].mxu0
  %v281 = vadd.f32 %v240, %v280
  %v282 = vpop.f32.mrb[0].mxu0
  %v283 = vpop.f32.mrb[0].mxu0
  %v284 = vadd.f32 %v240, %v283
  %v285 = vpop.f32.mrb[0].mxu0
  %286 = vdwg.mxu0
  %v287 = vadd.f32 %v152, %v281
  %v288 = vadd.f32 %v153, %v284
  %v289 = vld [vmem:[%s10] sm:$0x1]
  %v290 = vld [vmem:[%s11] sm:$0x1]
  %v291 = vsel %vm53, %v287, 0.0
  %292 = vadd.xlane.f32.xlu0 %v291
  %v293 = vpop.xlane.xlu0 %292
  %v294 = vsel %vm53, %v288, 0.0
  %295 = vadd.xlane.f32.xlu0 %v294
  %v296 = vpop.xlane.xlu0 %295
  %v297 = vmul.f32 %v293, %v117
  %v298 = vmul.f32 %v296, %v117
  %v299 = vsub.f32 %v287, %v297
  %v300 = vsub.f32 %v288, %v298
  %v301 = vmul.f32 %v299, %v299
  %v302 = vmul.f32 %v300, %v300
  %v303 = vsel %vm53, %v301, 0.0
  %304 = vadd.xlane.f32.xlu0 %v303
  %v305 = vpop.xlane.xlu0 %304
  %v306 = vsel %vm53, %v302, 0.0
  %307 = vadd.xlane.f32.xlu0 %v306
  %v308 = vpop.xlane.xlu0 %307
  %v309 = vmul.f32 %v305, %v117
  %v310 = vmul.f32 %v308, %v117
  %v311 = vadd.f32 %v309, 1e-05
  %v312 = vadd.f32 %v310, 1e-05
  %v313 = vrsqrt.pop %v311
  %v314 = vrsqrt.pop %v312
  %v315 = vmul.f32 %v299, %v313
  %v316 = vmul.f32 %v300, %v314
  %v318 = vlaneseq
  %v319 = vshrl.u32 %v318, 7
  %v320 = vsub.s32 0, %v319
  %v321 = vrot.slane %v289, %v320
  %v323 = vmul.f32 %v315, %v321
  %v324 = vmul.f32 %v316, %v321
  %v326 = vlaneseq
  %v327 = vshrl.u32 %v326, 7
  %v328 = vsub.s32 0, %v327
  %v329 = vrot.slane %v290, %v328
  %v331 = vadd.f32 %v323, %v329
  %v332 = vadd.f32 %v324, %v329
  %333 = vst.msk [vmem:[%s12] sm:$0xff] %vm53, %v331
  %334 = vst.msk [vmem:[%s12 + $0x8] sm:$0xff] %vm53, %v332
  // Predicated region
  $region50: #{transformer_encoder.8} parent=0 // pred_check
    _
  $region51: #{transformer_encoder.8} parent=0 // pred_check_branch
    %336 = sbr.rel (0) target = $region53
  $region52: #{transformer_encoder.8} parent=0 // pred_region
    _
  $region53: #{transformer_encoder.8} parent=0 // pred_fallthru
    _
  // Predicated region
  $region54: #{transformer_encoder.8} parent=0 // pred_check
    _
  $region55: #{transformer_encoder.8} parent=0 // pred_check_branch
    %338 = sbr.rel (0) target = $region57
  $region56: #{transformer_encoder.8} parent=0 // pred_region
    _
  $region57: #{transformer_encoder.8} parent=0 // pred_fallthru
    _

// kernel: transformer_encoder.11
$region0: #{transformer_encoder.11}
  #allocation0 [shape = 'u32[]', space=smem, size = 0x4, offset = 0x4, fixed_abs, tag = 'smem constant byte address 0x4 - core index']
  #allocation1 [shape = 'u32[144,128]{1,0:T(1,128)}', space=vmem, size = 0x12000, scoped, tag = 'internal scratch']
  %s0 = inlined_call_operand.vmem [shape: f32[16,32], index: 0, kind: input, shape index: {}]
  %s1 = inlined_call_operand.vmem [shape: f32[16,32], index: 1, kind: input, shape index: {}]
  %s2 = inlined_call_operand.vmem [shape: f32[32,32], index: 2, kind: input, shape index: {}]
  %s3 = inlined_call_operand.vmem [shape: f32[1,32], index: 3, kind: input, shape index: {}]
  %s4 = inlined_call_operand.vmem [shape: f32[1,32], index: 4, kind: input, shape index: {}]
  %s5 = inlined_call_operand.vmem [shape: f32[1,32], index: 5, kind: input, shape index: {}]
  %s6 = inlined_call_operand.vmem [shape: f32[32,64], index: 6, kind: input, shape index: {}]
  %s7 = inlined_call_operand.vmem [shape: f32[1,64], index: 7, kind: input, shape index: {}]
  %s8 = inlined_call_operand.vmem [shape: f32[64,32], index: 8, kind: input, shape index: {}]
  %s9 = inlined_call_operand.vmem [shape: f32[1,32], index: 9, kind: input, shape index: {}]
  %s10 = inlined_call_operand.vmem [shape: f32[1,32], index: 10, kind: input, shape index: {}]
  %s11 = inlined_call_operand.vmem [shape: f32[1,32], index: 11, kind: input, shape index: {}]
  %s12 = inlined_call_operand.hbm [shape: f32[16,32], index: 12, kind: output, shape index: {}]
  %s13 = sld [smem:[#allocation0]]
  $region58: #{transformer_encoder.11} parent=0
    _
  %s15 = ssub.s32 1, %s13
  %s16 = scalar_select 0, %s15, %s13
  $region1: #{transformer_encoder.11} parent=0
    #allocation2 [shape = 'u8[8192]{0}', space=vmem, size = 0x2000, scoped, tag = 'output window, operand 0, single buffered']
    #allocation3 [shape = 's32[1]{0}', space=sflag, size = 0x4, scoped, tag = 'scoped memory for transformer_encoder.11']
    %17 = vsyncpa [#allocation3], 0
    // Predicated region
    $region2: #{transformer_encoder.11} parent=1 // pred_check
      _
    $region3: #{transformer_encoder.11} parent=1 // pred_check_branch
      %19 = sbr.rel (0) target = $region5
    $region4: #{transformer_encoder.11} parent=1 // pred_region
      _
    $region5: #{transformer_encoder.11} parent=1 // pred_fallthru
      _
    // Predicated region
    $region6: #{transformer_encoder.11} parent=1 // pred_check
      _
    $region7: #{transformer_encoder.11} parent=1 // pred_check_branch
      %21 = sbr.rel (0) target = $region9
    $region8: #{transformer_encoder.11} parent=1 // pred_region
      _
    $region9: #{transformer_encoder.11} parent=1 // pred_fallthru
      _
    // Predicated region
    $region10: #{transformer_encoder.11} parent=1 // pred_check
      _
    $region11: #{transformer_encoder.11} parent=1 // pred_check_branch
      %23 = sbr.rel (0) target = $region13
    $region12: #{transformer_encoder.11} parent=1 // pred_region
      _
    $region13: #{transformer_encoder.11} parent=1 // pred_fallthru
      _
    // Predicated region
    $region14: #{transformer_encoder.11} parent=1 // pred_check
      _
    $region15: #{transformer_encoder.11} parent=1 // pred_check_branch
      %25 = sbr.rel (0) target = $region17
    $region16: #{transformer_encoder.11} parent=1 // pred_region
      _
    $region17: #{transformer_encoder.11} parent=1 // pred_fallthru
      _
    // Predicated region
    $region18: #{transformer_encoder.11} parent=1 // pred_check
      _
    $region19: #{transformer_encoder.11} parent=1 // pred_check_branch
      %27 = sbr.rel (0) target = $region21
    $region20: #{transformer_encoder.11} parent=1 // pred_region
      _
    $region21: #{transformer_encoder.11} parent=1 // pred_fallthru
      _
    // Predicated region
    $region22: #{transformer_encoder.11} parent=1 // pred_check
      _
    $region23: #{transformer_encoder.11} parent=1 // pred_check_branch
      %29 = sbr.rel (0) target = $region25
    $region24: #{transformer_encoder.11} parent=1 // pred_region
      _
    $region25: #{transformer_encoder.11} parent=1 // pred_fallthru
      _
    // Predicated region
    $region26: #{transformer_encoder.11} parent=1 // pred_check
      _
    $region27: #{transformer_encoder.11} parent=1 // pred_check_branch
      %31 = sbr.rel (0) target = $region29
    $region28: #{transformer_encoder.11} parent=1 // pred_region
      _
    $region29: #{transformer_encoder.11} parent=1 // pred_fallthru
      _
    // Predicated region
    $region30: #{transformer_encoder.11} parent=1 // pred_check
      _
    $region31: #{transformer_encoder.11} parent=1 // pred_check_branch
      %33 = sbr.rel (0) target = $region33
    $region32: #{transformer_encoder.11} parent=1 // pred_region
      _
    $region33: #{transformer_encoder.11} parent=1 // pred_fallthru
      _
    // Predicated region
    $region34: #{transformer_encoder.11} parent=1 // pred_check
      _
    $region35: #{transformer_encoder.11} parent=1 // pred_check_branch
      %35 = sbr.rel (0) target = $region37
    $region36: #{transformer_encoder.11} parent=1 // pred_region
      _
    $region37: #{transformer_encoder.11} parent=1 // pred_fallthru
      _
    // Predicated region
    $region38: #{transformer_encoder.11} parent=1 // pred_check
      _
    $region39: #{transformer_encoder.11} parent=1 // pred_check_branch
      %37 = sbr.rel (0) target = $region41
    $region40: #{transformer_encoder.11} parent=1 // pred_region
      _
    $region41: #{transformer_encoder.11} parent=1 // pred_fallthru
      _
    // Predicated region
    $region42: #{transformer_encoder.11} parent=1 // pred_check
      _
    $region43: #{transformer_encoder.11} parent=1 // pred_check_branch
      %39 = sbr.rel (0) target = $region45
    $region44: #{transformer_encoder.11} parent=1 // pred_region
      _
    $region45: #{transformer_encoder.11} parent=1 // pred_fallthru
      _
    // Predicated region
    $region46: #{transformer_encoder.11} parent=1 // pred_check
      _
    $region47: #{transformer_encoder.11} parent=1 // pred_check_branch
      %41 = sbr.rel (0) target = $region49
    $region48: #{transformer_encoder.11} parent=1 // pred_region
      _
    $region49: #{transformer_encoder.11} parent=1 // pred_fallthru
      _
    %v43 = vld [vmem:[%s0] sm:$0xff]
    %v44 = vld [vmem:[%s0 + $0x8] sm:$0xff]
    %v45 = vld [vmem:[%s1] sm:$0xff]
    %v46 = vld [vmem:[%s1 + $0x8] sm:$0xff]
    %v47 = vpack.c.bf16 %v46, %v45
    %v48 = vld [vmem:[%s2] sm:$0xff]
    %v49 = vld [vmem:[%s2 + $0x8] sm:$0xff]
    %v50 = vld [vmem:[%s2 + $0x10] sm:$0xff]
    %v51 = vld [vmem:[%s2 + $0x18] sm:$0xff]
    %v52 = vpack.c.bf16 %v49, %v48
    %v53 = vpack.c.bf16 %v51, %v50
    %vm54 = vcmask 261120
    %v56 = vsel %vm54, %v47, 0
    %58 = vmatprep.subr.bf16.mxu0 0
    %59 = vmatpush1.bf16.msra.mxu0 %v52
    %60 = vmatprep.subr.bf16.mxu0 0
    %61 = vmatpush1.bf16.msra.mxu0 %v53
    %62 = vmatprep.subr.bf16.mxu0 0
    %63 = vmatpush1.bf16.msra.mxu0 0
    %64 = vmatprep.subr.bf16.mxu0 0
    %65 = vmatpush1.bf16.msra.mxu0 0
    %66 = vmatprep.subr.bf16.mxu0 0
    %67 = vmatpush1.bf16.msra.mxu0 0
    %68 = vmatprep.subr.bf16.mxu0 0
    %69 = vmatpush1.bf16.msra.mxu0 0
    %70 = vmatprep.subr.bf16.mxu0 0
    %71 = vmatpush1.bf16.msra.mxu0 0
    %72 = vmatprep.subr.bf16.mxu0 0
    %73 = vmatpush1.bf16.msra.mxu0 0
    %74 = vmatprep.subr.bf16.mxu0 0
    %75 = vmatpush1.bf16.msra.mxu0 0
    %76 = vmatprep.subr.bf16.mxu0 0
    %77 = vmatpush1.bf16.msra.mxu0 0
    %78 = vmatprep.subr.bf16.mxu0 0
    %79 = vmatpush1.bf16.msra.mxu0 0
    %80 = vmatprep.subr.bf16.mxu0 0
    %81 = vmatpush1.bf16.msra.mxu0 0
    %82 = vmatprep.subr.bf16.mxu0 0
    %83 = vmatpush1.bf16.msra.mxu0 0
    %84 = vmatprep.subr.bf16.mxu0 0
    %85 = vmatpush1.bf16.msra.mxu0 0
    %86 = vmatprep.subr.bf16.mxu0 0
    %87 = vmatpush1.bf16.msra.mxu0 0
    %88 = vmatprep.subr.bf16.mxu0 0
    %89 = vmatpush1.bf16.msra.mxu0 0
    %90 = vmatprep.mubr.bf16.mxu0 0
    %91 = vmatmul.mubr.bf16.gmra.mrb[0].mxu0 %v56
    %v92 = vpop.f32.mrb[0].mxu0
    %v93 = vadd.f32 0.0, %v92
    %v94 = vpop.f32.mrb[0].mxu0
    %v95 = vpop.f32.mrb[0].mxu0
    %v96 = vadd.f32 0.0, %v95
    %v97 = vpop.f32.mrb[0].mxu0
    %98 = vdwg.mxu0
    %v99 = vadd.f32 %v43, %v93
    %v100 = vadd.f32 %v44, %v96
    %v101 = vld [vmem:[%s3] sm:$0x1]
    %v103 = vlaneseq
    %v104 = vshrl.u32 %v103, 7
    %v105 = vsub.s32 0, %v104
    %v106 = vrot.slane %v101, %v105
    %v108 = vadd.f32 %v99, %v106
    %v109 = vadd.f32 %v100, %v106
    %v110 = vld [vmem:[%s4] sm:$0x1]
    %v111 = vld [vmem:[%s5] sm:$0x1]
    %v112 = vsel %vm54, %v108, 0.0
    %113 = vadd.xlane.f32.xlu0 %v112
    %v114 = vpop.xlane.xlu0 %113
    %v115 = vsel %vm54, %v109, 0.0
    %116 = vadd.xlane.f32.xlu0 %v115
    %v117 = vpop.xlane.xlu0 %116
    %v118 = vrcp.pop 32.0
    %v119 = vmul.f32 %v114, %v118
    %v120 = vmul.f32 %v117, %v118
    %v121 = vsub.f32 %v108, %v119
    %v122 = vsub.f32 %v109, %v120
    %v123 = vmul.f32 %v121, %v121
    %v124 = vmul.f32 %v122, %v122
    %v125 = vsel %vm54, %v123, 0.0
    %126 = vadd.xlane.f32.xlu0 %v125
    %v127 = vpop.xlane.xlu0 %126
    %v128 = vsel %vm54, %v124, 0.0
    %129 = vadd.xlane.f32.xlu0 %v128
    %v130 = vpop.xlane.xlu0 %129
    %v131 = vmul.f32 %v127, %v118
    %v132 = vmul.f32 %v130, %v118
    %v133 = vadd.f32 %v131, 1e-05
    %v134 = vadd.f32 %v132, 1e-05
    %v135 = vrsqrt.pop %v133
    %v136 = vrsqrt.pop %v134
    %v137 = vmul.f32 %v121, %v135
    %v138 = vmul.f32 %v122, %v136
    %v140 = vlaneseq
    %v141 = vshrl.u32 %v140, 7
    %v142 = vsub.s32 0, %v141
    %v143 = vrot.slane %v110, %v142
    %v145 = vmul.f32 %v137, %v143
    %v146 = vmul.f32 %v138, %v143
    %v148 = vlaneseq
    %v149 = vshrl.u32 %v148, 7
    %v150 = vsub.s32 0, %v149
    %v151 = vrot.slane %v111, %v150
    %v153 = vadd.f32 %v145, %v151
    %v154 = vadd.f32 %v146, %v151
    %v155 = vpack.c.bf16 %v154, %v153
    %v156 = vld [vmem:[%s6] sm:$0xff]
    %v157 = vld [vmem:[%s6 + $0x8] sm:$0xff]
    %v158 = vld [vmem:[%s6 + $0x10] sm:$0xff]
    %v159 = vld [vmem:[%s6 + $0x18] sm:$0xff]
    %v160 = vpack.c.bf16 %v157, %v156
    %v161 = vpack.c.bf16 %v159, %v158
    %v162 = vld [vmem:[%s7] sm:$0x1]
    %v164 = vlaneseq
    %v165 = vshrl.u32 %v164, 7
    %v166 = vsub.s32 0, %v165
    %v167 = vrot.slane %v162, %v166
    %v170 = vsel %vm54, %v155, 0
    %172 = vmatprep.subr.bf16.mxu0 0
    %173 = vmatpush1.bf16.msra.mxu0 %v160
    %174 = vmatprep.subr.bf16.mxu0 0
    %175 = vmatpush1.bf16.msra.mxu0 %v161
    %176 = vmatprep.subr.bf16.mxu0 0
    %177 = vmatpush1.bf16.msra.mxu0 0
    %178 = vmatprep.subr.bf16.mxu0 0
    %179 = vmatpush1.bf16.msra.mxu0 0
    %180 = vmatprep.subr.bf16.mxu0 0
    %181 = vmatpush1.bf16.msra.mxu0 0
    %182 = vmatprep.subr.bf16.mxu0 0
    %183 = vmatpush1.bf16.msra.mxu0 0
    %184 = vmatprep.subr.bf16.mxu0 0
    %185 = vmatpush1.bf16.msra.mxu0 0
    %186 = vmatprep.subr.bf16.mxu0 0
    %187 = vmatpush1.bf16.msra.mxu0 0
    %188 = vmatprep.subr.bf16.mxu0 0
    %189 = vmatpush1.bf16.msra.mxu0 0
    %190 = vmatprep.subr.bf16.mxu0 0
    %191 = vmatpush1.bf16.msra.mxu0 0
    %192 = vmatprep.subr.bf16.mxu0 0
    %193 = vmatpush1.bf16.msra.mxu0 0
    %194 = vmatprep.subr.bf16.mxu0 0
    %195 = vmatpush1.bf16.msra.mxu0 0
    %196 = vmatprep.subr.bf16.mxu0 0
    %197 = vmatpush1.bf16.msra.mxu0 0
    %198 = vmatprep.subr.bf16.mxu0 0
    %199 = vmatpush1.bf16.msra.mxu0 0
    %200 = vmatprep.subr.bf16.mxu0 0
    %201 = vmatpush1.bf16.msra.mxu0 0
    %202 = vmatprep.subr.bf16.mxu0 0
    %203 = vmatpush1.bf16.msra.mxu0 0
    %204 = vmatprep.mubr.bf16.mxu0 0
    %205 = vmatmul.mubr.bf16.gmra.mrb[0].mxu0 %v170
    %v206 = vpop.f32.mrb[0].mxu0
    %v207 = vadd.f32 %v167, %v206
    %v208 = vpop.f32.mrb[0].mxu0
    %v209 = vpop.f32.mrb[0].mxu0
    %v210 = vadd.f32 %v167, %v209
    %v211 = vpop.f32.mrb[0].mxu0
    %212 = vdwg.mxu0
    %v213 = vmul.f32 %v207, 0.5
    %v214 = vmul.f32 %v210, 0.5
    %v215 = vmul.f32 %v207, 0.70710677
    %v216 = vmul.f32 %v210, 0.70710677
    %v217 = verf.f32.pop %v215
    %v218 = verf.f32.pop %v216
    %v219 = vadd.f32 %v217, 1.0
    %v220 = vadd.f32 %v218, 1.0
    %v221 = vmul.f32 %v213, %v219
    %v222 = vmul.f32 %v214, %v220
    %v223 = vpack.c.bf16 %v222, %v221
    %v224 = vld [vmem:[%s8] sm:$0xff]
    %v225 = vld [vmem:[%s8 + $0x8] sm:$0xff]
    %v226 = vld [vmem:[%s8 + $0x10] sm:$0xff]
    %v227 = vld [vmem:[%s8 + $0x18] sm:$0xff]
    %v228 = vld [vmem:[%s8 + $0x20] sm:$0xff]
    %v229 = vld [vmem:[%s8 + $0x28] sm:$0xff]
    %v230 = vld [vmem:[%s8 + $0x30] sm:$0xff]
    %v231 = vld [vmem:[%s8 + $0x38] sm:$0xff]
    %v232 = vpack.c.bf16 %v225, %v224
    %v233 = vpack.c.bf16 %v227, %v226
    %v234 = vpack.c.bf16 %v229, %v228
    %v235 = vpack.c.bf16 %v231, %v230
    %v236 = vld [vmem:[%s9] sm:$0x1]
    %v238 = vlaneseq
    %v239 = vshrl.u32 %v238, 7
    %v240 = vsub.s32 0, %v239
    %v241 = vrot.slane %v236, %v240
    %vm243 = vcmask 523264
    %v245 = vsel %vm243, %v223, 0
    %247 = vmatprep.subr.bf16.mxu0 0
    %248 = vmatpush1.bf16.msra.mxu0 %v232
    %249 = vmatprep.subr.bf16.mxu0 0
    %250 = vmatpush1.bf16.msra.mxu0 %v233
    %251 = vmatprep.subr.bf16.mxu0 0
    %252 = vmatpush1.bf16.msra.mxu0 %v234
    %253 = vmatprep.subr.bf16.mxu0 0
    %254 = vmatpush1.bf16.msra.mxu0 %v235
    %255 = vmatprep.subr.bf16.mxu0 0
    %256 = vmatpush1.bf16.msra.mxu0 0
    %257 = vmatprep.subr.bf16.mxu0 0
    %258 = vmatpush1.bf16.msra.mxu0 0
    %259 = vmatprep.subr.bf16.mxu0 0
    %260 = vmatpush1.bf16.msra.mxu0 0
    %261 = vmatprep.subr.bf16.mxu0 0
    %262 = vmatpush1.bf16.msra.mxu0 0
    %263 = vmatprep.subr.bf16.mxu0 0
    %264 = vmatpush1.bf16.msra.mxu0 0
    %265 = vmatprep.subr.bf16.mxu0 0
    %266 = vmatpush1.bf16.msra.mxu0 0
    %267 = vmatprep.subr.bf16.mxu0 0
    %268 = vmatpush1.bf16.msra.mxu0 0
    %269 = vmatprep.subr.bf16.mxu0 0
    %270 = vmatpush1.bf16.msra.mxu0 0
    %271 = vmatprep.subr.bf16.mxu0 0
    %272 = vmatpush1.bf16.msra.mxu0 0
    %273 = vmatprep.subr.bf16.mxu0 0
    %274 = vmatpush1.bf16.msra.mxu0 0
    %275 = vmatprep.subr.bf16.mxu0 0
    %276 = vmatpush1.bf16.msra.mxu0 0
    %277 = vmatprep.subr.bf16.mxu0 0
    %278 = vmatpush1.bf16.msra.mxu0 0
    %279 = vmatprep.mubr.bf16.mxu0 0
    %280 = vmatmul.mubr.bf16.gmra.mrb[0].mxu0 %v245
    %v281 = vpop.f32.mrb[0].mxu0
    %v282 = vadd.f32 %v241, %v281
    %v283 = vpop.f32.mrb[0].mxu0
    %v284 = vpop.f32.mrb[0].mxu0
    %v285 = vadd.f32 %v241, %v284
    %v286 = vpop.f32.mrb[0].mxu0
    %287 = vdwg.mxu0
    %v288 = vadd.f32 %v153, %v282
    %v289 = vadd.f32 %v154, %v285
    %v290 = vld [vmem:[%s10] sm:$0x1]
    %v291 = vld [vmem:[%s11] sm:$0x1]
    %v292 = vsel %vm54, %v288, 0.0
    %293 = vadd.xlane.f32.xlu0 %v292
    %v294 = vpop.xlane.xlu0 %293
    %v295 = vsel %vm54, %v289, 0.0
    %296 = vadd.xlane.f32.xlu0 %v295
    %v297 = vpop.xlane.xlu0 %296
    %v298 = vmul.f32 %v294, %v118
    %v299 = vmul.f32 %v297, %v118
    %v300 = vsub.f32 %v288, %v298
    %v301 = vsub.f32 %v289, %v299
    %v302 = vmul.f32 %v300, %v300
    %v303 = vmul.f32 %v301, %v301
    %v304 = vsel %vm54, %v302, 0.0
    %305 = vadd.xlane.f32.xlu0 %v304
    %v306 = vpop.xlane.xlu0 %305
    %v307 = vsel %vm54, %v303, 0.0
    %308 = vadd.xlane.f32.xlu0 %v307
    %v309 = vpop.xlane.xlu0 %308
    %v310 = vmul.f32 %v306, %v118
    %v311 = vmul.f32 %v309, %v118
    %v312 = vadd.f32 %v310, 1e-05
    %v313 = vadd.f32 %v311, 1e-05
    %v314 = vrsqrt.pop %v312
    %v315 = vrsqrt.pop %v313
    %v316 = vmul.f32 %v300, %v314
    %v317 = vmul.f32 %v301, %v315
    %v319 = vlaneseq
    %v320 = vshrl.u32 %v319, 7
    %v321 = vsub.s32 0, %v320
    %v322 = vrot.slane %v290, %v321
    %v324 = vmul.f32 %v316, %v322
    %v325 = vmul.f32 %v317, %v322
    %v327 = vlaneseq
    %v328 = vshrl.u32 %v327, 7
    %v329 = vsub.s32 0, %v328
    %v330 = vrot.slane %v291, %v329
    %v332 = vadd.f32 %v324, %v330
    %v333 = vadd.f32 %v325, %v330
    %334 = vst.msk [vmem:[#allocation2] sm:$0xff] %vm54, %v332
    %335 = vst.msk [vmem:[#allocation2 + $0x8] sm:$0xff] %vm54, %v333
    // Predicated region
    $region50: #{transformer_encoder.11} parent=1 // pred_check
      _
    $region51: #{transformer_encoder.11} parent=1 // pred_check_branch
      %337 = sbr.rel (0) target = $region53
    $region52: #{transformer_encoder.11} parent=1 // pred_region
      %s339 = ssub.s32 256, 256
      %340 = vsyncadd [#allocation3], %s339
      %s341 = sshll.u32 [#allocation2], 4
      %s342 = int_to_ptr.vmem [resolvable:$true] %s341
      %347 = dma.vmem_to_hbm [thread:$0]  %s342, 256, %s12, [#allocation3], 128, 128, 8
    $region53: #{transformer_encoder.11} parent=1 // pred_fallthru
      _
    // Predicated region
    $region54: #{transformer_encoder.11} parent=1 // pred_check
      _
    $region55: #{transformer_encoder.11} parent=1 // pred_check_branch
      %349 = sbr.rel (0) target = $region57
    $region56: #{transformer_encoder.11} parent=1 // pred_region
      %350 = dma.done [#allocation3], 256
    $region57: #{transformer_encoder.11} parent=1 // pred_fallthru
      _
    %351 = vsyncpa [#allocation3], 1

// kernel: transformer_encoder.7
$region0: #{transformer_encoder.7}
  #allocation0 [shape = 'u32[]', space=smem, size = 0x4, offset = 0x4, fixed_abs, tag = 'smem constant byte address 0x4 - core index']
  #allocation1 [shape = 'u32[144,128]{1,0:T(1,128)}', space=vmem, size = 0x12000, scoped, tag = 'internal scratch']
  %s0 = inlined_call_operand.vmem [shape: f32[2,8,32], index: 0, kind: input, shape index: {}]
  %s1 = inlined_call_operand.vmem [shape: f32[2,8,32], index: 1, kind: input, shape index: {}]
  %s2 = inlined_call_operand.vmem [shape: f32[2,8,32], index: 2, kind: input, shape index: {}]
  %s3 = inlined_call_operand.vmem [shape: s8[2,8,8], index: 3, kind: input, shape index: {}]
  %s4 = inlined_call_operand.vmem [shape: f32[3,8], index: 4, kind: input, shape index: {}]
  %s5 = inlined_call_operand.vmem [shape: f32[3,8], index: 5, kind: input, shape index: {}]
  %s6 = inlined_call_operand.vmem [shape: s8[2,8,8], index: 6, kind: input, shape index: {}]
  %s7 = inlined_call_operand.vmem [shape: f32[2,8,32], index: 7, kind: output, shape index: {}]
  %s8 = sld [smem:[#allocation0]]
  $region61: #{transformer_encoder.7} parent=0
    _
  %s10 = ssub.s32 1, %s8
  %s11 = scalar_select 0, %s10, %s8
  loop: start=0, step=1, limit=4
  $region2: #{transformer_encoder.7} parent=0 // loop_pre_header
    _
  $region3: #{transformer_encoder.7} parent=0 // loop_header
    %s13 = sphi 0, %s17
    %p14 = scmp.ge.s32.totalorder %s13, 4
    %s20 = sphi 0, %s32
    %s21 = sphi 0, %s28
    %s22 = sphi 0, %s20
    %s23 = sphi 0, %s21
    %s24 = sphi 0, %s22
    %s25 = sphi 0, %s23
    %s37 = sphi 0, %s39
    %s40 = sphi 0, %s37
    %s41 = sphi 0, %s40
    %s57 = sphi 0, %s41
    %s63 = sphi 0, %s65
    %s66 = sphi 0, %s63
    %s67 = sphi 0, %s66
    %s83 = sphi 0, %s67
    %s89 = sphi 0, %s91
    %s92 = sphi 0, %s89
    %s93 = sphi 0, %s92
    %s109 = sphi 0, %s93
    %s117 = sphi 0, %s119
    %s120 = sphi 0, %s117
    %s121 = sphi 0, %s120
    %s137 = sphi 0, %s121
    %s141 = sphi 0, %s141
    %s143 = sphi 0, %s141
    %s144 = sphi 0, %s143
    %s158 = sphi 0, %s144
    %s162 = sphi 0, %s162
    %s164 = sphi 0, %s162
    %s165 = sphi 0, %s164
    %s179 = sphi 0, %s165
    %s187 = sphi 0, %s189
    %s190 = sphi 0, %s187
    %s191 = sphi 0, %s190
    %s207 = sphi 0, %s191
    %s215 = sphi 0, %s217
    %s218 = sphi 0, %s215
    %s219 = sphi 0, %s218
    %s235 = sphi 0, %s219
  $region4: #{transformer_encoder.7} parent=0 // loop_header_branch
    %16 = sbr.rel (%p14) target = $region8
  $region5: #{transformer_encoder.7} parent=0 // loop_body
    %s18 = ssub.s32 %s13, 1
    %s19 = ssub.s32 %s13, 2
    %s26 = sadd.s32 1, %s21
    %p27 = scmp.ge.s32.totalorder %s26, 1
    %s28 = scalar_select %p27, 0, %s26
    %s29 = sadd.s32 1, %s20
    %s30 = scalar_select %p27, %s29, %s20
    %p31 = scmp.ge.s32.totalorder %s30, 2
    %s32 = scalar_select %p31, 0, %s30
    %s33 = ssub.s32 %s20, %s32
    %s34 = ssub.s32 %s21, %s28
    %s35 = sor.u32 %s33, %s34
    %p36 = scmp.eq.s32.totalorder %s35, 0
    %s38 = sadd.s32 %s37, 1
    %s39 = scalar_select %p36, %s37, %s38
    %p42 = pneg %p36
    %p43 = scmp.eq.s32.totalorder %s13, 1
    %p44 = por %p42, %p43
    %p45 = scmp.ne.s32.totalorder %s37, %s40
    %p46 = scmp.eq.s32.totalorder %s13, 0
    %p47 = por %p45, %p46
    %p48 = scmp.ne.s32.totalorder %s37, %s40
    %p49 = scmp.eq.s32.totalorder %s18, 1
    %p50 = por %p48, %p49
    %p51 = scmp.ne.s32.totalorder %s40, %s41
    %p52 = scmp.eq.s32.totalorder %s18, 0
    %p53 = por %p51, %p52
    %p54 = scmp.ne.s32.totalorder %s40, %s41
    %p55 = scmp.eq.s32.totalorder %s19, 1
    %p56 = por %p54, %p55
    %p58 = scmp.ne.s32.totalorder %s41, %s57
    %p59 = scmp.eq.s32.totalorder %s19, 0
    %p60 = por %p58, %p59
    %s61 = ssub.s32 %s20, %s32
    %p62 = scmp.eq.s32.totalorder %s61, 0
    %s64 = sadd.s32 %s63, 1
    %s65 = scalar_select %p62, %s63, %s64
    %p68 = pneg %p62
    %p69 = scmp.eq.s32.totalorder %s13, 1
    %p70 = por %p68, %p69
    %p71 = scmp.ne.s32.totalorder %s63, %s66
    %p72 = scmp.eq.s32.totalorder %s13, 0
    %p73 = por %p71, %p72
    %p74 = scmp.ne.s32.totalorder %s63, %s66
    %p75 = scmp.eq.s32.totalorder %s18, 1
    %p76 = por %p74, %p75
    %p77 = scmp.ne.s32.totalorder %s66, %s67
    %p78 = scmp.eq.s32.totalorder %s18, 0
    %p79 = por %p77, %p78
    %p80 = scmp.ne.s32.totalorder %s66, %s67
    %p81 = scmp.eq.s32.totalorder %s19, 1
    %p82 = por %p80, %p81
    %p84 = scmp.ne.s32.totalorder %s67, %s83
    %p85 = scmp.eq.s32.totalorder %s19, 0
    %p86 = por %p84, %p85
    %s87 = ssub.s32 %s20, %s32
    %p88 = scmp.eq.s32.totalorder %s87, 0
    %s90 = sadd.s32 %s89, 1
    %s91 = scalar_select %p88, %s89, %s90
    %p94 = pneg %p88
    %p95 = scmp.eq.s32.totalorder %s13, 1
    %p96 = por %p94, %p95
    %p97 = scmp.ne.s32.totalorder %s89, %s92
    %p98 = scmp.eq.s32.totalorder %s13, 0
    %p99 = por %p97, %p98
    %p100 = scmp.ne.s32.totalorder %s89, %s92
    %p101 = scmp.eq.s32.totalorder %s18, 1
    %p102 = por %p100, %p101
    %p103 = scmp.ne.s32.totalorder %s92, %s93
    %p104 = scmp.eq.s32.totalorder %s18, 0
    %p105 = por %p103, %p104
    %p106 = scmp.ne.s32.totalorder %s92, %s93
    %p107 = scmp.eq.s32.totalorder %s19, 1
    %p108 = por %p106, %p107
    %p110 = scmp.ne.s32.totalorder %s93, %s109
    %p111 = scmp.eq.s32.totalorder %s19, 0
    %p112 = por %p110, %p111
    %s113 = ssub.s32 %s20, %s32
    %s114 = ssub.s32 %s21, %s28
    %s115 = sor.u32 %s113, %s114
    %p116 = scmp.eq.s32.totalorder %s115, 0
    %s118 = sadd.s32 %s117, 1
    %s119 = scalar_select %p116, %s117, %s118
    %p122 = pneg %p116
    %p123 = scmp.eq.s32.totalorder %s13, 1
    %p124 = por %p122, %p123
    %p125 = scmp.ne.s32.totalorder %s117, %s120
    %p126 = scmp.eq.s32.totalorder %s13, 0
    %p127 = por %p125, %p126
    %p128 = scmp.ne.s32.totalorder %s117, %s120
    %p129 = scmp.eq.s32.totalorder %s18, 1
    %p130 = por %p128, %p129
    %p131 = scmp.ne.s32.totalorder %s120, %s121
    %p132 = scmp.eq.s32.totalorder %s18, 0
    %p133 = por %p131, %p132
    %p134 = scmp.ne.s32.totalorder %s120, %s121
    %p135 = scmp.eq.s32.totalorder %s19, 1
    %p136 = por %p134, %p135
    %p138 = scmp.ne.s32.totalorder %s121, %s137
    %p139 = scmp.eq.s32.totalorder %s19, 0
    %p140 = por %p138, %p139
    %s142 = sadd.s32 %s141, 1
    %p145 = scmp.eq.s32.totalorder %s13, 1
    %p146 = scmp.ne.s32.totalorder %s141, %s143
    %p147 = scmp.eq.s32.totalorder %s13, 0
    %p148 = por %p146, %p147
    %p149 = scmp.ne.s32.totalorder %s141, %s143
    %p150 = scmp.eq.s32.totalorder %s18, 1
    %p151 = por %p149, %p150
    %p152 = scmp.ne.s32.totalorder %s143, %s144
    %p153 = scmp.eq.s32.totalorder %s18, 0
    %p154 = por %p152, %p153
    %p155 = scmp.ne.s32.totalorder %s143, %s144
    %p156 = scmp.eq.s32.totalorder %s19, 1
    %p157 = por %p155, %p156
    %p159 = scmp.ne.s32.totalorder %s144, %s158
    %p160 = scmp.eq.s32.totalorder %s19, 0
    %p161 = por %p159, %p160
    %s163 = sadd.s32 %s162, 1
    %p166 = scmp.eq.s32.totalorder %s13, 1
    %p167 = scmp.ne.s32.totalorder %s162, %s164
    %p168 = scmp.eq.s32.totalorder %s13, 0
    %p169 = por %p167, %p168
    %p170 = scmp.ne.s32.totalorder %s162, %s164
    %p171 = scmp.eq.s32.totalorder %s18, 1
    %p172 = por %p170, %p171
    %p173 = scmp.ne.s32.totalorder %s164, %s165
    %p174 = scmp.eq.s32.totalorder %s18, 0
    %p175 = por %p173, %p174
    %p176 = scmp.ne.s32.totalorder %s164, %s165
    %p177 = scmp.eq.s32.totalorder %s19, 1
    %p178 = por %p176, %p177
    %p180 = scmp.ne.s32.totalorder %s165, %s179
    %p181 = scmp.eq.s32.totalorder %s19, 0
    %p182 = por %p180, %p181
    %s183 = ssub.s32 %s20, %s32
    %s184 = ssub.s32 %s21, %s28
    %s185 = sor.u32 %s183, %s184
    %p186 = scmp.eq.s32.totalorder %s185, 0
    %s188 = sadd.s32 %s187, 1
    %s189 = scalar_select %p186, %s187, %s188
    %p192 = pneg %p186
    %p193 = scmp.eq.s32.totalorder %s13, 1
    %p194 = por %p192, %p193
    %p195 = scmp.ne.s32.totalorder %s187, %s190
    %p196 = scmp.eq.s32.totalorder %s13, 0
    %p197 = por %p195, %p196
    %p198 = scmp.ne.s32.totalorder %s187, %s190
    %p199 = scmp.eq.s32.totalorder %s18, 1
    %p200 = por %p198, %p199
    %p201 = scmp.ne.s32.totalorder %s190, %s191
    %p202 = scmp.eq.s32.totalorder %s18, 0
    %p203 = por %p201, %p202
    %p204 = scmp.ne.s32.totalorder %s190, %s191
    %p205 = scmp.eq.s32.totalorder %s19, 1
    %p206 = por %p204, %p205
    %p208 = scmp.ne.s32.totalorder %s191, %s207
    %p209 = scmp.eq.s32.totalorder %s19, 0
    %p210 = por %p208, %p209
    %s211 = ssub.s32 %s20, %s32
    %s212 = ssub.s32 %s21, %s28
    %s213 = sor.u32 %s211, %s212
    %p214 = scmp.eq.s32.totalorder %s213, 0
    %s216 = sadd.s32 %s215, 1
    %s217 = scalar_select %p214, %s215, %s216
    %p220 = pneg %p214
    %p221 = scmp.eq.s32.totalorder %s13, 1
    %p222 = por %p220, %p221
    %p223 = scmp.ne.s32.totalorder %s215, %s218
    %p224 = scmp.eq.s32.totalorder %s13, 0
    %p225 = por %p223, %p224
    %p226 = scmp.ne.s32.totalorder %s215, %s218
    %p227 = scmp.eq.s32.totalorder %s18, 1
    %p228 = por %p226, %p227
    %p229 = scmp.ne.s32.totalorder %s218, %s219
    %p230 = scmp.eq.s32.totalorder %s18, 0
    %p231 = por %p229, %p230
    %p232 = scmp.ne.s32.totalorder %s218, %s219
    %p233 = scmp.eq.s32.totalorder %s19, 1
    %p234 = por %p232, %p233
    %p236 = scmp.ne.s32.totalorder %s219, %s235
    %p237 = scmp.eq.s32.totalorder %s19, 0
    %p238 = por %p236, %p237
    %p239 = scmp.le.s32.totalorder 1, %s13
    %p240 = scmp.lt.s32.totalorder %s13, 3
    %p241 = pnand %p239, %p240
    %p242 = pneg %p241
    // Predicated region
    $region9: #{transformer_encoder.7} parent=5 // pred_check
      _
    $region10: #{transformer_encoder.7} parent=5 // pred_check_branch
      %244 = sbr.rel (%p241) target = $region12
    $region11: #{transformer_encoder.7} parent=5 // pred_region
      %s245 = ssub.s32 %s13, 1
      // Predicated region
      $region13: #{transformer_encoder.7} parent=11 // pred_check
        %p246 = pneg %p154
      $region14: #{transformer_encoder.7} parent=11 // pred_check_branch
        %248 = sbr.rel (%p246) target = $region16
      $region15: #{transformer_encoder.7} parent=11 // pred_region
        _
      $region16: #{transformer_encoder.7} parent=11 // pred_fallthru
        _
      // Predicated region
      $region17: #{transformer_encoder.7} parent=11 // pred_check
        %p249 = pneg %p175
      $region18: #{transformer_encoder.7} parent=11 // pred_check_branch
        %251 = sbr.rel (%p249) target = $region20
      $region19: #{transformer_encoder.7} parent=11 // pred_region
        _
      $region20: #{transformer_encoder.7} parent=11 // pred_fallthru
        _
    $region12: #{transformer_encoder.7} parent=5 // pred_fallthru
      _
    %p252 = scmp.lt.s32.totalorder %s13, 2
    // Predicated region
    $region21: #{transformer_encoder.7} parent=5 // pred_check
      %p253 = pneg %p252
    $region22: #{transformer_encoder.7} parent=5 // pred_check_branch
      %255 = sbr.rel (%p253) target = $region24
    $region23: #{transformer_encoder.7} parent=5 // pred_region
      // Predicated region
      $region25: #{transformer_encoder.7} parent=23 // pred_check
        %p256 = pneg %p47
      $region26: #{transformer_encoder.7} parent=23 // pred_check_branch
        %258 = sbr.rel (%p256) target = $region28
      $region27: #{transformer_encoder.7} parent=23 // pred_region
        %p259 = scmp.lt.s32.totalorder %s20, 1
        %s260 = scalar_select %p259, %s20, 1
        %p261 = scmp.lt.s32.totalorder %s21, 0
        %s262 = scalar_select %p261, %s21, 0
        %s263 = sadd.s32 %s262, %s260
        %s264 = smul.addr %s263, 8
        %s265 = scalar_lea.vmem %s0, %s264
      $region28: #{transformer_encoder.7} parent=23 // pred_fallthru
        _
      // Predicated region
      $region29: #{transformer_encoder.7} parent=23 // pred_check
        %p266 = pneg %p73
      $region30: #{transformer_encoder.7} parent=23 // pred_check_branch
        %268 = sbr.rel (%p266) target = $region32
      $region31: #{transformer_encoder.7} parent=23 // pred_region
        %p269 = scmp.lt.s32.totalorder %s20, 1
        %s270 = scalar_select %p269, %s20, 1
        %s271 = smul.addr %s270, 8
        %s272 = scalar_lea.vmem %s1, %s271
      $region32: #{transformer_encoder.7} parent=23 // pred_fallthru
        _
      // Predicated region
      $region33: #{transformer_encoder.7} parent=23 // pred_check
        %p273 = pneg %p99
      $region34: #{transformer_encoder.7} parent=23 // pred_check_branch
        %275 = sbr.rel (%p273) target = $region36
      $region35: #{transformer_encoder.7} parent=23 // pred_region
        %p276 = scmp.lt.s32.totalorder %s20, 1
        %s277 = scalar_select %p276, %s20, 1
        %s278 = smul.addr %s277, 8
        %s279 = scalar_lea.vmem %s2, %s278
      $region36: #{transformer_encoder.7} parent=23 // pred_fallthru
        _
      // Predicated region
      $region37: #{transformer_encoder.7} parent=23 // pred_check
        %p280 = pneg %p127
      $region38: #{transformer_encoder.7} parent=23 // pred_check_branch
        %282 = sbr.rel (%p280) target = $region40
      $region39: #{transformer_encoder.7} parent=23 // pred_region
        %p283 = scmp.lt.s32.totalorder %s20, 1
        %s284 = scalar_select %p283, %s20, 1
        %p285 = scmp.lt.s32.totalorder %s21, 0
        %s286 = scalar_select %p285, %s21, 0
        %s287 = sadd.s32 %s286, %s284
        %s288 = smul.addr %s287, 2
        %s289 = scalar_lea.vmem %s3, %s288
      $region40: #{transformer_encoder.7} parent=23 // pred_fallthru
        _
      // Predicated region
      $region41: #{transformer_encoder.7} parent=23 // pred_check
        %p290 = pneg %p197
      $region42: #{transformer_encoder.7} parent=23 // pred_check_branch
        %292 = sbr.rel (%p290) target = $region44
      $region43: #{transformer_encoder.7} parent=23 // pred_region
        %p293 = scmp.lt.s32.totalorder %s20, 1
        %s294 = scalar_select %p293, %s20, 1
        %p295 = scmp.lt.s32.totalorder %s21, 0
        %s296 = scalar_select %p295, %s21, 0
        %s297 = sadd.s32 %s296, %s294
        %s298 = smul.addr %s297, 2
        %s299 = scalar_lea.vmem %s6, %s298
      $region44: #{transformer_encoder.7} parent=23 // pred_fallthru
        _
    $region24: #{transformer_encoder.7} parent=5 // pred_fallthru
      _
    %p300 = scmp.le.s32.totalorder 1, %s13
    %p301 = scmp.lt.s32.totalorder %s13, 3
    %p302 = pnand %p300, %p301
    %p303 = pneg %p302
    // Predicated region
    $region45: #{transformer_encoder.7} parent=5 // pred_check
      _
    $region46: #{transformer_encoder.7} parent=5 // pred_check_branch
      %305 = sbr.rel (%p302) target = $region48
    $region47: #{transformer_encoder.7} parent=5 // pred_region
      %s306 = ssub.s32 %s13, 1
      %p307 = scmp.lt.s32.totalorder %s22, 1
      %s308 = scalar_select %p307, %s22, 1
      %p309 = scmp.lt.s32.totalorder %s23, 0
      %s310 = scalar_select %p309, %s23, 0
      %s311 = sadd.s32 %s310, %s308
      %s312 = smul.addr %s311, 8
      %s313 = scalar_lea.vmem %s0, %s312
      %p314 = pneg %p53
      %p315 = pneg %p50
      %p316 = scmp.lt.s32.totalorder %s22, 1
      %s317 = scalar_select %p316, %s22, 1
      %s318 = smul.addr %s317, 8
      %s319 = scalar_lea.vmem %s1, %s318
      %p320 = pneg %p79
      %p321 = pneg %p76
      %p322 = scmp.lt.s32.totalorder %s22, 1
      %s323 = scalar_select %p322, %s22, 1
      %s324 = smul.addr %s323, 8
      %s325 = scalar_lea.vmem %s2, %s324
      %p326 = pneg %p105
      %p327 = pneg %p102
      %p328 = scmp.lt.s32.totalorder %s22, 1
      %s329 = scalar_select %p328, %s22, 1
      %p330 = scmp.lt.s32.totalorder %s23, 0
      %s331 = scalar_select %p330, %s23, 0
      %s332 = sadd.s32 %s331, %s329
      %s333 = smul.addr %s332, 2
      %s334 = scalar_lea.vmem %s3, %s333
      %p335 = pneg %p133
      %p336 = pneg %p130
      %p337 = pneg %p154
      %p338 = pneg %p151
      %p339 = pneg %p175
      %p340 = pneg %p172
      %p341 = scmp.lt.s32.totalorder %s22, 1
      %s342 = scalar_select %p341, %s22, 1
      %p343 = scmp.lt.s32.totalorder %s23, 0
      %s344 = scalar_select %p343, %s23, 0
      %s345 = sadd.s32 %s344, %s342
      %s346 = smul.addr %s345, 2
      %s347 = scalar_lea.vmem %s6, %s346
      %p348 = pneg %p203
      %p349 = pneg %p200
      %p350 = pneg %p231
      %p351 = pneg %p228
      %p352 = scmp.lt.s32.totalorder %s22, 1
      %s353 = scalar_select %p352, %s22, 1
      %p354 = scmp.lt.s32.totalorder %s23, 0
      %s355 = scalar_select %p354, %s23, 0
      %s356 = sadd.s32 %s355, %s353
      %s357 = smul.addr %s356, 8
      %s358 = scalar_lea.vmem %s7, %s357
      %p359 = scmp.lt.s32.totalorder %s22, 1
      %s360 = scalar_select %p359, %s22, 1
      %p361 = scmp.lt.s32.totalorder %s23, 0
      %s362 = scalar_select %p361, %s23, 0
      %s363 = sadd.s32 %s362, %s360
      %s364 = smul.addr %s363, 8
      %s365 = scalar_lea.vmem %s0, %s364
      %p366 = scmp.lt.s32.totalorder %s22, 1
      %s367 = scalar_select %p366, %s22, 1
      %s368 = smul.addr %s367, 8
      %s369 = scalar_lea.vmem %s1, %s368
      %p370 = scmp.lt.s32.totalorder %s22, 1
      %s371 = scalar_select %p370, %s22, 1
      %s372 = smul.addr %s371, 8
      %s373 = scalar_lea.vmem %s2, %s372
      %p374 = scmp.lt.s32.totalorder %s22, 1
      %s375 = scalar_select %p374, %s22, 1
      %p376 = scmp.lt.s32.totalorder %s23, 0
      %s377 = scalar_select %p376, %s23, 0
      %s378 = sadd.s32 %s377, %s375
      %s379 = smul.addr %s378, 2
      %s380 = scalar_lea.vmem %s3, %s379
      %p381 = scmp.lt.s32.totalorder %s22, 1
      %s382 = scalar_select %p381, %s22, 1
      %p383 = scmp.lt.s32.totalorder %s23, 0
      %s384 = scalar_select %p383, %s23, 0
      %s385 = sadd.s32 %s384, %s382
      %s386 = smul.addr %s385, 2
      %s387 = scalar_lea.vmem %s6, %s386
      %p388 = scmp.lt.s32.totalorder %s22, 1
      %s389 = scalar_select %p388, %s22, 1
      %p390 = scmp.lt.s32.totalorder %s23, 0
      %s391 = scalar_select %p390, %s23, 0
      %s392 = sadd.s32 %s391, %s389
      %s393 = smul.addr %s392, 8
      %s394 = scalar_lea.vmem %s7, %s393
      %v396 = vld [vmem:[%s365] sm:$0xff]
      %v397 = vmul.f32 %v396, 0.35355338
      %v398 = vpack.c.bf16 %v397, %v397
      %v399 = vld [vmem:[%s369] sm:$0xff]
      %v400 = vpack.c.bf16 %v399, %v399
      %v401 = vld [vmem:[%s373] sm:$0xff]
      %v402 = vpack.c.bf16 %v401, %v401
      %v403 = vld [vmem:[%s4] sm:$0x7]
      %v404 = vpack.c.bf16 %v403, %v403
      %v405 = vld [vmem:[%s5] sm:$0x7]
      %v406 = vpack.c.bf16 %v405, %v405
      %v407 = vld [vmem:[%s380] sm:$0x3]
      %v408 = vunpack.c.0.s8 %v407
      %vm409 = vcmp.eq.s32.totalorder %v408, 0
      %v410 = vsel %vm409, 1, 0
      %v411 = vcvt.s32.f32 %v410
      %vm412 = vcmp.eq.s32.totalorder %v408, 1
      %v413 = vsel %vm412, 1, 0
      %v414 = vcvt.s32.f32 %v413
      %vm415 = vcmp.eq.s32.totalorder %v408, 2
      %v416 = vsel %vm415, 1, 0
      %v417 = vcvt.s32.f32 %v416
      %v418 = vld [vmem:[%s387] sm:$0x3]
      %v419 = vunpack.c.0.s8 %v418
      %vm420 = vcmp.ne.s32.totalorder %v419, 0
      %v421 = vsel %vm420, 0.0, -1e+09
      %vm422 = vcmask 64512
      %v424 = vsel %vm422, %v398, 0
      %v427 = vsel %vm422, %v404, 0
      %429 = vmatprep.subr.bf16.mxu0 0
      %430 = vmatpush1.bf16.xpose.msra.mxu0 %v427
      %431 = vmatprep.subr.bf16.mxu0 0
      %432 = vmatpush1.bf16.xpose.msra.mxu0 0
      %433 = vmatprep.subr.bf16.mxu0 0
      %434 = vmatpush1.bf16.xpose.msra.mxu0 0
      %435 = vmatprep.subr.bf16.mxu0 0
      %436 = vmatpush1.bf16.xpose.msra.mxu0 0
      %437 = vmatprep.subr.bf16.mxu0 0
      %438 = vmatpush1.bf16.xpose.msra.mxu0 0
      %439 = vmatprep.subr.bf16.mxu0 0
      %440 = vmatpush1.bf16.xpose.msra.mxu0 0
      %441 = vmatprep.subr.bf16.mxu0 0
      %442 = vmatpush1.bf16.xpose.msra.mxu0 0
      %443 = vmatprep.subr.bf16.mxu0 0
      %444 = vmatpush1.bf16.xpose.msra.mxu0 0
      %445 = vmatprep.subr.bf16.mxu0 0
      %446 = vmatpush1.bf16.xpose.msra.mxu0 0
      %447 = vmatprep.subr.bf16.mxu0 0
      %448 = vmatpush1.bf16.xpose.msra.mxu0 0
      %449 = vmatprep.subr.bf16.mxu0 0
      %450 = vmatpush1.bf16.xpose.msra.mxu0 0
      %451 = vmatprep.subr.bf16.mxu0 0
      %452 = vmatpush1.bf16.xpose.msra.mxu0 0
      %453 = vmatprep.subr.bf16.mxu0 0
      %454 = vmatpush1.bf16.xpose.msra.mxu0 0
      %455 = vmatprep.subr.bf16.mxu0 0
      %456 = vmatpush1.bf16.xpose.msra.mxu0 0
      %457 = vmatprep.subr.bf16.mxu0 0
      %458 = vmatpush1.bf16.xpose.msra.mxu0 0
      %459 = vmatprep.subr.bf16.mxu0 0
      %460 = vmatpush1.bf16.xpose.msra.mxu0 0
      %461 = vmatprep.mubr.bf16.mxu0 0
      %462 = vmatmul.mubr.bf16.gmra.mrb[0].mxu0 %v424
      %v463 = vpop.f32.mrb[0].mxu0
      %v464 = vadd.f32 0.0, %v463
      %v465 = vpop.f32.mrb[0].mxu0
      %v466 = vpop.f32.mrb[0].mxu0
      %v467 = vpop.f32.mrb[0].mxu0
      %468 = vdwg.mxu0
      %470 = vset.pattern.permute.xlu0 0
      %471 = vperm.xlu0 %470, %v464
      %v472 = vpop.permute.xlu0 %471
      %v474 = vmul.f32 %v411, %v472
      %v476 = vsel %vm422, %v400, 0
      %478 = vmatprep.subr.bf16.mxu0 0
      %479 = vmatpush1.bf16.xpose.msra.mxu0 %v476
      %480 = vmatprep.subr.bf16.mxu0 0
      %481 = vmatpush1.bf16.xpose.msra.mxu0 0
      %482 = vmatprep.subr.bf16.mxu0 0
      %483 = vmatpush1.bf16.xpose.msra.mxu0 0
      %484 = vmatprep.subr.bf16.mxu0 0
      %485 = vmatpush1.bf16.xpose.msra.mxu0 0
      %486 = vmatprep.subr.bf16.mxu0 0
      %487 = vmatpush1.bf16.xpose.msra.mxu0 0
      %488 = vmatprep.subr.bf16.mxu0 0
      %489 = vmatpush1.bf16.xpose.msra.mxu0 0
      %490 = vmatprep.subr.bf16.mxu0 0
      %491 = vmatpush1.bf16.xpose.msra.mxu0 0
      %492 = vmatprep.subr.bf16.mxu0 0
      %493 = vmatpush1.bf16.xpose.msra.mxu0 0
      %494 = vmatprep.subr.bf16.mxu0 0
      %495 = vmatpush1.bf16.xpose.msra.mxu0 0
      %496 = vmatprep.subr.bf16.mxu0 0
      %497 = vmatpush1.bf16.xpose.msra.mxu0 0
      %498 = vmatprep.subr.bf16.mxu0 0
      %499 = vmatpush1.bf16.xpose.msra.mxu0 0
      %500 = vmatprep.subr.bf16.mxu0 0
      %501 = vmatpush1.bf16.xpose.msra.mxu0 0
      %502 = vmatprep.subr.bf16.mxu0 0
      %503 = vmatpush1.bf16.xpose.msra.mxu0 0
      %504 = vmatprep.subr.bf16.mxu0 0
      %505 = vmatpush1.bf16.xpose.msra.mxu0 0
      %506 = vmatprep.subr.bf16.mxu0 0
      %507 = vmatpush1.bf16.xpose.msra.mxu0 0
      %508 = vmatprep.subr.bf16.mxu0 0
      %509 = vmatpush1.bf16.xpose.msra.mxu0 0
      %510 = vmatprep.mubr.bf16.mxu0 0
      %511 = vmatmul.mubr.bf16.gmra.mrb[0].mxu0 %v424
      %v512 = vpop.f32.mrb[0].mxu0
      %v513 = vadd.f32 %v474, %v512
      %v514 = vpop.f32.mrb[0].mxu0
      %v515 = vpop.f32.mrb[0].mxu0
      %v516 = vpop.f32.mrb[0].mxu0
      %517 = vdwg.mxu0
      %518 = vset.pattern.permute.xlu0 1
      %519 = vperm.xlu0 %518, %v464
      %v520 = vpop.permute.xlu0 %519
      %v522 = vmul.f32 %v414, %v520
      %v523 = vadd.f32 %v513, %v522
      %524 = vset.pattern.permute.xlu0 2
      %525 = vperm.xlu0 %524, %v464
      %v526 = vpop.permute.xlu0 %525
      %v528 = vmul.f32 %v417, %v526
      %v529 = vadd.f32 %v523, %v528
      %v530 = vadd.f32 %v529, %v421
      %v531 = vsel %vm422, %v530, -inf
      %532 = vmax.xlane.f32.xlu0 %v531
      %v533 = vpop.xlane.xlu0 %532
      %v534 = vsub.f32 %v530, %v533
      %v535 = vmul.f32 %v534, 1.442695
      %v536 = vpow.pop %v535
      %v537 = vsel %vm422, %v536, 0.0
      %538 = vadd.xlane.f32.xlu0 %v537
      %v539 = vpop.xlane.xlu0 %538
      %v540 = vrcp.pop %v539
      %v541 = vmul.f32 %v536, %v540
      %v542 = vpack.c.bf16 %v541, %v541
      %v543 = vmul.f32 %v541, %v411
      %v544 = vsel %vm422, %v543, 0.0
      %545 = vadd.xlane.f32.xlu0 %v544
      %v546 = vpop.xlane.xlu0 %545
      %v547 = vmul.f32 %v541, %v414
      %v548 = vsel %vm422, %v547, 0.0
      %549 = vadd.xlane.f32.xlu0 %v548
      %v550 = vpop.xlane.xlu0 %549
      %v551 = vmul.f32 %v541, %v417
      %v552 = vsel %vm422, %v551, 0.0
      %553 = vadd.xlane.f32.xlu0 %v552
      %v554 = vpop.xlane.xlu0 %553
      %vm555 = vcmask 7168
      %v556 = vsel %vm555, %v546, %v550
      %vm557 = vcmask 15360
      %v558 = vsel %vm557, %v556, %v554
      %v559 = vpack.c.bf16 %v558, %v558
      %vm560 = vcmask 23552
      %v562 = vsel %vm560, %v559, 0
      %vm564 = vcmask 1040384
      %vm565 = vcmask 1041408
      %v566 = vsel %vm564, 4294967295, 65535
      %v567 = vsel %vm565, %v566, 0
      %v569 = vand.u32 %v406, %v567
      %571 = vmatprep.subr.bf16.mxu0 0
      %572 = vmatpush1.bf16.msra.mxu0 %v569
      %573 = vmatprep.subr.bf16.mxu0 0
      %574 = vmatpush1.bf16.msra.mxu0 0
      %575 = vmatprep.subr.bf16.mxu0 0
      %576 = vmatpush1.bf16.msra.mxu0 0
      %577 = vmatprep.subr.bf16.mxu0 0
      %578 = vmatpush1.bf16.msra.mxu0 0
      %579 = vmatprep.subr.bf16.mxu0 0
      %580 = vmatpush1.bf16.msra.mxu0 0
      %581 = vmatprep.subr.bf16.mxu0 0
      %582 = vmatpush1.bf16.msra.mxu0 0
      %583 = vmatprep.subr.bf16.mxu0 0
      %584 = vmatpush1.bf16.msra.mxu0 0
      %585 = vmatprep.subr.bf16.mxu0 0
      %586 = vmatpush1.bf16.msra.mxu0 0
      %587 = vmatprep.subr.bf16.mxu0 0
      %588 = vmatpush1.bf16.msra.mxu0 0
      %589 = vmatprep.subr.bf16.mxu0 0
      %590 = vmatpush1.bf16.msra.mxu0 0
      %591 = vmatprep.subr.bf16.mxu0 0
      %592 = vmatpush1.bf16.msra.mxu0 0
      %593 = vmatprep.subr.bf16.mxu0 0
      %594 = vmatpush1.bf16.msra.mxu0 0
      %595 = vmatprep.subr.bf16.mxu0 0
      %596 = vmatpush1.bf16.msra.mxu0 0
      %597 = vmatprep.subr.bf16.mxu0 0
      %598 = vmatpush1.bf16.msra.mxu0 0
      %599 = vmatprep.subr.bf16.mxu0 0
      %600 = vmatpush1.bf16.msra.mxu0 0
      %601 = vmatprep.subr.bf16.mxu0 0
      %602 = vmatpush1.bf16.msra.mxu0 0
      %603 = vmatprep.mubr.bf16.mxu0 0
      %604 = vmatmul.mubr.bf16.gmra.mrb[0].mxu0 %v562
      %v605 = vpop.f32.mrb[0].mxu0
      %v606 = vadd.f32 0.0, %v605
      %v607 = vpop.f32.mrb[0].mxu0
      %v608 = vpop.f32.mrb[0].mxu0
      %v609 = vpop.f32.mrb[0].mxu0
      %610 = vdwg.mxu0
      %v612 = vsel %vm422, %v542, 0
      %vm614 = vcmask 1043456
      %v616 = vsel %vm614, %v402, 0
      %618 = vmatprep.subr.bf16.mxu0 0
      %619 = vmatpush1.bf16.msra.mxu0 %v616
      %620 = vmatprep.subr.bf16.mxu0 0
      %621 = vmatpush1.bf16.msra.mxu0 0
      %622 = vmatprep.subr.bf16.mxu0 0
      %623 = vmatpush1.bf16.msra.mxu0 0
      %624 = vmatprep.subr.bf16.mxu0 0
      %625 = vmatpush1.bf16.msra.mxu0 0
      %626 = vmatprep.subr.bf16.mxu0 0
      %627 = vmatpush1.bf16.msra.mxu0 0
      %628 = vmatprep.subr.bf16.mxu0 0
      %629 = vmatpush1.bf16.msra.mxu0 0
      %630 = vmatprep.subr.bf16.mxu0 0
      %631 = vmatpush1.bf16.msra.mxu0 0
      %632 = vmatprep.subr.bf16.mxu0 0
      %633 = vmatpush1.bf16.msra.mxu0 0
      %634 = vmatprep.subr.bf16.mxu0 0
      %635 = vmatpush1.bf16.msra.mxu0 0
      %636 = vmatprep.subr.bf16.mxu0 0
      %637 = vmatpush1.bf16.msra.mxu0 0
      %638 = vmatprep.subr.bf16.mxu0 0
      %639 = vmatpush1.bf16.msra.mxu0 0
      %640 = vmatprep.subr.bf16.mxu0 0
      %641 = vmatpush1.bf16.msra.mxu0 0
      %642 = vmatprep.subr.bf16.mxu0 0
      %643 = vmatpush1.bf16.msra.mxu0 0
      %644 = vmatprep.subr.bf16.mxu0 0
      %645 = vmatpush1.bf16.msra.mxu0 0
      %646 = vmatprep.subr.bf16.mxu0 0
      %647 = vmatpush1.bf16.msra.mxu0 0
      %648 = vmatprep.subr.bf16.mxu0 0
      %649 = vmatpush1.bf16.msra.mxu0 0
      %650 = vmatprep.mubr.bf16.mxu0 0
      %651 = vmatmul.mubr.bf16.gmra.mrb[0].mxu0 %v612
      %v652 = vpop.f32.mrb[0].mxu0
      %v653 = vadd.f32 %v606, %v652
      %v654 = vpop.f32.mrb[0].mxu0
      %v655 = vpop.f32.mrb[0].mxu0
      %v656 = vpop.f32.mrb[0].mxu0
      %657 = vdwg.mxu0
      %658 = vst.msk [vmem:[%s394] sm:$0xff] %vm422, %v653
      %660 = vrot.lane.b32.xlu0 %v398, 120
      %v661 = vpop.permute.xlu0 %660
      %v663 = vsel %vm422, %v661, 0
      %665 = vmatprep.subr.bf16.mxu0 0
      %666 = vmatpush1.bf16.xpose.msra.mxu0 %v427
      %667 = vmatprep.subr.bf16.mxu0 0
      %668 = vmatpush1.bf16.xpose.msra.mxu0 0
      %669 = vmatprep.subr.bf16.mxu0 0
      %670 = vmatpush1.bf16.xpose.msra.mxu0 0
      %671 = vmatprep.subr.bf16.mxu0 0
      %672 = vmatpush1.bf16.xpose.msra.mxu0 0
      %673 = vmatprep.subr.bf16.mxu0 0
      %674 = vmatpush1.bf16.xpose.msra.mxu0 0
      %675 = vmatprep.subr.bf16.mxu0 0
      %676 = vmatpush1.bf16.xpose.msra.mxu0 0
      %677 = vmatprep.subr.bf16.mxu0 0
      %678 = vmatpush1.bf16.xpose.msra.mxu0 0
      %679 = vmatprep.subr.bf16.mxu0 0
      %680 = vmatpush1.bf16.xpose.msra.mxu0 0
      %681 = vmatprep.subr.bf16.mxu0 0
      %682 = vmatpush1.bf16.xpose.msra.mxu0 0
      %683 = vmatprep.subr.bf16.mxu0 0
      %684 = vmatpush1.bf16.xpose.msra.mxu0 0
      %685 = vmatprep.subr.bf16.mxu0 0
      %686 = vmatpush1.bf16.xpose.msra.mxu0 0
      %687 = vmatprep.subr.bf16.mxu0 0
      %688 = vmatpush1.bf16.xpose.msra.mxu0 0
      %689 = vmatprep.subr.bf16.mxu0 0
      %690 = vmatpush1.bf16.xpose.msra.mxu0 0
      %691 = vmatprep.subr.bf16.mxu0 0
      %692 = vmatpush1.bf16.xpose.msra.mxu0 0
      %693 = vmatprep.subr.bf16.mxu0 0
      %694 = vmatpush1.bf16.xpose.msra.mxu0 0
      %695 = vmatprep.subr.bf16.mxu0 0
      %696 = vmatpush1.bf16.xpose.msra.mxu0 0
      %697 = vmatprep.mubr.bf16.mxu0 0
      %698 = vmatmul.mubr.bf16.gmra.mrb[0].mxu0 %v663
      %v699 = vpop.f32.mrb[0].mxu0
      %v700 = vadd.f32 0.0, %v699
      %v701 = vpop.f32.mrb[0].mxu0
      %v702 = vpop.f32.mrb[0].mxu0
      %v703 = vpop.f32.mrb[0].mxu0
      %704 = vdwg.mxu0
      %706 = vset.pattern.permute.xlu0 0
      %707 = vperm.xlu0 %706, %v700
      %v708 = vpop.permute.xlu0 %707
      %v710 = vmul.f32 %v411, %v708
      %712 = vrot.lane.b32.xlu0 %v400, 120
      %v713 = vpop.permute.xlu0 %712
      %v715 = vsel %vm422, %v713, 0
      %717 = vmatprep.subr.bf16.mxu0 0
      %718 = vmatpush1.bf16.xpose.msra.mxu0 %v715
      %719 = vmatprep.subr.bf16.mxu0 0
      %720 = vmatpush1.bf16.xpose.msra.mxu0 0
      %721 = vmatprep.subr.bf16.mxu0 0
      %722 = vmatpush1.bf16.xpose.msra.mxu0 0
      %723 = vmatprep.subr.bf16.mxu0 0
      %724 = vmatpush1.bf16.xpose.msra.mxu0 0
      %725 = vmatprep.subr.bf16.mxu0 0
      %726 = vmatpush1.bf16.xpose.msra.mxu0 0
      %727 = vmatprep.subr.bf16.mxu0 0
      %728 = vmatpush1.bf16.xpose.msra.mxu0 0
      %729 = vmatprep.subr.bf16.mxu0 0
      %730 = vmatpush1.bf16.xpose.msra.mxu0 0
      %731 = vmatprep.subr.bf16.mxu0 0
      %732 = vmatpush1.bf16.xpose.msra.mxu0 0
      %733 = vmatprep.subr.bf16.mxu0 0
      %734 = vmatpush1.bf16.xpose.msra.mxu0 0
      %735 = vmatprep.subr.bf16.mxu0 0
      %736 = vmatpush1.bf16.xpose.msra.mxu0 0
      %737 = vmatprep.subr.bf16.mxu0 0
      %738 = vmatpush1.bf16.xpose.msra.mxu0 0
      %739 = vmatprep.subr.bf16.mxu0 0
      %740 = vmatpush1.bf16.xpose.msra.mxu0 0
      %741 = vmatprep.subr.bf16.mxu0 0
      %742 = vmatpush1.bf16.xpose.msra.mxu0 0
      %743 = vmatprep.subr.bf16.mxu0 0
      %744 = vmatpush1.bf16.xpose.msra.mxu0 0
      %745 = vmatprep.subr.bf16.mxu0 0
      %746 = vmatpush1.bf16.xpose.msra.mxu0 0
      %747 = vmatprep.subr.bf16.mxu0 0
      %748 = vmatpush1.bf16.xpose.msra.mxu0 0
      %749 = vmatprep.mubr.bf16.mxu0 0
      %750 = vmatmul.mubr.bf16.gmra.mrb[0].mxu0 %v663
      %v751 = vpop.f32.mrb[0].mxu0
      %v752 = vadd.f32 %v710, %v751
      %v753 = vpop.f32.mrb[0].mxu0
      %v754 = vpop.f32.mrb[0].mxu0
      %v755 = vpop.f32.mrb[0].mxu0
      %756 = vdwg.mxu0
      %757 = vset.pattern.permute.xlu0 1
      %758 = vperm.xlu0 %757, %v700
      %v759 = vpop.permute.xlu0 %758
      %v761 = vmul.f32 %v414, %v759
      %v762 = vadd.f32 %v752, %v761
      %763 = vset.pattern.permute.xlu0 2
      %764 = vperm.xlu0 %763, %v700
      %v765 = vpop.permute.xlu0 %764
      %v767 = vmul.f32 %v417, %v765
      %v768 = vadd.f32 %v762, %v767
      %v769 = vadd.f32 %v768, %v421
      %v770 = vsel %vm422, %v769, -inf
      %771 = vmax.xlane.f32.xlu0 %v770
      %v772 = vpop.xlane.xlu0 %771
      %v773 = vsub.f32 %v769, %v772
      %v774 = vmul.f32 %v773, 1.442695
      %v775 = vpow.pop %v774
      %v776 = vsel %vm422, %v775, 0.0
      %777 = vadd.xlane.f32.xlu0 %v776
      %v778 = vpop.xlane.xlu0 %777
      %v779 = vrcp.pop %v778
      %v780 = vmul.f32 %v775, %v779
      %v781 = vpack.c.bf16 %v780, %v780
      %v782 = vmul.f32 %v780, %v411
      %v783 = vsel %vm422, %v782, 0.0
      %784 = vadd.xlane.f32.xlu0 %v783
      %v785 = vpop.xlane.xlu0 %784
      %v786 = vmul.f32 %v780, %v414
      %v787 = vsel %vm422, %v786, 0.0
      %788 = vadd.xlane.f32.xlu0 %v787
      %v789 = vpop.xlane.xlu0 %788
      %v790 = vmul.f32 %v780, %v417
      %v791 = vsel %vm422, %v790, 0.0
      %792 = vadd.xlane.f32.xlu0 %v791
      %v793 = vpop.xlane.xlu0 %792
      %v794 = vsel %vm555, %v785, %v789
      %v795 = vsel %vm557, %v794, %v793
      %v796 = vpack.c.bf16 %v795, %v795
      %v798 = vsel %vm560, %v796, 0
      %800 = vmatprep.subr.bf16.mxu0 0
      %801 = vmatpush1.bf16.msra.mxu0 %v569
      %802 = vmatprep.subr.bf16.mxu0 0
      %803 = vmatpush1.bf16.msra.mxu0 0
      %804 = vmatprep.subr.bf16.mxu0 0
      %805 = vmatpush1.bf16.msra.mxu0 0
      %806 = vmatprep.subr.bf16.mxu0 0
      %807 = vmatpush1.bf16.msra.mxu0 0
      %808 = vmatprep.subr.bf16.mxu0 0
      %809 = vmatpush1.bf16.msra.mxu0 0
      %810 = vmatprep.subr.bf16.mxu0 0
      %811 = vmatpush1.bf16.msra.mxu0 0
      %812 = vmatprep.subr.bf16.mxu0 0
      %813 = vmatpush1.bf16.msra.mxu0 0
      %814 = vmatprep.subr.bf16.mxu0 0
      %815 = vmatpush1.bf16.msra.mxu0 0
      %816 = vmatprep.subr.bf16.mxu0 0
      %817 = vmatpush1.bf16.msra.mxu0 0
      %818 = vmatprep.subr.bf16.mxu0 0
      %819 = vmatpush1.bf16.msra.mxu0 0
      %820 = vmatprep.subr.bf16.mxu0 0
      %821 = vmatpush1.bf16.msra.mxu0 0
      %822 = vmatprep.subr.bf16.mxu0 0
      %823 = vmatpush1.bf16.msra.mxu0 0
      %824 = vmatprep.subr.bf16.mxu0 0
      %825 = vmatpush1.bf16.msra.mxu0 0
      %826 = vmatprep.subr.bf16.mxu0 0
      %827 = vmatpush1.bf16.msra.mxu0 0
      %828 = vmatprep.subr.bf16.mxu0 0
      %829 = vmatpush1.bf16.msra.mxu0 0
      %830 = vmatprep.subr.bf16.mxu0 0
      %831 = vmatpush1.bf16.msra.mxu0 0
      %832 = vmatprep.mubr.bf16.mxu0 0
      %833 = vmatmul.mubr.bf16.gmra.mrb[0].mxu0 %v798
      %v834 = vpop.f32.mrb[0].mxu0
      %v835 = vadd.f32 0.0, %v834
      %v836 = vpop.f32.mrb[0].mxu0
      %v837 = vpop.f32.mrb[0].mxu0
      %v838 = vpop.f32.mrb[0].mxu0
      %839 = vdwg.mxu0
      %841 = vrot.lane.b32.xlu0 %v402, 120
      %v842 = vpop.permute.xlu0 %841
      %v844 = vsel %vm422, %v781, 0
      %v847 = vsel %vm614, %v842, 0
      %849 = vmatprep.subr.bf16.mxu0 0
      %850 = vmatpush1.bf16.msra.mxu0 %v847
      %851 = vmatprep.subr.bf16.mxu0 0
      %852 = vmatpush1.bf16.msra.mxu0 0
      %853 = vmatprep.subr.bf16.mxu0 0
      %854 = vmatpush1.bf16.msra.mxu0 0
      %855 = vmatprep.subr.bf16.mxu0 0
      %856 = vmatpush1.bf16.msra.mxu0 0
      %857 = vmatprep.subr.bf16.mxu0 0
      %858 = vmatpush1.bf16.msra.mxu0 0
      %859 = vmatprep.subr.bf16.mxu0 0
      %860 = vmatpush1.bf16.msra.mxu0 0
      %861 = vmatprep.subr.bf16.mxu0 0
      %862 = vmatpush1.bf16.msra.mxu0 0
      %863 = vmatprep.subr.bf16.mxu0 0
      %864 = vmatpush1.bf16.msra.mxu0 0
      %865 = vmatprep.subr.bf16.mxu0 0
      %866 = vmatpush1.bf16.msra.mxu0 0
      %867 = vmatprep.subr.bf16.mxu0 0
      %868 = vmatpush1.bf16.msra.mxu0 0
      %869 = vmatprep.subr.bf16.mxu0 0
      %870 = vmatpush1.bf16.msra.mxu0 0
      %871 = vmatprep.subr.bf16.mxu0 0
      %872 = vmatpush1.bf16.msra.mxu0 0
      %873 = vmatprep.subr.bf16.mxu0 0
      %874 = vmatpush1.bf16.msra.mxu0 0
      %875 = vmatprep.subr.bf16.mxu0 0
      %876 = vmatpush1.bf16.msra.mxu0 0
      %877 = vmatprep.subr.bf16.mxu0 0
      %878 = vmatpush1.bf16.msra.mxu0 0
      %879 = vmatprep.subr.bf16.mxu0 0
      %880 = vmatpush1.bf16.msra.mxu0 0
      %881 = vmatprep.mubr.bf16.mxu0 0
      %882 = vmatmul.mubr.bf16.gmra.mrb[0].mxu0 %v844
      %v883 = vpop.f32.mrb[0].mxu0
      %v884 = vadd.f32 %v835, %v883
      %v885 = vpop.f32.mrb[0].mxu0
      %v886 = vpop.f32.mrb[0].mxu0
      %v887 = vpop.f32.mrb[0].mxu0
      %888 = vdwg.mxu0
      %890 = vrot.lane.b32.xlu0 %v884, 8
      %v891 = vpop.permute.xlu0 %890
      %vm893 = vcmask 130112
      %894 = vst.msk [vmem:[%s394] sm:$0xff] %vm893, %v891
      %895 = vrot.lane.b32.xlu0 %v398, 112
      %v896 = vpop.permute.xlu0 %895
      %v898 = vsel %vm422, %v896, 0
      %900 = vmatprep.subr.bf16.mxu0 0
      %901 = vmatpush1.bf16.xpose.msra.mxu0 %v427
      %902 = vmatprep.subr.bf16.mxu0 0
      %903 = vmatpush1.bf16.xpose.msra.mxu0 0
      %904 = vmatprep.subr.bf16.mxu0 0
      %905 = vmatpush1.bf16.xpose.msra.mxu0 0
      %906 = vmatprep.subr.bf16.mxu0 0
      %907 = vmatpush1.bf16.xpose.msra.mxu0 0
      %908 = vmatprep.subr.bf16.mxu0 0
      %909 = vmatpush1.bf16.xpose.msra.mxu0 0
      %910 = vmatprep.subr.bf16.mxu0 0
      %911 = vmatpush1.bf16.xpose.msra.mxu0 0
      %912 = vmatprep.subr.bf16.mxu0 0
      %913 = vmatpush1.bf16.xpose.msra.mxu0 0
      %914 = vmatprep.subr.bf16.mxu0 0
      %915 = vmatpush1.bf16.xpose.msra.mxu0 0
      %916 = vmatprep.subr.bf16.mxu0 0
      %917 = vmatpush1.bf16.xpose.msra.mxu0 0
      %918 = vmatprep.subr.bf16.mxu0 0
      %919 = vmatpush1.bf16.xpose.msra.mxu0 0
      %920 = vmatprep.subr.bf16.mxu0 0
      %921 = vmatpush1.bf16.xpose.msra.mxu0 0
      %922 = vmatprep.subr.bf16.mxu0 0
      %923 = vmatpush1.bf16.xpose.msra.mxu0 0
      %924 = vmatprep.subr.bf16.mxu0 0
      %925 = vmatpush1.bf16.xpose.msra.mxu0 0
      %926 = vmatprep.subr.bf16.mxu0 0
      %927 = vmatpush1.bf16.xpose.msra.mxu0 0
      %928 = vmatprep.subr.bf16.mxu0 0
      %929 = vmatpush1.bf16.xpose.msra.mxu0 0
      %930 = vmatprep.subr.bf16.mxu0 0
      %931 = vmatpush1.bf16.xpose.msra.mxu0 0
      %932 = vmatprep.mubr.bf16.mxu0 0
      %933 = vmatmul.mubr.bf16.gmra.mrb[0].mxu0 %v898
      %v934 = vpop.f32.mrb[0].mxu0
      %v935 = vadd.f32 0.0, %v934
      %v936 = vpop.f32.mrb[0].mxu0
      %v937 = vpop.f32.mrb[0].mxu0
      %v938 = vpop.f32.mrb[0].mxu0
      %939 = vdwg.mxu0
      %941 = vset.pattern.permute.xlu0 0
      %942 = vperm.xlu0 %941, %v935
      %v943 = vpop.permute.xlu0 %942
      %v945 = vmul.f32 %v411, %v943
      %946 = vrot.lane.b32.xlu0 %v400, 112
      %v947 = vpop.permute.xlu0 %946
      %v949 = vsel %vm422, %v947, 0
      %951 = vmatprep.subr.bf16.mxu0 0
      %952 = vmatpush1.bf16.xpose.msra.mxu0 %v949
      %953 = vmatprep.subr.bf16.mxu0 0
      %954 = vmatpush1.bf16.xpose.msra.mxu0 0
      %955 = vmatprep.subr.bf16.mxu0 0
      %956 = vmatpush1.bf16.xpose.msra.mxu0 0
      %957 = vmatprep.subr.bf16.mxu0 0
      %958 = vmatpush1.bf16.xpose.msra.mxu0 0
      %959 = vmatprep.subr.bf16.mxu0 0
      %960 = vmatpush1.bf16.xpose.msra.mxu0 0
      %961 = vmatprep.subr.bf16.mxu0 0
      %962 = vmatpush1.bf16.xpose.msra.mxu0 0
      %963 = vmatprep.subr.bf16.mxu0 0
      %964 = vmatpush1.bf16.xpose.msra.mxu0 0
      %965 = vmatprep.subr.bf16.mxu0 0
      %966 = vmatpush1.bf16.xpose.msra.mxu0 0
      %967 = vmatprep.subr.bf16.mxu0 0
      %968 = vmatpush1.bf16.xpose.msra.mxu0 0
      %969 = vmatprep.subr.bf16.mxu0 0
      %970 = vmatpush1.bf16.xpose.msra.mxu0 0
      %971 = vmatprep.subr.bf16.mxu0 0
      %972 = vmatpush1.bf16.xpose.msra.mxu0 0
      %973 = vmatprep.subr.bf16.mxu0 0
      %974 = vmatpush1.bf16.xpose.msra.mxu0 0
      %975 = vmatprep.subr.bf16.mxu0 0
      %976 = vmatpush1.bf16.xpose.msra.mxu0 0
      %977 = vmatprep.subr.bf16.mxu0 0
      %978 = vmatpush1.bf16.xpose.msra.mxu0 0
      %979 = vmatprep.subr.bf16.mxu0 0
      %980 = vmatpush1.bf16.xpose.msra.mxu0 0
      %981 = vmatprep.subr.bf16.mxu0 0
      %982 = vmatpush1.bf16.xpose.msra.mxu0 0
      %983 = vmatprep.mubr.bf16.mxu0 0
      %984 = vmatmul.mubr.bf16.gmra.mrb[0].mxu0 %v898
      %v985 = vpop.f32.mrb[0].mxu0
      %v986 = vadd.f32 %v945, %v985
      %v987 = vpop.f32.mrb[0].mxu0
      %v988 = vpop.f32.mrb[0].mxu0
      %v989 = vpop.f32.mrb[0].mxu0
      %990 = vdwg.mxu0
      %991 = vset.pattern.permute.xlu0 1
      %992 = vperm.xlu0 %991, %v935
      %v993 = vpop.permute.xlu0 %992
      %v995 = vmul.f32 %v414, %v993
      %v996 = vadd.f32 %v986, %v995
      %997 = vset.pattern.permute.xlu0 2
      %998 = vperm.xlu0 %997, %v935
      %v999 = vpop.permute.xlu0 %998
      %v1001 = vmul.f32 %v417, %v999
      %v1002 = vadd.f32 %v996, %v1001
      %v1003 = vadd.f32 %v1002, %v421
      %v1004 = vsel %vm422, %v1003, -inf
      %1005 = vmax.xlane.f32.xlu0 %v1004
      %v1006 = vpop.xlane.xlu0 %1005
      %v1007 = vsub.f32 %v1003, %v1006
      %v1008 = vmul.f32 %v1007, 1.442695
      %v1009 = vpow.pop %v1008
      %v1010 = vsel %vm422, %v1009, 0.0
      %1011 = vadd.xlane.f32.xlu0 %v1010
      %v1012 = vpop.xlane.xlu0 %1011
      %v1013 = vrcp.pop %v1012
      %v1014 = vmul.f32 %v1009, %v1013
      %v1015 = vpack.c.bf16 %v1014, %v1014
      %v1016 = vmul.f32 %v1014, %v411
      %v1017 = vsel %vm422, %v1016, 0.0
      %1018 = vadd.xlane.f32.xlu0 %v1017
      %v1019 = vpop.xlane.xlu0 %1018
      %v1020 = vmul.f32 %v1014, %v414
      %v1021 = vsel %vm422, %v1020, 0.0
      %1022 = vadd.xlane.f32.xlu0 %v1021
      %v1023 = vpop.xlane.xlu0 %1022
      %v1024 = vmul.f32 %v1014, %v417
      %v1025 = vsel %vm422, %v1024, 0.0
      %1026 = vadd.xlane.f32.xlu0 %v1025
      %v1027 = vpop.xlane.xlu0 %1026
      %v1028 = vsel %vm555, %v1019, %v1023
      %v1029 = vsel %vm557, %v1028, %v1027
      %v1030 = vpack.c.bf16 %v1029, %v1029
      %v1032 = vsel %vm560, %v1030, 0
      %1034 = vmatprep.subr.bf16.mxu0 0
      %1035 = vmatpush1.bf16.msra.mxu0 %v569
      %1036 = vmatprep.subr.bf16.mxu0 0
      %1037 = vmatpush1.bf16.msra.mxu0 0
      %1038 = vmatprep.subr.bf16.mxu0 0
      %1039 = vmatpush1.bf16.msra.mxu0 0
      %1040 = vmatprep.subr.bf16.mxu0 0
      %1041 = vmatpush1.bf16.msra.mxu0 0
      %1042 = vmatprep.subr.bf16.mxu0 0
      %1043 = vmatpush1.bf16.msra.mxu0 0
      %1044 = vmatprep.subr.bf16.mxu0 0
      %1045 = vmatpush1.bf16.msra.mxu0 0
      %1046 = vmatprep.subr.bf16.mxu0 0
      %1047 = vmatpush1.bf16.msra.mxu0 0
      %1048 = vmatprep.subr.bf16.mxu0 0
      %1049 = vmatpush1.bf16.msra.mxu0 0
      %1050 = vmatprep.subr.bf16.mxu0 0
      %1051 = vmatpush1.bf16.msra.mxu0 0
      %1052 = vmatprep.subr.bf16.mxu0 0
      %1053 = vmatpush1.bf16.msra.mxu0 0
      %1054 = vmatprep.subr.bf16.mxu0 0
      %1055 = vmatpush1.bf16.msra.mxu0 0
      %1056 = vmatprep.subr.bf16.mxu0 0
      %1057 = vmatpush1.bf16.msra.mxu0 0
      %1058 = vmatprep.subr.bf16.mxu0 0
      %1059 = vmatpush1.bf16.msra.mxu0 0
      %1060 = vmatprep.subr.bf16.mxu0 0
      %1061 = vmatpush1.bf16.msra.mxu0 0
      %1062 = vmatprep.subr.bf16.mxu0 0
      %1063 = vmatpush1.bf16.msra.mxu0 0
      %1064 = vmatprep.subr.bf16.mxu0 0
      %1065 = vmatpush1.bf16.msra.mxu0 0
      %1066 = vmatprep.mubr.bf16.mxu0 0
      %1067 = vmatmul.mubr.bf16.gmra.mrb[0].mxu0 %v1032
      %v1068 = vpop.f32.mrb[0].mxu0
      %v1069 = vadd.f32 0.0, %v1068
      %v1070 = vpop.f32.mrb[0].mxu0
      %v1071 = vpop.f32.mrb[0].mxu0
      %v1072 = vpop.f32.mrb[0].mxu0
      %1073 = vdwg.mxu0
      %1074 = vrot.lane.b32.xlu0 %v402, 112
      %v1075 = vpop.permute.xlu0 %1074
      %v1077 = vsel %vm422, %v1015, 0
      %v1080 = vsel %vm614, %v1075, 0
      %1082 = vmatprep.subr.bf16.mxu0 0
      %1083 = vmatpush1.bf16.msra.mxu0 %v1080
      %1084 = vmatprep.subr.bf16.mxu0 0
      %1085 = vmatpush1.bf16.msra.mxu0 0
      %1086 = vmatprep.subr.bf16.mxu0 0
      %1087 = vmatpush1.bf16.msra.mxu0 0
      %1088 = vmatprep.subr.bf16.mxu0 0
      %1089 = vmatpush1.bf16.msra.mxu0 0
      %1090 = vmatprep.subr.bf16.mxu0 0
      %1091 = vmatpush1.bf16.msra.mxu0 0
      %1092 = vmatprep.subr.bf16.mxu0 0
      %1093 = vmatpush1.bf16.msra.mxu0 0
      %1094 = vmatprep.subr.bf16.mxu0 0
      %1095 = vmatpush1.bf16.msra.mxu0 0
      %1096 = vmatprep.subr.bf16.mxu0 0
      %1097 = vmatpush1.bf16.msra.mxu0 0
      %1098 = vmatprep.subr.bf16.mxu0 0
      %1099 = vmatpush1.bf16.msra.mxu0 0
      %1100 = vmatprep.subr.bf16.mxu0 0
      %1101 = vmatpush1.bf16.msra.mxu0 0
      %1102 = vmatprep.subr.bf16.mxu0 0
      %1103 = vmatpush1.bf16.msra.mxu0 0
      %1104 = vmatprep.subr.bf16.mxu0 0
      %1105 = vmatpush1.bf16.msra.mxu0 0
      %1106 = vmatprep.subr.bf16.mxu0 0
      %1107 = vmatpush1.bf16.msra.mxu0 0
      %1108 = vmatprep.subr.bf16.mxu0 0
      %1109 = vmatpush1.bf16.msra.mxu0 0
      %1110 = vmatprep.subr.bf16.mxu0 0
      %1111 = vmatpush1.bf16.msra.mxu0 0
      %1112 = vmatprep.subr.bf16.mxu0 0
      %1113 = vmatpush1.bf16.msra.mxu0 0
      %1114 = vmatprep.mubr.bf16.mxu0 0
      %1115 = vmatmul.mubr.bf16.gmra.mrb[0].mxu0 %v1077
      %v1116 = vpop.f32.mrb[0].mxu0
      %v1117 = vadd.f32 %v1069, %v1116
      %v1118 = vpop.f32.mrb[0].mxu0
      %v1119 = vpop.f32.mrb[0].mxu0
      %v1120 = vpop.f32.mrb[0].mxu0
      %1121 = vdwg.mxu0
      %1123 = vrot.lane.b32.xlu0 %v1117, 16
      %v1124 = vpop.permute.xlu0 %1123
      %vm1126 = vcmask 195712
      %1127 = vst.msk [vmem:[%s394] sm:$0xff] %vm1126, %v1124
      %1128 = vrot.lane.b32.xlu0 %v398, 104
      %v1129 = vpop.permute.xlu0 %1128
      %v1131 = vsel %vm422, %v1129, 0
      %1133 = vmatprep.subr.bf16.mxu0 0
      %1134 = vmatpush1.bf16.xpose.msra.mxu0 %v427
      %1135 = vmatprep.subr.bf16.mxu0 0
      %1136 = vmatpush1.bf16.xpose.msra.mxu0 0
      %1137 = vmatprep.subr.bf16.mxu0 0
      %1138 = vmatpush1.bf16.xpose.msra.mxu0 0
      %1139 = vmatprep.subr.bf16.mxu0 0
      %1140 = vmatpush1.bf16.xpose.msra.mxu0 0
      %1141 = vmatprep.subr.bf16.mxu0 0
      %1142 = vmatpush1.bf16.xpose.msra.mxu0 0
      %1143 = vmatprep.subr.bf16.mxu0 0
      %1144 = vmatpush1.bf16.xpose.msra.mxu0 0
      %1145 = vmatprep.subr.bf16.mxu0 0
      %1146 = vmatpush1.bf16.xpose.msra.mxu0 0
      %1147 = vmatprep.subr.bf16.mxu0 0
      %1148 = vmatpush1.bf16.xpose.msra.mxu0 0
      %1149 = vmatprep.subr.bf16.mxu0 0
      %1150 = vmatpush1.bf16.xpose.msra.mxu0 0
      %1151 = vmatprep.subr.bf16.mxu0 0
      %1152 = vmatpush1.bf16.xpose.msra.mxu0 0
      %1153 = vmatprep.subr.bf16.mxu0 0
      %1154 = vmatpush1.bf16.xpose.msra.mxu0 0
      %1155 = vmatprep.subr.bf16.mxu0 0
      %1156 = vmatpush1.bf16.xpose.msra.mxu0 0
      %1157 = vmatprep.subr.bf16.mxu0 0
      %1158 = vmatpush1.bf16.xpose.msra.mxu0 0
      %1159 = vmatprep.subr.bf16.mxu0 0
      %1160 = vmatpush1.bf16.xpose.msra.mxu0 0
      %1161 = vmatprep.subr.bf16.mxu0 0
      %1162 = vmatpush1.bf16.xpose.msra.mxu0 0
      %1163 = vmatprep.subr.bf16.mxu0 0
      %1164 = vmatpush1.bf16.xpose.msra.mxu0 0
      %1165 = vmatprep.mubr.bf16.mxu0 0
      %1166 = vmatmul.mubr.bf16.gmra.mrb[0].mxu0 %v1131
      %v1167 = vpop.f32.mrb[0].mxu0
      %v1168 = vadd.f32 0.0, %v1167
      %v1169 = vpop.f32.mrb[0].mxu0
      %v1170 = vpop.f32.mrb[0].mxu0
      %v1171 = vpop.f32.mrb[0].mxu0
      %1172 = vdwg.mxu0
      %1174 = vset.pattern.permute.xlu0 0
      %1175 = vperm.xlu0 %1174, %v1168
      %v1176 = vpop.permute.xlu0 %1175
      %v1178 = vmul.f32 %v411, %v1176
      %1179 = vrot.lane.b32.xlu0 %v400, 104
      %v1180 = vpop.permute.xlu0 %1179
      %v1182 = vsel %vm422, %v1180, 0
      %1184 = vmatprep.subr.bf16.mxu0 0
      %1185 = vmatpush1.bf16.xpose.msra.mxu0 %v1182
      %1186 = vmatprep.subr.bf16.mxu0 0
      %1187 = vmatpush1.bf16.xpose.msra.mxu0 0
      %1188 = vmatprep.subr.bf16.mxu0 0
      %1189 = vmatpush1.bf16.xpose.msra.mxu0 0
      %1190 = vmatprep.subr.bf16.mxu0 0
      %1191 = vmatpush1.bf16.xpose.msra.mxu0 0
      %1192 = vmatprep.subr.bf16.mxu0 0
      %1193 = vmatpush1.bf16.xpose.msra.mxu0 0
      %1194 = vmatprep.subr.bf16.mxu0 0
      %1195 = vmatpush1.bf16.xpose.msra.mxu0 0
      %1196 = vmatprep.subr.bf16.mxu0 0
      %1197 = vmatpush1.bf16.xpose.msra.mxu0 0
      %1198 = vmatprep.subr.bf16.mxu0 0
      %1199 = vmatpush1.bf16.xpose.msra.mxu0 0
      %1200 = vmatprep.subr.bf16.mxu0 0
      %1201 = vmatpush1.bf16.xpose.msra.mxu0 0
      %1202 = vmatprep.subr.bf16.mxu0 0
      %1203 = vmatpush1.bf16.xpose.msra.mxu0 0
      %1204 = vmatprep.subr.bf16.mxu0 0
      %1205 = vmatpush1.bf16.xpose.msra.mxu0 0
      %1206 = vmatprep.subr.bf16.mxu0 0
      %1207 = vmatpush1.bf16.xpose.msra.mxu0 0
      %1208 = vmatprep.subr.bf16.mxu0 0
      %1209 = vmatpush1.bf16.xpose.msra.mxu0 0
      %1210 = vmatprep.subr.bf16.mxu0 0
      %1211 = vmatpush1.bf16.xpose.msra.mxu0 0
      %1212 = vmatprep.subr.bf16.mxu0 0
      %1213 = vmatpush1.bf16.xpose.msra.mxu0 0
      %1214 = vmatprep.subr.bf16.mxu0 0
      %1215 = vmatpush1.bf16.xpose.msra.mxu0 0
      %1216 = vmatprep.mubr.bf16.mxu0 0
      %1217 = vmatmul.mubr.bf16.gmra.mrb[0].mxu0 %v1131
      %v1218 = vpop.f32.mrb[0].mxu0
      %v1219 = vadd.f32 %v1178, %v1218
      %v1220 = vpop.f32.mrb[0].mxu0
      %v1221 = vpop.f32.mrb[0].mxu0
      %v1222 = vpop.f32.mrb[0].mxu0
      %1223 = vdwg.mxu0
      %1224 = vset.pattern.permute.xlu0 1
      %1225 = vperm.xlu0 %1224, %v1168
      %v1226 = vpop.permute.xlu0 %1225
      %v1228 = vmul.f32 %v414, %v1226
      %v1229 = vadd.f32 %v1219, %v1228
      %1230 = vset.pattern.permute.xlu0 2
      %1231 = vperm.xlu0 %1230, %v1168
      %v1232 = vpop.permute.xlu0 %1231
      %v1234 = vmul.f32 %v417, %v1232
      %v1235 = vadd.f32 %v1229, %v1234
      %v1236 = vadd.f32 %v1235, %v421
      %v1237 = vsel %vm422, %v1236, -inf
      %1238 = vmax.xlane.f32.xlu0 %v1237
      %v1239 = vpop.xlane.xlu0 %1238
      %v1240 = vsub.f32 %v1236, %v1239
      %v1241 = vmul.f32 %v1240, 1.442695
      %v1242 = vpow.pop %v1241
      %v1243 = vsel %vm422, %v1242, 0.0
      %1244 = vadd.xlane.f32.xlu0 %v1243
      %v1245 = vpop.xlane.xlu0 %1244
      %v1246 = vrcp.pop %v1245
      %v1247 = vmul.f32 %v1242, %v1246
      %v1248 = vpack.c.bf16 %v1247, %v1247
      %v1249 = vmul.f32 %v1247, %v411
      %v1250 = vsel %vm422, %v1249, 0.0
      %1251 = vadd.xlane.f32.xlu0 %v1250
      %v1252 = vpop.xlane.xlu0 %1251
      %v1253 = vmul.f32 %v1247, %v414
      %v1254 = vsel %vm422, %v1253, 0.0
      %1255 = vadd.xlane.f32.xlu0 %v1254
      %v1256 = vpop.xlane.xlu0 %1255
      %v1257 = vmul.f32 %v1247, %v417
      %v1258 = vsel %vm422, %v1257, 0.0
      %1259 = vadd.xlane.f32.xlu0 %v1258
      %v1260 = vpop.xlane.xlu0 %1259
      %v1261 = vsel %vm555, %v1252, %v1256
      %v1262 = vsel %vm557, %v1261, %v1260
      %v1263 = vpack.c.bf16 %v1262, %v1262
      %v1265 = vsel %vm560, %v1263, 0
      %1267 = vmatprep.subr.bf16.mxu0 0
      %1268 = vmatpush1.bf16.msra.mxu0 %v569
      %1269 = vmatprep.subr.bf16.mxu0 0
      %1270 = vmatpush1.bf16.msra.mxu0 0
      %1271 = vmatprep.subr.bf16.mxu0 0
      %1272 = vmatpush1.bf16.msra.mxu0 0
      %1273 = vmatprep.subr.bf16.mxu0 0
      %1274 = vmatpush1.bf16.msra.mxu0 0
      %1275 = vmatprep.subr.bf16.mxu0 0
      %1276 = vmatpush1.bf16.msra.mxu0 0
      %1277 = vmatprep.subr.bf16.mxu0 0
      %1278 = vmatpush1.bf16.msra.mxu0 0
      %1279 = vmatprep.subr.bf16.mxu0 0
      %1280 = vmatpush1.bf16.msra.mxu0 0
      %1281 = vmatprep.subr.bf16.mxu0 0
      %1282 = vmatpush1.bf16.msra.mxu0 0
      %1283 = vmatprep.subr.bf16.mxu0 0
      %1284 = vmatpush1.bf16.msra.mxu0 0
      %1285 = vmatprep.subr.bf16.mxu0 0
      %1286 = vmatpush1.bf16.msra.mxu0 0
      %1287 = vmatprep.subr.bf16.mxu0 0
      %1288 = vmatpush1.bf16.msra.mxu0 0
      %1289 = vmatprep.subr.bf16.mxu0 0
      %1290 = vmatpush1.bf16.msra.mxu0 0
      %1291 = vmatprep.subr.bf16.mxu0 0
      %1292 = vmatpush1.bf16.msra.mxu0 0
      %1293 = vmatprep.subr.bf16.mxu0 0
      %1294 = vmatpush1.bf16.msra.mxu0 0
      %1295 = vmatprep.subr.bf16.mxu0 0
      %1296 = vmatpush1.bf16.msra.mxu0 0
      %1297 = vmatprep.subr.bf16.mxu0 0
      %1298 = vmatpush1.bf16.msra.mxu0 0
      %1299 = vmatprep.mubr.bf16.mxu0 0
      %1300 = vmatmul.mubr.bf16.gmra.mrb[0].mxu0 %v1265
      %v1301 = vpop.f32.mrb[0].mxu0
      %v1302 = vadd.f32 0.0, %v1301
      %v1303 = vpop.f32.mrb[0].mxu0
      %v1304 = vpop.f32.mrb[0].mxu0
      %v1305 = vpop.f32.mrb[0].mxu0
      %1306 = vdwg.mxu0
      %1307 = vrot.lane.b32.xlu0 %v402, 104
      %v1308 = vpop.permute.xlu0 %1307
      %v1310 = vsel %vm422, %v1248, 0
      %v1313 = vsel %vm614, %v1308, 0
      %1315 = vmatprep.subr.bf16.mxu0 0
      %1316 = vmatpush1.bf16.msra.mxu0 %v1313
      %1317 = vmatprep.subr.bf16.mxu0 0
      %1318 = vmatpush1.bf16.msra.mxu0 0
      %1319 = vmatprep.subr.bf16.mxu0 0
      %1320 = vmatpush1.bf16.msra.mxu0 0
      %1321 = vmatprep.subr.bf16.mxu0 0
      %1322 = vmatpush1.bf16.msra.mxu0 0
      %1323 = vmatprep.subr.bf16.mxu0 0
      %1324 = vmatpush1.bf16.msra.mxu0 0
      %1325 = vmatprep.subr.bf16.mxu0 0
      %1326 = vmatpush1.bf16.msra.mxu0 0
      %1327 = vmatprep.subr.bf16.mxu0 0
      %1328 = vmatpush1.bf16.msra.mxu0 0
      %1329 = vmatprep.subr.bf16.mxu0 0
      %1330 = vmatpush1.bf16.msra.mxu0 0
      %1331 = vmatprep.subr.bf16.mxu0 0
      %1332 = vmatpush1.bf16.msra.mxu0 0
      %1333 = vmatprep.subr.bf16.mxu0 0
      %1334 = vmatpush1.bf16.msra.mxu0 0
      %1335 = vmatprep.subr.bf16.mxu0 0
      %1336 = vmatpush1.bf16.msra.mxu0 0
      %1337 = vmatprep.subr.bf16.mxu0 0
      %1338 = vmatpush1.bf16.msra.mxu0 0
      %1339 = vmatprep.subr.bf16.mxu0 0
      %1340 = vmatpush1.bf16.msra.mxu0 0
      %1341 = vmatprep.subr.bf16.mxu0 0
      %1342 = vmatpush1.bf16.msra.mxu0 0
      %1343 = vmatprep.subr.bf16.mxu0 0
      %1344 = vmatpush1.bf16.msra.mxu0 0
      %1345 = vmatprep.subr.bf16.mxu0 0
      %1346 = vmatpush1.bf16.msra.mxu0 0
      %1347 = vmatprep.mubr.bf16.mxu0 0
      %1348 = vmatmul.mubr.bf16.gmra.mrb[0].mxu0 %v1310
      %v1349 = vpop.f32.mrb[0].mxu0
      %v1350 = vadd.f32 %v1302, %v1349
      %v1351 = vpop.f32.mrb[0].mxu0
      %v1352 = vpop.f32.mrb[0].mxu0
      %v1353 = vpop.f32.mrb[0].mxu0
      %1354 = vdwg.mxu0
      %1356 = vrot.lane.b32.xlu0 %v1350, 24
      %v1357 = vpop.permute.xlu0 %1356
      %vm1359 = vcmask 261312
      %1360 = vst.msk [vmem:[%s394] sm:$0xff] %vm1359, %v1357
      %p1361 = scmp.lt.s32.totalorder %s22, 1
      %s1362 = scalar_select %p1361, %s22, 1
      %p1363 = scmp.lt.s32.totalorder %s23, 0
      %s1364 = scalar_select %p1363, %s23, 0
      %s1365 = sadd.s32 %s1364, %s1362
      %s1366 = smul.addr %s1365, 8
      %s1367 = scalar_lea.vmem %s7, %s1366
      // Predicated region
      $region49: #{transformer_encoder.7} parent=47 // pred_check
        %p1368 = pneg %p228
      $region50: #{transformer_encoder.7} parent=47 // pred_check_branch
        %1370 = sbr.rel (%p1368) target = $region52
      $region51: #{transformer_encoder.7} parent=47 // pred_region
        _
      $region52: #{transformer_encoder.7} parent=47 // pred_fallthru
        _
    $region48: #{transformer_encoder.7} parent=5 // pred_fallthru
      _
    %p1371 = scmp.le.s32.totalorder 2, %s13
    // Predicated region
    $region53: #{transformer_encoder.7} parent=5 // pred_check
      %p1372 = pneg %p1371
    $region54: #{transformer_encoder.7} parent=5 // pred_check_branch
      %1374 = sbr.rel (%p1372) target = $region56
    $region55: #{transformer_encoder.7} parent=5 // pred_region
      %s1375 = ssub.s32 %s13, 2
      // Predicated region
      $region57: #{transformer_encoder.7} parent=55 // pred_check
        %p1376 = pneg %p234
      $region58: #{transformer_encoder.7} parent=55 // pred_check_branch
        %1378 = sbr.rel (%p1376) target = $region60
      $region59: #{transformer_encoder.7} parent=55 // pred_region
        %p1379 = scmp.lt.s32.totalorder %s24, 1
        %s1380 = scalar_select %p1379, %s24, 1
        %p1381 = scmp.lt.s32.totalorder %s25, 0
        %s1382 = scalar_select %p1381, %s25, 0
        %s1383 = sadd.s32 %s1382, %s1380
        %s1384 = smul.addr %s1383, 8
        %s1385 = scalar_lea.vmem %s7, %s1384
      $region60: #{transformer_encoder.7} parent=55 // pred_fallthru
        _
    $region56: #{transformer_encoder.7} parent=5 // pred_fallthru
      _
  $region6: #{transformer_encoder.7} parent=0 // loop_footer
    %s17 = sadd.s32 1, %s13
  $region7: #{transformer_encoder.7} parent=0 // loop_footer_branch
    %12 = sbr.rel target = $region3
  $region8: #{transformer_encoder.7} parent=0 // loop_exit
    _

</llo_original>
